<compile_context>
chip_gen: v6e
topology: v6e:2x2x1
jax: 0.10.0
libtpu: 0.0.40
codegen_flags: <defaults>
</compile_context>

<pallas_src>
import functools

import jax
import jax.numpy as jnp
from jax.experimental import pallas as pl
from jax.experimental.pallas import tpu as pltpu


def _triplane_kernel(loc_ref, tri_ref, out_ref, *, dim, R, half_size):
    tn = loc_ref.shape[1]

    # ---- per-axis coordinate math, (3, TN), hoisted across planes ------------
    norm = loc_ref[...].astype(jnp.float32) * (1.0 / half_size)
    # grid_sample unnormalization (align_corners=False) + border-padding clamp.
    idx = jnp.clip(((norm + 1.0) * R - 1.0) * 0.5, 0.0, R - 1.0)       # (3, TN)
    i0f = jnp.floor(idx)
    frac = idx - i0f                                                   # (3, TN)
    i0 = i0f.astype(jnp.int32)
    i1 = jnp.minimum(i0 + 1, R - 1)

    # Separable 1-D one-hot bilinear weights per axis; points live on lanes.
    k = jax.lax.broadcasted_iota(jnp.int32, (R, 1), 0)                 # (R, 1)

    def axis_weights(a):
        lo, hi, f = i0[a:a + 1, :], i1[a:a + 1, :], frac[a:a + 1, :]
        # (1-f)+f = 1 when i0 == i1 at the clamp boundary -> border padding exact.
        return (jnp.where(k == lo, 1.0 - f, 0.0)
                + jnp.where(k == hi, f, 0.0))                          # (R, TN) f32

    wx, wy, wz = axis_weights(0), axis_weights(1), axis_weights(2)

    # W-axis weights feed the MXU: cast ONCE to the triplane dtype (bf16 default,
    # full MXU rate + half the operand bytes).  H-axis weights stay f32 (VPU).
    mxu_dt = tri_ref.dtype
    wx_m = wx.astype(mxu_dt)
    wy_m = wy.astype(mxu_dt)

    # plane 0 samples (x->W, y->H); plane 1 (y->W, z->H); plane 2 (x->W, z->H).
    for p, (w_w, w_h) in enumerate(((wx_m, wy), (wy_m, wz), (wx_m, wz))):
        # Stage 1 (MXU): contract over W.  tri_ref[p] is (dim*R, R) with row
        # index d*R + h, so result row d*R + h = sum_w tri[p,d,h,w] * w_w[w,n].
        a = jnp.dot(tri_ref[p], w_w, preferred_element_type=jnp.float32)  # (dim*R, TN)
        # Stage 2 (VPU/XLU): per-lane weighted reduction over H with f32 weights.
        a3 = a.reshape(dim, R, tn)                                     # lane dim kept minor
        vals = jnp.sum(a3 * w_h[None, :, :], axis=1)                   # (dim, TN) f32
        out_ref[p * dim:(p + 1) * dim, :] = vals.astype(out_ref.dtype)


def _pick_tile_n(n, max_tile=1024, min_steps=4):
    """Largest multiple-of-128 tile <= max_tile that still yields >= min_steps
    grid steps (>= 2 per v7x TensorCore) when N allows it."""
    t = max(((n // min_steps) // 128) * 128, 128)
    return min(max_tile, t)


def triplane_forward(loc, triplane, half_size=2.0, *, tile_n=None,
                     mxu_dtype=jnp.bfloat16, transposed_out=False):
    """Pallas equivalent of Triplane.forward(loc).

    loc: (N, 3) float32; triplane: (3, dim, res, res).
    Returns (N, 3*dim) float32 (or (3*dim, N) if transposed_out=True, which
    avoids an extra HBM round-trip for consumers that accept that layout).
    """
    three, dim, H, W = triplane.shape
    assert three == 3 and H == W, "Triplane uses square res x res planes"
    R = H
    assert R % 8 == 0, "res must be a multiple of 8 for clean sublane tiling"
    N = loc.shape[0]

    if tile_n is None:
        tile_n = _pick_tile_n(N)
    n_pad = pl.cdiv(N, tile_n) * tile_n

    loc_t = loc.T                                          # (3, N) lane-dense coords
    if n_pad != N:
        loc_t = jnp.pad(loc_t, ((0, 0), (0, n_pad - N)))

    # (3, dim, H, W) -> (3, dim*H, W): row index d*H + h, ready for the per-plane
    # W-contraction matmul; cast to bf16 for full-rate MXU.
    tri2 = triplane.reshape(3, dim * R, R).astype(mxu_dtype)

    # TODO(synk): for large R/dim, cap the constant tri operand with
    # pipeline_mode=pl.Buffered(1) and raise vmem_limit_bytes; irrelevant at R<=64.
    kernel = functools.partial(_triplane_kernel, dim=dim, R=R,
                               half_size=float(half_size))
    out_t = pl.pallas_call(
        kernel,
        out_shape=jax.ShapeDtypeStruct((3 * dim, n_pad), jnp.float32),
        grid=(n_pad // tile_n,),
        in_specs=[
            pl.BlockSpec((3, tile_n), lambda i: (0, i)),            # per-tile coords
            pl.BlockSpec((3, dim * R, R), lambda i: (0, 0, 0)),     # resident planes
        ],
        out_specs=pl.BlockSpec((3 * dim, tile_n), lambda i: (0, i)),  # lane-dense store
        compiler_params=pltpu.CompilerParams(dimension_semantics=("parallel",)),
    )(loc_t, tri2)

    if transposed_out:
        return out_t[:, :N]                                # (3*dim, N)
    return out_t[:, :N].T                                  # (N, 3*dim) — module layout


def triplane_reference(loc, triplane, half_size=2.0):
    """Pure-JAX reference (gather path) mirroring torch.nn.functional.grid_sample."""
    three, dim, H, W = triplane.shape
    norm = loc / half_size
    outs = []
    for p, (cx, cy) in enumerate(((0, 1), (1, 2), (0, 2))):
        gx, gy = norm[:, cx], norm[:, cy]
        ix = jnp.clip(((gx + 1.0) * W - 1.0) * 0.5, 0.0, W - 1.0)
        iy = jnp.clip(((gy + 1.0) * H - 1.0) * 0.5, 0.0, H - 1.0)
        x0 = jnp.floor(ix).astype(jnp.int32)
        y0 = jnp.floor(iy).astype(jnp.int32)
        fx = ix - jnp.floor(ix)
        fy = iy - jnp.floor(iy)
        x1 = jnp.minimum(x0 + 1, W - 1)
        y1 = jnp.minimum(y0 + 1, H - 1)
        pln = triplane[p]                                   # (dim, H, W)
        v00 = pln[:, y0, x0]
        v01 = pln[:, y0, x1]
        v10 = pln[:, y1, x0]
        v11 = pln[:, y1, x1]
        val = (v00 * (1 - fy) * (1 - fx) + v01 * (1 - fy) * fx
               + v10 * fy * (1 - fx) + v11 * fy * fx)       # (dim, N)
        outs.append(val.T)
    return jnp.concatenate(outs, axis=-1)                   # (N, 3*dim)


if __name__ == "__main__":
    # Small shapes consistent with the module: res=16, feature_dim=24 -> dim=8.
    res, feature_dim, half_size = 16, 24, 2.0
    dim = max(feature_dim // 3, 1)                          # 8
    N = 4096                                                # 4 grid steps at tile_n=1024

    key = jax.random.PRNGKey(0)
    k_tri, k_loc = jax.random.split(key)
    # PyTorch __init__ uses torch.ones((3, dim, res, res)); random values make the
    # bilinear-sampling check non-trivial.
    triplane = jax.random.normal(k_tri, (3, dim, res, res), dtype=jnp.float32)
    # Points partially outside the [-half_size, half_size] cube exercise border padding.
    loc = jax.random.uniform(k_loc, (N, 3), dtype=jnp.float32, minval=-3.0, maxval=3.0)

    ref = triplane_reference(loc, triplane, half_size)

    # Default path: bf16 MXU operands (W-axis bilinear weights + features quantized
    # to bf16, ~2^-8 relative), f32 accumulation -> relaxed tolerance.
    out = jax.block_until_ready(triplane_forward(loc, triplane, half_size))
    assert out.shape == (N, 3 * dim)
    assert jnp.allclose(out, ref, atol=5e-2, rtol=5e-2), float(jnp.max(jnp.abs(out - ref)))

    # f32 path cross-check (one-hot W-contraction + f32 VPU H-reduction is exact).
    out_f32 = jax.block_until_ready(
        triplane_forward(loc, triplane, half_size, mxu_dtype=jnp.float32))
    assert jnp.allclose(out_f32, ref, atol=1e-5, rtol=1e-5), \
        float(jnp.max(jnp.abs(out_f32 - ref)))

    print("KERNEL_OK")
</pallas_src>

<mosaic_0001>
module attributes {stable_mosaic.version = 11 : i64} {
  func.func @_triplane_kernel(%arg0: i32, %arg1: memref<3x1024xf32, #tpu.memory_space<vmem>>, %arg2: memref<3x128x16xbf16, #tpu.memory_space<vmem>>, %arg3: memref<24x1024xf32, #tpu.memory_space<vmem>>) attributes {dimension_semantics = [#tpu.dimension_semantics<parallel>], iteration_bounds = array<i64: 4>, scalar_prefetch = 0 : i64, scratch_operands = 0 : i64, tpu.core_type = #tpu.core_type<tc>, window_params = [{transform_indices = @transform_0, window_bounds = array<i64: 3, 1024>}, {pipeline_mode = #tpu.pipeline_mode<synchronous>, transform_indices = @transform_1, window_bounds = array<i64: 3, 128, 16>}, {transform_indices = @transform_2, window_bounds = array<i64: 24, 1024>}]} {
    %c0 = arith.constant 0 : index
    %c0_0 = arith.constant 0 : index
    %0 = vector.load %arg1[%c0, %c0_0] : memref<3x1024xf32, #tpu.memory_space<vmem>>, vector<3x1024xf32>
    %cst = arith.constant 5.000000e-01 : f32
    %1 = vector.broadcast %cst : f32 to vector<3x1024xf32>
    %2 = arith.mulf %0, %1 : vector<3x1024xf32>
    %cst_1 = arith.constant 1.000000e+00 : f32
    %3 = vector.broadcast %cst_1 : f32 to vector<3x1024xf32>
    %4 = arith.addf %2, %3 : vector<3x1024xf32>
    %cst_2 = arith.constant 1.600000e+01 : f32
    %5 = vector.broadcast %cst_2 : f32 to vector<3x1024xf32>
    %6 = arith.mulf %4, %5 : vector<3x1024xf32>
    %cst_3 = arith.constant 1.000000e+00 : f32
    %7 = vector.broadcast %cst_3 : f32 to vector<3x1024xf32>
    %8 = arith.subf %6, %7 : vector<3x1024xf32>
    %cst_4 = arith.constant 5.000000e-01 : f32
    %9 = vector.broadcast %cst_4 : f32 to vector<3x1024xf32>
    %10 = arith.mulf %8, %9 : vector<3x1024xf32>
    %cst_5 = arith.constant 0.000000e+00 : f32
    %cst_6 = arith.constant 1.500000e+01 : f32
    %11 = vector.broadcast %cst_5 : f32 to vector<3x1024xf32>
    %12 = arith.maximumf %11, %10 : vector<3x1024xf32>
    %13 = vector.broadcast %cst_6 : f32 to vector<3x1024xf32>
    %14 = arith.minimumf %13, %12 : vector<3x1024xf32>
    %15 = math.floor %14 : vector<3x1024xf32>
    %16 = arith.subf %14, %15 : vector<3x1024xf32>
    %17 = arith.fptosi %15 : vector<3x1024xf32> to vector<3x1024xi32>
    %c1_i32 = arith.constant 1 : i32
    %18 = vector.broadcast %c1_i32 : i32 to vector<3x1024xi32>
    %19 = arith.addi %17, %18 : vector<3x1024xi32>
    %c15_i32 = arith.constant 15 : i32
    %20 = vector.broadcast %c15_i32 : i32 to vector<3x1024xi32>
    %21 = arith.minsi %19, %20 : vector<3x1024xi32>
    %22 = tpu.iota {dimensions = array<i32: 0>} : vector<16x1xi32>
    %23 = vector.extract_strided_slice %17 {offsets = [0, 0], sizes = [1, 1024], strides = [1, 1]} : vector<3x1024xi32> to vector<1x1024xi32>
    %24 = vector.extract_strided_slice %21 {offsets = [0, 0], sizes = [1, 1024], strides = [1, 1]} : vector<3x1024xi32> to vector<1x1024xi32>
    %25 = vector.extract_strided_slice %16 {offsets = [0, 0], sizes = [1, 1024], strides = [1, 1]} : vector<3x1024xf32> to vector<1x1024xf32>
    %26 = vector.broadcast %22 : vector<16x1xi32> to vector<16x1024xi32>
    %27 = vector.broadcast %23 : vector<1x1024xi32> to vector<16x1024xi32>
    %28 = arith.cmpi eq, %26, %27 : vector<16x1024xi32>
    %cst_7 = arith.constant 1.000000e+00 : f32
    %29 = vector.broadcast %cst_7 : f32 to vector<1x1024xf32>
    %30 = arith.subf %29, %25 : vector<1x1024xf32>
    %cst_8 = arith.constant 0.000000e+00 : f32
    %31 = vector.shape_cast %30 : vector<1x1024xf32> to vector<1x1024xf32>
    %32 = vector.broadcast %31 : vector<1x1024xf32> to vector<16x1024xf32>
    %33 = vector.broadcast %cst_8 : f32 to vector<16x1024xf32>
    %34 = arith.select %28, %32, %33 : vector<16x1024xi1>, vector<16x1024xf32>
    %35 = vector.broadcast %22 : vector<16x1xi32> to vector<16x1024xi32>
    %36 = vector.broadcast %24 : vector<1x1024xi32> to vector<16x1024xi32>
    %37 = arith.cmpi eq, %35, %36 : vector<16x1024xi32>
    %cst_9 = arith.constant 0.000000e+00 : f32
    %38 = vector.shape_cast %25 : vector<1x1024xf32> to vector<1x1024xf32>
    %39 = vector.broadcast %38 : vector<1x1024xf32> to vector<16x1024xf32>
    %40 = vector.broadcast %cst_9 : f32 to vector<16x1024xf32>
    %41 = arith.select %37, %39, %40 : vector<16x1024xi1>, vector<16x1024xf32>
    %42 = arith.addf %34, %41 : vector<16x1024xf32>
    %43 = vector.extract_strided_slice %17 {offsets = [1, 0], sizes = [1, 1024], strides = [1, 1]} : vector<3x1024xi32> to vector<1x1024xi32>
    %44 = vector.extract_strided_slice %21 {offsets = [1, 0], sizes = [1, 1024], strides = [1, 1]} : vector<3x1024xi32> to vector<1x1024xi32>
    %45 = vector.extract_strided_slice %16 {offsets = [1, 0], sizes = [1, 1024], strides = [1, 1]} : vector<3x1024xf32> to vector<1x1024xf32>
    %46 = vector.broadcast %22 : vector<16x1xi32> to vector<16x1024xi32>
    %47 = vector.broadcast %43 : vector<1x1024xi32> to vector<16x1024xi32>
    %48 = arith.cmpi eq, %46, %47 : vector<16x1024xi32>
    %cst_10 = arith.constant 1.000000e+00 : f32
    %49 = vector.broadcast %cst_10 : f32 to vector<1x1024xf32>
    %50 = arith.subf %49, %45 : vector<1x1024xf32>
    %cst_11 = arith.constant 0.000000e+00 : f32
    %51 = vector.shape_cast %50 : vector<1x1024xf32> to vector<1x1024xf32>
    %52 = vector.broadcast %51 : vector<1x1024xf32> to vector<16x1024xf32>
    %53 = vector.broadcast %cst_11 : f32 to vector<16x1024xf32>
    %54 = arith.select %48, %52, %53 : vector<16x1024xi1>, vector<16x1024xf32>
    %55 = vector.broadcast %22 : vector<16x1xi32> to vector<16x1024xi32>
    %56 = vector.broadcast %44 : vector<1x1024xi32> to vector<16x1024xi32>
    %57 = arith.cmpi eq, %55, %56 : vector<16x1024xi32>
    %cst_12 = arith.constant 0.000000e+00 : f32
    %58 = vector.shape_cast %45 : vector<1x1024xf32> to vector<1x1024xf32>
    %59 = vector.broadcast %58 : vector<1x1024xf32> to vector<16x1024xf32>
    %60 = vector.broadcast %cst_12 : f32 to vector<16x1024xf32>
    %61 = arith.select %57, %59, %60 : vector<16x1024xi1>, vector<16x1024xf32>
    %62 = arith.addf %54, %61 : vector<16x1024xf32>
    %63 = vector.extract_strided_slice %17 {offsets = [2, 0], sizes = [1, 1024], strides = [1, 1]} : vector<3x1024xi32> to vector<1x1024xi32>
    %64 = vector.extract_strided_slice %21 {offsets = [2, 0], sizes = [1, 1024], strides = [1, 1]} : vector<3x1024xi32> to vector<1x1024xi32>
    %65 = vector.extract_strided_slice %16 {offsets = [2, 0], sizes = [1, 1024], strides = [1, 1]} : vector<3x1024xf32> to vector<1x1024xf32>
    %66 = vector.broadcast %22 : vector<16x1xi32> to vector<16x1024xi32>
    %67 = vector.broadcast %63 : vector<1x1024xi32> to vector<16x1024xi32>
    %68 = arith.cmpi eq, %66, %67 : vector<16x1024xi32>
    %cst_13 = arith.constant 1.000000e+00 : f32
    %69 = vector.broadcast %cst_13 : f32 to vector<1x1024xf32>
    %70 = arith.subf %69, %65 : vector<1x1024xf32>
    %cst_14 = arith.constant 0.000000e+00 : f32
    %71 = vector.shape_cast %70 : vector<1x1024xf32> to vector<1x1024xf32>
    %72 = vector.broadcast %71 : vector<1x1024xf32> to vector<16x1024xf32>
    %73 = vector.broadcast %cst_14 : f32 to vector<16x1024xf32>
    %74 = arith.select %68, %72, %73 : vector<16x1024xi1>, vector<16x1024xf32>
    %75 = vector.broadcast %22 : vector<16x1xi32> to vector<16x1024xi32>
    %76 = vector.broadcast %64 : vector<1x1024xi32> to vector<16x1024xi32>
    %77 = arith.cmpi eq, %75, %76 : vector<16x1024xi32>
    %cst_15 = arith.constant 0.000000e+00 : f32
    %78 = vector.shape_cast %65 : vector<1x1024xf32> to vector<1x1024xf32>
    %79 = vector.broadcast %78 : vector<1x1024xf32> to vector<16x1024xf32>
    %80 = vector.broadcast %cst_15 : f32 to vector<16x1024xf32>
    %81 = arith.select %77, %79, %80 : vector<16x1024xi1>, vector<16x1024xf32>
    %82 = arith.addf %74, %81 : vector<16x1024xf32>
    %83 = arith.truncf %42 : vector<16x1024xf32> to vector<16x1024xbf16>
    %84 = arith.truncf %62 : vector<16x1024xf32> to vector<16x1024xbf16>
    %c0_16 = arith.constant 0 : index
    %c0_17 = arith.constant 0 : index
    %c0_18 = arith.constant 0 : index
    %85 = vector.load %arg2[%c0_16, %c0_17, %c0_18] : memref<3x128x16xbf16, #tpu.memory_space<vmem>>, vector<1x128x16xbf16>
    %86 = vector.shape_cast %85 : vector<1x128x16xbf16> to vector<128x16xbf16>
    %cst_19 = arith.constant dense<0.000000e+00> : vector<128x1024xf32>
    %87 = tpu.matmul %86, %83, %cst_19 {dimension_numbers = #tpu.dot_dimension_numbers<[1], [0], [0], [1], [0, 0, 1, 1], [], []>} : vector<128x16xbf16>, vector<16x1024xbf16>, vector<128x1024xf32> -> vector<128x1024xf32>
    %88 = vector.shape_cast %87 : vector<128x1024xf32> to vector<8x16x1024xf32>
    %89 = vector.shape_cast %62 : vector<16x1024xf32> to vector<1x16x1024xf32>
    %90 = vector.broadcast %89 : vector<1x16x1024xf32> to vector<8x16x1024xf32>
    %91 = arith.mulf %88, %90 : vector<8x16x1024xf32>
    %cst_20 = arith.constant dense<0.000000e+00> : vector<8x1024xf32>
    %92 = vector.multi_reduction <add>, %91, %cst_20 [1] : vector<8x16x1024xf32> to vector<8x1024xf32>
    %c0_21 = arith.constant 0 : index
    %c0_22 = arith.constant 0 : index
    %93 = vector.load %arg3[%c0_21, %c0_22] : memref<24x1024xf32, #tpu.memory_space<vmem>>, vector<8x1024xf32>
    tpu.vector_store %arg3[%c0_21, %c0_22], %92 {strides = array<i32>} : memref<24x1024xf32, #tpu.memory_space<vmem>>, vector<8x1024xf32>,
    %c1 = arith.constant 1 : index
    %c0_23 = arith.constant 0 : index
    %c0_24 = arith.constant 0 : index
    %94 = vector.load %arg2[%c1, %c0_23, %c0_24] : memref<3x128x16xbf16, #tpu.memory_space<vmem>>, vector<1x128x16xbf16>
    %95 = vector.shape_cast %94 : vector<1x128x16xbf16> to vector<128x16xbf16>
    %cst_25 = arith.constant dense<0.000000e+00> : vector<128x1024xf32>
    %96 = tpu.matmul %95, %84, %cst_25 {dimension_numbers = #tpu.dot_dimension_numbers<[1], [0], [0], [1], [0, 0, 1, 1], [], []>} : vector<128x16xbf16>, vector<16x1024xbf16>, vector<128x1024xf32> -> vector<128x1024xf32>
    %97 = vector.shape_cast %96 : vector<128x1024xf32> to vector<8x16x1024xf32>
    %98 = vector.shape_cast %82 : vector<16x1024xf32> to vector<1x16x1024xf32>
    %99 = vector.broadcast %98 : vector<1x16x1024xf32> to vector<8x16x1024xf32>
    %100 = arith.mulf %97, %99 : vector<8x16x1024xf32>
    %cst_26 = arith.constant dense<0.000000e+00> : vector<8x1024xf32>
    %101 = vector.multi_reduction <add>, %100, %cst_26 [1] : vector<8x16x1024xf32> to vector<8x1024xf32>
    %c8 = arith.constant 8 : index
    %c0_27 = arith.constant 0 : index
    %102 = vector.load %arg3[%c8, %c0_27] : memref<24x1024xf32, #tpu.memory_space<vmem>>, vector<8x1024xf32>
    tpu.vector_store %arg3[%c8, %c0_27], %101 {strides = array<i32>} : memref<24x1024xf32, #tpu.memory_space<vmem>>, vector<8x1024xf32>,
    %c2 = arith.constant 2 : index
    %c0_28 = arith.constant 0 : index
    %c0_29 = arith.constant 0 : index
    %103 = vector.load %arg2[%c2, %c0_28, %c0_29] : memref<3x128x16xbf16, #tpu.memory_space<vmem>>, vector<1x128x16xbf16>
    %104 = vector.shape_cast %103 : vector<1x128x16xbf16> to vector<128x16xbf16>
    %cst_30 = arith.constant dense<0.000000e+00> : vector<128x1024xf32>
    %105 = tpu.matmul %104, %83, %cst_30 {dimension_numbers = #tpu.dot_dimension_numbers<[1], [0], [0], [1], [0, 0, 1, 1], [], []>} : vector<128x16xbf16>, vector<16x1024xbf16>, vector<128x1024xf32> -> vector<128x1024xf32>
    %106 = vector.shape_cast %105 : vector<128x1024xf32> to vector<8x16x1024xf32>
    %107 = vector.shape_cast %82 : vector<16x1024xf32> to vector<1x16x1024xf32>
    %108 = vector.broadcast %107 : vector<1x16x1024xf32> to vector<8x16x1024xf32>
    %109 = arith.mulf %106, %108 : vector<8x16x1024xf32>
    %cst_31 = arith.constant dense<0.000000e+00> : vector<8x1024xf32>
    %110 = vector.multi_reduction <add>, %109, %cst_31 [1] : vector<8x16x1024xf32> to vector<8x1024xf32>
    %c16 = arith.constant 16 : index
    %c0_32 = arith.constant 0 : index
    %111 = vector.load %arg3[%c16, %c0_32] : memref<24x1024xf32, #tpu.memory_space<vmem>>, vector<8x1024xf32>
    tpu.vector_store %arg3[%c16, %c0_32], %110 {strides = array<i32>} : memref<24x1024xf32, #tpu.memory_space<vmem>>, vector<8x1024xf32>,
    return
  }
  func.func @transform_0(%arg0: i32) -> (i32, i32) {
    %c0_i32 = arith.constant 0 : i32
    %c0_i32_0 = arith.constant 0 : i32
    return %c0_i32, %arg0 : i32, i32
  }
  func.func @transform_1(%arg0: i32) -> (i32, i32, i32) {
    %c0_i32 = arith.constant 0 : i32
    %c0_i32_0 = arith.constant 0 : i32
    %c0_i32_1 = arith.constant 0 : i32
    %c0_i32_2 = arith.constant 0 : i32
    return %c0_i32, %c0_i32_0, %c0_i32_1 : i32, i32, i32
  }
  func.func @transform_2(%arg0: i32) -> (i32, i32) {
    %c0_i32 = arith.constant 0 : i32
    %c0_i32_0 = arith.constant 0 : i32
    return %c0_i32, %arg0 : i32, i32
  }
}

</mosaic_0001>

<llo_original>
// kernel: tpu_custom_call.1
$region0: #{tpu_custom_call.1}
  #allocation0 [shape = 'u32[]', space=smem, size = 0x4, offset = 0x4, fixed_abs, tag = 'smem constant byte address 0x4 - core index']
  #allocation1 [shape = 'u32[144,128]{1,0:T(1,128)}', space=vmem, size = 0x12000, scoped, tag = 'internal scratch']
  %s0 = inlined_call_operand.vmem [shape: f32[3,4096], index: 0, kind: input, shape index: {}]
  %s1 = inlined_call_operand.vmem [shape: bf16[3,128,16], index: 1, kind: input, shape index: {}]
  %s2 = inlined_call_operand.hbm [shape: f32[24,4096], index: 2, kind: output, shape index: {}]
  %s3 = sld [smem:[#allocation0]]
  $region41: #{tpu_custom_call.1} parent=0
    _
  %s5 = ssub.s32 1, %s3
  %s6 = scalar_select 0, %s5, %s3
  $region1: #{tpu_custom_call.1} parent=0
    #allocation2 [shape = 'u8[196608]{0}', space=vmem, size = 0x30000, scoped, tag = 'output window, operand 0']
    #allocation3 [shape = 's32[2]{0}', space=sflag, size = 0x8, scoped, tag = 'scoped memory for tpu_custom_call.1']
    %7 = vsyncpa [#allocation3], 0
    %s8 = scalar_lea.sflag [#allocation3], 1
    %9 = vsyncpa %s8, 0
    loop: start=0, step=1, limit=6
    $region2: #{tpu_custom_call.1} parent=1 // loop_pre_header
      _
    $region3: #{tpu_custom_call.1} parent=1 // loop_header
      %s11 = sphi 0, %s15
      %p12 = scmp.ge.s32.totalorder %s11, 6
      %s21 = sphi 0, %s23
      %s24 = sphi 0, %s21
      %s25 = sphi 0, %s24
      %s41 = sphi 0, %s25
      %s45 = sphi 0, %s45
      %s47 = sphi 0, %s45
      %s48 = sphi 0, %s47
      %s62 = sphi 0, %s48
      %s68 = sphi 0, %s70
      %s71 = sphi 0, %s68
      %s72 = sphi 0, %s71
      %s88 = sphi 0, %s72
    $region4: #{tpu_custom_call.1} parent=1 // loop_header_branch
      %14 = sbr.rel (%p12) target = $region8
    $region5: #{tpu_custom_call.1} parent=1 // loop_body
      %s16 = ssub.s32 %s11, 1
      %s17 = ssub.s32 %s11, 2
      %s18 = sadd.s32 %s11, 1
      %s19 = ssub.s32 %s11, %s18
      %p20 = scmp.eq.s32.totalorder %s19, 0
      %s22 = sadd.s32 %s21, 1
      %s23 = scalar_select %p20, %s21, %s22
      %p26 = pneg %p20
      %p27 = scmp.eq.s32.totalorder %s11, 3
      %p28 = por %p26, %p27
      %p29 = scmp.ne.s32.totalorder %s21, %s24
      %p30 = scmp.eq.s32.totalorder %s11, 0
      %p31 = por %p29, %p30
      %p32 = scmp.ne.s32.totalorder %s21, %s24
      %p33 = scmp.eq.s32.totalorder %s16, 3
      %p34 = por %p32, %p33
      %p35 = scmp.ne.s32.totalorder %s24, %s25
      %p36 = scmp.eq.s32.totalorder %s16, 0
      %p37 = por %p35, %p36
      %p38 = scmp.ne.s32.totalorder %s24, %s25
      %p39 = scmp.eq.s32.totalorder %s17, 3
      %p40 = por %p38, %p39
      %p42 = scmp.ne.s32.totalorder %s25, %s41
      %p43 = scmp.eq.s32.totalorder %s17, 0
      %p44 = por %p42, %p43
      %s46 = sadd.s32 %s45, 1
      %p49 = scmp.eq.s32.totalorder %s11, 3
      %p50 = scmp.ne.s32.totalorder %s45, %s47
      %p51 = scmp.eq.s32.totalorder %s11, 0
      %p52 = por %p50, %p51
      %p53 = scmp.ne.s32.totalorder %s45, %s47
      %p54 = scmp.eq.s32.totalorder %s16, 3
      %p55 = por %p53, %p54
      %p56 = scmp.ne.s32.totalorder %s47, %s48
      %p57 = scmp.eq.s32.totalorder %s16, 0
      %p58 = por %p56, %p57
      %p59 = scmp.ne.s32.totalorder %s47, %s48
      %p60 = scmp.eq.s32.totalorder %s17, 3
      %p61 = por %p59, %p60
      %p63 = scmp.ne.s32.totalorder %s48, %s62
      %p64 = scmp.eq.s32.totalorder %s17, 0
      %p65 = por %p63, %p64
      %s66 = ssub.s32 %s11, %s18
      %p67 = scmp.eq.s32.totalorder %s66, 0
      %s69 = sadd.s32 %s68, 1
      %s70 = scalar_select %p67, %s68, %s69
      %p73 = pneg %p67
      %p74 = scmp.eq.s32.totalorder %s11, 3
      %p75 = por %p73, %p74
      %p76 = scmp.ne.s32.totalorder %s68, %s71
      %p77 = scmp.eq.s32.totalorder %s11, 0
      %p78 = por %p76, %p77
      %p79 = scmp.ne.s32.totalorder %s68, %s71
      %p80 = scmp.eq.s32.totalorder %s16, 3
      %p81 = por %p79, %p80
      %p82 = scmp.ne.s32.totalorder %s71, %s72
      %p83 = scmp.eq.s32.totalorder %s16, 0
      %p84 = por %p82, %p83
      %p85 = scmp.ne.s32.totalorder %s71, %s72
      %p86 = scmp.eq.s32.totalorder %s17, 3
      %p87 = por %p85, %p86
      %p89 = scmp.ne.s32.totalorder %s72, %s88
      %p90 = scmp.eq.s32.totalorder %s17, 0
      %p91 = por %p89, %p90
      %p92 = scmp.le.s32.totalorder 1, %s11
      %p93 = scmp.lt.s32.totalorder %s11, 5
      %p94 = pnand %p92, %p93
      %p95 = pneg %p94
      // Predicated region
      $region9: #{tpu_custom_call.1} parent=5 // pred_check
        _
      $region10: #{tpu_custom_call.1} parent=5 // pred_check_branch
        %97 = sbr.rel (%p94) target = $region12
      $region11: #{tpu_custom_call.1} parent=5 // pred_region
        %s98 = ssub.s32 %s11, 1
        // Predicated region
        $region13: #{tpu_custom_call.1} parent=11 // pred_check
          %p99 = pneg %p58
        $region14: #{tpu_custom_call.1} parent=11 // pred_check_branch
          %101 = sbr.rel (%p99) target = $region16
        $region15: #{tpu_custom_call.1} parent=11 // pred_region
          _
        $region16: #{tpu_custom_call.1} parent=11 // pred_fallthru
          _
      $region12: #{tpu_custom_call.1} parent=5 // pred_fallthru
        _
      %p102 = scmp.lt.s32.totalorder %s11, 4
      // Predicated region
      $region17: #{tpu_custom_call.1} parent=5 // pred_check
        %p103 = pneg %p102
      $region18: #{tpu_custom_call.1} parent=5 // pred_check_branch
        %105 = sbr.rel (%p103) target = $region20
      $region19: #{tpu_custom_call.1} parent=5 // pred_region
        // Predicated region
        $region21: #{tpu_custom_call.1} parent=19 // pred_check
          %p106 = pneg %p31
        $region22: #{tpu_custom_call.1} parent=19 // pred_check_branch
          %108 = sbr.rel (%p106) target = $region24
        $region23: #{tpu_custom_call.1} parent=19 // pred_region
          %s109 = smul.u32 8, %s11
          %p110 = scmp.lt.s32.totalorder %s109, 31
          %s111 = scalar_select %p110, %s109, 31
          %s112 = smul.addr %s111, 4
          %s113 = scalar_lea.vmem %s0, %s112
          %s114 = smul.u32 8, %s11
        $region24: #{tpu_custom_call.1} parent=19 // pred_fallthru
          _
      $region20: #{tpu_custom_call.1} parent=5 // pred_fallthru
        _
      %p115 = scmp.le.s32.totalorder 1, %s11
      %p116 = scmp.lt.s32.totalorder %s11, 5
      %p117 = pnand %p115, %p116
      %p118 = pneg %p117
      // Predicated region
      $region25: #{tpu_custom_call.1} parent=5 // pred_check
        _
      $region26: #{tpu_custom_call.1} parent=5 // pred_check_branch
        %120 = sbr.rel (%p117) target = $region28
      $region27: #{tpu_custom_call.1} parent=5 // pred_region
        %s121 = ssub.s32 %s11, 1
        %s122 = smul.u32 8, %s16
        %p123 = scmp.lt.s32.totalorder %s122, 31
        %s124 = scalar_select %p123, %s122, 31
        %s125 = smul.addr %s124, 4
        %s126 = scalar_lea.vmem %s0, %s125
        %p127 = pneg %p37
        %p128 = pneg %p34
        %p129 = pneg %p58
        %p130 = pneg %p55
        %p131 = pneg %p84
        %p132 = pneg %p81
        %s133 = sand.u32 %s71, 1
        %s134 = scalar_lea.sflag [#allocation3], %s133
        %s135 = sand.u32 %s71, 1
        %s136 = smul.addr %s135, 192
        %s137 = scalar_lea.vmem [#allocation2], %s136
        %s138 = smul.u32 8, %s16
        %p139 = scmp.lt.s32.totalorder %s138, 31
        %s140 = scalar_select %p139, %s138, 31
        %s141 = smul.addr %s140, 4
        %s142 = scalar_lea.vmem %s0, %s141
        %s143 = smul.u32 8, %s16
        %s144 = smul.u32 8, %s16
        %v146 = vld [vmem:[%s142] sm:$0x77]
        %v147 = vld [vmem:[%s142 + $0x8] sm:$0x77]
        %v148 = vld [vmem:[%s142 + $0x10] sm:$0x77]
        %v149 = vld [vmem:[%s142 + $0x18] sm:$0x77]
        %v150 = vmul.f32 %v146, 0.5
        %v151 = vmul.f32 %v147, 0.5
        %v152 = vmul.f32 %v148, 0.5
        %v153 = vmul.f32 %v149, 0.5
        %v154 = vadd.f32 %v150, 1.0
        %v155 = vadd.f32 %v151, 1.0
        %v156 = vadd.f32 %v152, 1.0
        %v157 = vadd.f32 %v153, 1.0
        %v158 = vmul.f32 %v154, 16.0
        %v159 = vmul.f32 %v155, 16.0
        %v160 = vmul.f32 %v156, 16.0
        %v161 = vmul.f32 %v157, 16.0
        %v162 = vsub.f32 %v158, 1.0
        %v163 = vsub.f32 %v159, 1.0
        %v164 = vsub.f32 %v160, 1.0
        %v165 = vsub.f32 %v161, 1.0
        %v166 = vmul.f32 %v162, 0.5
        %v167 = vmul.f32 %v163, 0.5
        %v168 = vmul.f32 %v164, 0.5
        %v169 = vmul.f32 %v165, 0.5
        %v170 = vmax.f32 %v166, 0.0
        %v171 = vmax.f32 %v167, 0.0
        %v172 = vmax.f32 %v168, 0.0
        %v173 = vmax.f32 %v169, 0.0
        %v174 = vmin.f32 %v170, 15.0
        %v175 = vmin.f32 %v171, 15.0
        %v176 = vmin.f32 %v172, 15.0
        %v177 = vmin.f32 %v173, 15.0
        %v178 = vfloor.f32 %v174
        %v179 = vfloor.f32 %v175
        %v180 = vfloor.f32 %v176
        %v181 = vfloor.f32 %v177
        %v182 = vsub.f32 %v174, %v178
        %v183 = vsub.f32 %v175, %v179
        %v184 = vsub.f32 %v176, %v180
        %v185 = vsub.f32 %v177, %v181
        %v186 = vcvt.f32.s32.to.zero.pseudo %v178
        %v187 = vcvt.f32.s32.to.zero.pseudo %v179
        %v188 = vcvt.f32.s32.to.zero.pseudo %v180
        %v189 = vcvt.f32.s32.to.zero.pseudo %v181
        %v190 = vadd.s32 %v186, 1
        %v191 = vadd.s32 %v187, 1
        %v192 = vadd.s32 %v188, 1
        %v193 = vadd.s32 %v189, 1
        %vm194 = vcmp.lt.s32.totalorder %v190, 15
        %v195 = vsel %vm194, %v190, 15
        %vm196 = vcmp.lt.s32.totalorder %v191, 15
        %v197 = vsel %vm196, %v191, 15
        %vm198 = vcmp.lt.s32.totalorder %v192, 15
        %v199 = vsel %vm198, %v192, 15
        %vm200 = vcmp.lt.s32.totalorder %v193, 15
        %v201 = vsel %vm200, %v193, 15
        %v202 = vlaneseq
        %v203 = vshrl.u32 %v202, 7
        %v204 = vadd.s32 %v203, 8
        %v205 = vlaneseq
        %v206 = vshrl.u32 %v205, 7
        %v207 = vsub.s32 0, %v206
        %v208 = vrot.slane %v186, %v207
        %v209 = vlaneseq
        %v210 = vshrl.u32 %v209, 7
        %v211 = vsub.s32 4, %v210
        %v212 = vrot.slane %v186, %v211
        %v213 = vlaneseq
        %v214 = vshrl.u32 %v213, 7
        %v215 = vsub.s32 0, %v214
        %v216 = vrot.slane %v187, %v215
        %v217 = vlaneseq
        %v218 = vshrl.u32 %v217, 7
        %v219 = vsub.s32 4, %v218
        %v220 = vrot.slane %v187, %v219
        %v221 = vlaneseq
        %v222 = vshrl.u32 %v221, 7
        %v223 = vsub.s32 0, %v222
        %v224 = vrot.slane %v188, %v223
        %v225 = vlaneseq
        %v226 = vshrl.u32 %v225, 7
        %v227 = vsub.s32 4, %v226
        %v228 = vrot.slane %v188, %v227
        %v229 = vlaneseq
        %v230 = vshrl.u32 %v229, 7
        %v231 = vsub.s32 0, %v230
        %v232 = vrot.slane %v189, %v231
        %v233 = vlaneseq
        %v234 = vshrl.u32 %v233, 7
        %v235 = vsub.s32 4, %v234
        %v236 = vrot.slane %v189, %v235
        %v237 = vlaneseq
        %v238 = vshrl.u32 %v237, 7
        %v239 = vsub.s32 0, %v238
        %v240 = vrot.slane %v208, %v239
        %v241 = vlaneseq
        %v242 = vshrl.u32 %v241, 7
        %v243 = vsub.s32 0, %v242
        %v244 = vrot.slane %v212, %v243
        %v245 = vlaneseq
        %v246 = vshrl.u32 %v245, 7
        %v247 = vsub.s32 0, %v246
        %v248 = vrot.slane %v216, %v247
        %v249 = vlaneseq
        %v250 = vshrl.u32 %v249, 7
        %v251 = vsub.s32 0, %v250
        %v252 = vrot.slane %v220, %v251
        %v253 = vlaneseq
        %v254 = vshrl.u32 %v253, 7
        %v255 = vsub.s32 0, %v254
        %v256 = vrot.slane %v224, %v255
        %v257 = vlaneseq
        %v258 = vshrl.u32 %v257, 7
        %v259 = vsub.s32 0, %v258
        %v260 = vrot.slane %v228, %v259
        %v261 = vlaneseq
        %v262 = vshrl.u32 %v261, 7
        %v263 = vsub.s32 0, %v262
        %v264 = vrot.slane %v232, %v263
        %v265 = vlaneseq
        %v266 = vshrl.u32 %v265, 7
        %v267 = vsub.s32 0, %v266
        %v268 = vrot.slane %v236, %v267
        %vm269 = vcmp.eq.s32.totalorder %v203, %v240
        %vm270 = vcmp.eq.s32.totalorder %v203, %v244
        %vm271 = vcmp.eq.s32.totalorder %v203, %v248
        %vm272 = vcmp.eq.s32.totalorder %v203, %v252
        %vm273 = vcmp.eq.s32.totalorder %v203, %v256
        %vm274 = vcmp.eq.s32.totalorder %v203, %v260
        %vm275 = vcmp.eq.s32.totalorder %v203, %v264
        %vm276 = vcmp.eq.s32.totalorder %v203, %v268
        %vm277 = vcmp.eq.s32.totalorder %v204, %v240
        %vm278 = vcmp.eq.s32.totalorder %v204, %v244
        %vm279 = vcmp.eq.s32.totalorder %v204, %v248
        %vm280 = vcmp.eq.s32.totalorder %v204, %v252
        %vm281 = vcmp.eq.s32.totalorder %v204, %v256
        %vm282 = vcmp.eq.s32.totalorder %v204, %v260
        %vm283 = vcmp.eq.s32.totalorder %v204, %v264
        %vm284 = vcmp.eq.s32.totalorder %v204, %v268
        %v285 = vsub.f32 1.0, %v182
        %v286 = vsub.f32 1.0, %v183
        %v287 = vsub.f32 1.0, %v184
        %v288 = vsub.f32 1.0, %v185
        %v293 = vlaneseq
        %v294 = vshrl.u32 %v293, 7
        %v295 = vsub.s32 0, %v294
        %v296 = vrot.slane %v285, %v295
        %v297 = vlaneseq
        %v298 = vshrl.u32 %v297, 7
        %v299 = vsub.s32 4, %v298
        %v300 = vrot.slane %v285, %v299
        %v301 = vlaneseq
        %v302 = vshrl.u32 %v301, 7
        %v303 = vsub.s32 0, %v302
        %v304 = vrot.slane %v286, %v303
        %v305 = vlaneseq
        %v306 = vshrl.u32 %v305, 7
        %v307 = vsub.s32 4, %v306
        %v308 = vrot.slane %v286, %v307
        %v309 = vlaneseq
        %v310 = vshrl.u32 %v309, 7
        %v311 = vsub.s32 0, %v310
        %v312 = vrot.slane %v287, %v311
        %v313 = vlaneseq
        %v314 = vshrl.u32 %v313, 7
        %v315 = vsub.s32 4, %v314
        %v316 = vrot.slane %v287, %v315
        %v317 = vlaneseq
        %v318 = vshrl.u32 %v317, 7
        %v319 = vsub.s32 0, %v318
        %v320 = vrot.slane %v288, %v319
        %v321 = vlaneseq
        %v322 = vshrl.u32 %v321, 7
        %v323 = vsub.s32 4, %v322
        %v324 = vrot.slane %v288, %v323
        %v333 = vlaneseq
        %v334 = vshrl.u32 %v333, 7
        %v335 = vsub.s32 0, %v334
        %v336 = vrot.slane %v296, %v335
        %v337 = vlaneseq
        %v338 = vshrl.u32 %v337, 7
        %v339 = vsub.s32 0, %v338
        %v340 = vrot.slane %v300, %v339
        %v341 = vlaneseq
        %v342 = vshrl.u32 %v341, 7
        %v343 = vsub.s32 0, %v342
        %v344 = vrot.slane %v304, %v343
        %v345 = vlaneseq
        %v346 = vshrl.u32 %v345, 7
        %v347 = vsub.s32 0, %v346
        %v348 = vrot.slane %v308, %v347
        %v349 = vlaneseq
        %v350 = vshrl.u32 %v349, 7
        %v351 = vsub.s32 0, %v350
        %v352 = vrot.slane %v312, %v351
        %v353 = vlaneseq
        %v354 = vshrl.u32 %v353, 7
        %v355 = vsub.s32 0, %v354
        %v356 = vrot.slane %v316, %v355
        %v357 = vlaneseq
        %v358 = vshrl.u32 %v357, 7
        %v359 = vsub.s32 0, %v358
        %v360 = vrot.slane %v320, %v359
        %v361 = vlaneseq
        %v362 = vshrl.u32 %v361, 7
        %v363 = vsub.s32 0, %v362
        %v364 = vrot.slane %v324, %v363
        %v365 = vsel %vm269, %v336, 0.0
        %v366 = vsel %vm270, %v340, 0.0
        %v367 = vsel %vm271, %v344, 0.0
        %v368 = vsel %vm272, %v348, 0.0
        %v369 = vsel %vm273, %v352, 0.0
        %v370 = vsel %vm274, %v356, 0.0
        %v371 = vsel %vm275, %v360, 0.0
        %v372 = vsel %vm276, %v364, 0.0
        %v373 = vsel %vm277, %v336, 0.0
        %v374 = vsel %vm278, %v340, 0.0
        %v375 = vsel %vm279, %v344, 0.0
        %v376 = vsel %vm280, %v348, 0.0
        %v377 = vsel %vm281, %v352, 0.0
        %v378 = vsel %vm282, %v356, 0.0
        %v379 = vsel %vm283, %v360, 0.0
        %v380 = vsel %vm284, %v364, 0.0
        %v381 = vlaneseq
        %v382 = vshrl.u32 %v381, 7
        %v383 = vsub.s32 0, %v382
        %v384 = vrot.slane %v195, %v383
        %v385 = vlaneseq
        %v386 = vshrl.u32 %v385, 7
        %v387 = vsub.s32 4, %v386
        %v388 = vrot.slane %v195, %v387
        %v389 = vlaneseq
        %v390 = vshrl.u32 %v389, 7
        %v391 = vsub.s32 0, %v390
        %v392 = vrot.slane %v197, %v391
        %v393 = vlaneseq
        %v394 = vshrl.u32 %v393, 7
        %v395 = vsub.s32 4, %v394
        %v396 = vrot.slane %v197, %v395
        %v397 = vlaneseq
        %v398 = vshrl.u32 %v397, 7
        %v399 = vsub.s32 0, %v398
        %v400 = vrot.slane %v199, %v399
        %v401 = vlaneseq
        %v402 = vshrl.u32 %v401, 7
        %v403 = vsub.s32 4, %v402
        %v404 = vrot.slane %v199, %v403
        %v405 = vlaneseq
        %v406 = vshrl.u32 %v405, 7
        %v407 = vsub.s32 0, %v406
        %v408 = vrot.slane %v201, %v407
        %v409 = vlaneseq
        %v410 = vshrl.u32 %v409, 7
        %v411 = vsub.s32 4, %v410
        %v412 = vrot.slane %v201, %v411
        %v413 = vlaneseq
        %v414 = vshrl.u32 %v413, 7
        %v415 = vsub.s32 0, %v414
        %v416 = vrot.slane %v384, %v415
        %v417 = vlaneseq
        %v418 = vshrl.u32 %v417, 7
        %v419 = vsub.s32 0, %v418
        %v420 = vrot.slane %v388, %v419
        %v421 = vlaneseq
        %v422 = vshrl.u32 %v421, 7
        %v423 = vsub.s32 0, %v422
        %v424 = vrot.slane %v392, %v423
        %v425 = vlaneseq
        %v426 = vshrl.u32 %v425, 7
        %v427 = vsub.s32 0, %v426
        %v428 = vrot.slane %v396, %v427
        %v429 = vlaneseq
        %v430 = vshrl.u32 %v429, 7
        %v431 = vsub.s32 0, %v430
        %v432 = vrot.slane %v400, %v431
        %v433 = vlaneseq
        %v434 = vshrl.u32 %v433, 7
        %v435 = vsub.s32 0, %v434
        %v436 = vrot.slane %v404, %v435
        %v437 = vlaneseq
        %v438 = vshrl.u32 %v437, 7
        %v439 = vsub.s32 0, %v438
        %v440 = vrot.slane %v408, %v439
        %v441 = vlaneseq
        %v442 = vshrl.u32 %v441, 7
        %v443 = vsub.s32 0, %v442
        %v444 = vrot.slane %v412, %v443
        %vm445 = vcmp.eq.s32.totalorder %v203, %v416
        %vm446 = vcmp.eq.s32.totalorder %v203, %v420
        %vm447 = vcmp.eq.s32.totalorder %v203, %v424
        %vm448 = vcmp.eq.s32.totalorder %v203, %v428
        %vm449 = vcmp.eq.s32.totalorder %v203, %v432
        %vm450 = vcmp.eq.s32.totalorder %v203, %v436
        %vm451 = vcmp.eq.s32.totalorder %v203, %v440
        %vm452 = vcmp.eq.s32.totalorder %v203, %v444
        %vm453 = vcmp.eq.s32.totalorder %v204, %v416
        %vm454 = vcmp.eq.s32.totalorder %v204, %v420
        %vm455 = vcmp.eq.s32.totalorder %v204, %v424
        %vm456 = vcmp.eq.s32.totalorder %v204, %v428
        %vm457 = vcmp.eq.s32.totalorder %v204, %v432
        %vm458 = vcmp.eq.s32.totalorder %v204, %v436
        %vm459 = vcmp.eq.s32.totalorder %v204, %v440
        %vm460 = vcmp.eq.s32.totalorder %v204, %v444
        %v465 = vlaneseq
        %v466 = vshrl.u32 %v465, 7
        %v467 = vsub.s32 0, %v466
        %v468 = vrot.slane %v182, %v467
        %v469 = vlaneseq
        %v470 = vshrl.u32 %v469, 7
        %v471 = vsub.s32 4, %v470
        %v472 = vrot.slane %v182, %v471
        %v473 = vlaneseq
        %v474 = vshrl.u32 %v473, 7
        %v475 = vsub.s32 0, %v474
        %v476 = vrot.slane %v183, %v475
        %v477 = vlaneseq
        %v478 = vshrl.u32 %v477, 7
        %v479 = vsub.s32 4, %v478
        %v480 = vrot.slane %v183, %v479
        %v481 = vlaneseq
        %v482 = vshrl.u32 %v481, 7
        %v483 = vsub.s32 0, %v482
        %v484 = vrot.slane %v184, %v483
        %v485 = vlaneseq
        %v486 = vshrl.u32 %v485, 7
        %v487 = vsub.s32 4, %v486
        %v488 = vrot.slane %v184, %v487
        %v489 = vlaneseq
        %v490 = vshrl.u32 %v489, 7
        %v491 = vsub.s32 0, %v490
        %v492 = vrot.slane %v185, %v491
        %v493 = vlaneseq
        %v494 = vshrl.u32 %v493, 7
        %v495 = vsub.s32 4, %v494
        %v496 = vrot.slane %v185, %v495
        %v505 = vlaneseq
        %v506 = vshrl.u32 %v505, 7
        %v507 = vsub.s32 0, %v506
        %v508 = vrot.slane %v468, %v507
        %v509 = vlaneseq
        %v510 = vshrl.u32 %v509, 7
        %v511 = vsub.s32 0, %v510
        %v512 = vrot.slane %v472, %v511
        %v513 = vlaneseq
        %v514 = vshrl.u32 %v513, 7
        %v515 = vsub.s32 0, %v514
        %v516 = vrot.slane %v476, %v515
        %v517 = vlaneseq
        %v518 = vshrl.u32 %v517, 7
        %v519 = vsub.s32 0, %v518
        %v520 = vrot.slane %v480, %v519
        %v521 = vlaneseq
        %v522 = vshrl.u32 %v521, 7
        %v523 = vsub.s32 0, %v522
        %v524 = vrot.slane %v484, %v523
        %v525 = vlaneseq
        %v526 = vshrl.u32 %v525, 7
        %v527 = vsub.s32 0, %v526
        %v528 = vrot.slane %v488, %v527
        %v529 = vlaneseq
        %v530 = vshrl.u32 %v529, 7
        %v531 = vsub.s32 0, %v530
        %v532 = vrot.slane %v492, %v531
        %v533 = vlaneseq
        %v534 = vshrl.u32 %v533, 7
        %v535 = vsub.s32 0, %v534
        %v536 = vrot.slane %v496, %v535
        %v537 = vsel %vm445, %v508, 0.0
        %v538 = vsel %vm446, %v512, 0.0
        %v539 = vsel %vm447, %v516, 0.0
        %v540 = vsel %vm448, %v520, 0.0
        %v541 = vsel %vm449, %v524, 0.0
        %v542 = vsel %vm450, %v528, 0.0
        %v543 = vsel %vm451, %v532, 0.0
        %v544 = vsel %vm452, %v536, 0.0
        %v545 = vsel %vm453, %v508, 0.0
        %v546 = vsel %vm454, %v512, 0.0
        %v547 = vsel %vm455, %v516, 0.0
        %v548 = vsel %vm456, %v520, 0.0
        %v549 = vsel %vm457, %v524, 0.0
        %v550 = vsel %vm458, %v528, 0.0
        %v551 = vsel %vm459, %v532, 0.0
        %v552 = vsel %vm460, %v536, 0.0
        %v553 = vadd.f32 %v365, %v537
        %v554 = vadd.f32 %v366, %v538
        %v555 = vadd.f32 %v367, %v539
        %v556 = vadd.f32 %v368, %v540
        %v557 = vadd.f32 %v369, %v541
        %v558 = vadd.f32 %v370, %v542
        %v559 = vadd.f32 %v371, %v543
        %v560 = vadd.f32 %v372, %v544
        %v561 = vadd.f32 %v373, %v545
        %v562 = vadd.f32 %v374, %v546
        %v563 = vadd.f32 %v375, %v547
        %v564 = vadd.f32 %v376, %v548
        %v565 = vadd.f32 %v377, %v549
        %v566 = vadd.f32 %v378, %v550
        %v567 = vadd.f32 %v379, %v551
        %v568 = vadd.f32 %v380, %v552
        %v569 = vlaneseq
        %v570 = vshrl.u32 %v569, 7
        %v571 = vsub.s32 1, %v570
        %v572 = vrot.slane %v186, %v571
        %v573 = vlaneseq
        %v574 = vshrl.u32 %v573, 7
        %v575 = vsub.s32 5, %v574
        %v576 = vrot.slane %v186, %v575
        %v577 = vlaneseq
        %v578 = vshrl.u32 %v577, 7
        %v579 = vsub.s32 1, %v578
        %v580 = vrot.slane %v187, %v579
        %v581 = vlaneseq
        %v582 = vshrl.u32 %v581, 7
        %v583 = vsub.s32 5, %v582
        %v584 = vrot.slane %v187, %v583
        %v585 = vlaneseq
        %v586 = vshrl.u32 %v585, 7
        %v587 = vsub.s32 1, %v586
        %v588 = vrot.slane %v188, %v587
        %v589 = vlaneseq
        %v590 = vshrl.u32 %v589, 7
        %v591 = vsub.s32 5, %v590
        %v592 = vrot.slane %v188, %v591
        %v593 = vlaneseq
        %v594 = vshrl.u32 %v593, 7
        %v595 = vsub.s32 1, %v594
        %v596 = vrot.slane %v189, %v595
        %v597 = vlaneseq
        %v598 = vshrl.u32 %v597, 7
        %v599 = vsub.s32 5, %v598
        %v600 = vrot.slane %v189, %v599
        %v601 = vlaneseq
        %v602 = vshrl.u32 %v601, 7
        %v603 = vsub.s32 1, %v602
        %v604 = vrot.slane %v572, %v603
        %v605 = vlaneseq
        %v606 = vshrl.u32 %v605, 7
        %v607 = vsub.s32 1, %v606
        %v608 = vrot.slane %v576, %v607
        %v609 = vlaneseq
        %v610 = vshrl.u32 %v609, 7
        %v611 = vsub.s32 1, %v610
        %v612 = vrot.slane %v580, %v611
        %v613 = vlaneseq
        %v614 = vshrl.u32 %v613, 7
        %v615 = vsub.s32 1, %v614
        %v616 = vrot.slane %v584, %v615
        %v617 = vlaneseq
        %v618 = vshrl.u32 %v617, 7
        %v619 = vsub.s32 1, %v618
        %v620 = vrot.slane %v588, %v619
        %v621 = vlaneseq
        %v622 = vshrl.u32 %v621, 7
        %v623 = vsub.s32 1, %v622
        %v624 = vrot.slane %v592, %v623
        %v625 = vlaneseq
        %v626 = vshrl.u32 %v625, 7
        %v627 = vsub.s32 1, %v626
        %v628 = vrot.slane %v596, %v627
        %v629 = vlaneseq
        %v630 = vshrl.u32 %v629, 7
        %v631 = vsub.s32 1, %v630
        %v632 = vrot.slane %v600, %v631
        %vm633 = vcmp.eq.s32.totalorder %v203, %v604
        %vm634 = vcmp.eq.s32.totalorder %v203, %v608
        %vm635 = vcmp.eq.s32.totalorder %v203, %v612
        %vm636 = vcmp.eq.s32.totalorder %v203, %v616
        %vm637 = vcmp.eq.s32.totalorder %v203, %v620
        %vm638 = vcmp.eq.s32.totalorder %v203, %v624
        %vm639 = vcmp.eq.s32.totalorder %v203, %v628
        %vm640 = vcmp.eq.s32.totalorder %v203, %v632
        %vm641 = vcmp.eq.s32.totalorder %v204, %v604
        %vm642 = vcmp.eq.s32.totalorder %v204, %v608
        %vm643 = vcmp.eq.s32.totalorder %v204, %v612
        %vm644 = vcmp.eq.s32.totalorder %v204, %v616
        %vm645 = vcmp.eq.s32.totalorder %v204, %v620
        %vm646 = vcmp.eq.s32.totalorder %v204, %v624
        %vm647 = vcmp.eq.s32.totalorder %v204, %v628
        %vm648 = vcmp.eq.s32.totalorder %v204, %v632
        %v649 = vlaneseq
        %v650 = vshrl.u32 %v649, 7
        %v651 = vsub.s32 1, %v650
        %v652 = vrot.slane %v285, %v651
        %v653 = vlaneseq
        %v654 = vshrl.u32 %v653, 7
        %v655 = vsub.s32 5, %v654
        %v656 = vrot.slane %v285, %v655
        %v657 = vlaneseq
        %v658 = vshrl.u32 %v657, 7
        %v659 = vsub.s32 1, %v658
        %v660 = vrot.slane %v286, %v659
        %v661 = vlaneseq
        %v662 = vshrl.u32 %v661, 7
        %v663 = vsub.s32 5, %v662
        %v664 = vrot.slane %v286, %v663
        %v665 = vlaneseq
        %v666 = vshrl.u32 %v665, 7
        %v667 = vsub.s32 1, %v666
        %v668 = vrot.slane %v287, %v667
        %v669 = vlaneseq
        %v670 = vshrl.u32 %v669, 7
        %v671 = vsub.s32 5, %v670
        %v672 = vrot.slane %v287, %v671
        %v673 = vlaneseq
        %v674 = vshrl.u32 %v673, 7
        %v675 = vsub.s32 1, %v674
        %v676 = vrot.slane %v288, %v675
        %v677 = vlaneseq
        %v678 = vshrl.u32 %v677, 7
        %v679 = vsub.s32 5, %v678
        %v680 = vrot.slane %v288, %v679
        %v689 = vlaneseq
        %v690 = vshrl.u32 %v689, 7
        %v691 = vsub.s32 1, %v690
        %v692 = vrot.slane %v652, %v691
        %v693 = vlaneseq
        %v694 = vshrl.u32 %v693, 7
        %v695 = vsub.s32 1, %v694
        %v696 = vrot.slane %v656, %v695
        %v697 = vlaneseq
        %v698 = vshrl.u32 %v697, 7
        %v699 = vsub.s32 1, %v698
        %v700 = vrot.slane %v660, %v699
        %v701 = vlaneseq
        %v702 = vshrl.u32 %v701, 7
        %v703 = vsub.s32 1, %v702
        %v704 = vrot.slane %v664, %v703
        %v705 = vlaneseq
        %v706 = vshrl.u32 %v705, 7
        %v707 = vsub.s32 1, %v706
        %v708 = vrot.slane %v668, %v707
        %v709 = vlaneseq
        %v710 = vshrl.u32 %v709, 7
        %v711 = vsub.s32 1, %v710
        %v712 = vrot.slane %v672, %v711
        %v713 = vlaneseq
        %v714 = vshrl.u32 %v713, 7
        %v715 = vsub.s32 1, %v714
        %v716 = vrot.slane %v676, %v715
        %v717 = vlaneseq
        %v718 = vshrl.u32 %v717, 7
        %v719 = vsub.s32 1, %v718
        %v720 = vrot.slane %v680, %v719
        %v721 = vsel %vm633, %v692, 0.0
        %v722 = vsel %vm634, %v696, 0.0
        %v723 = vsel %vm635, %v700, 0.0
        %v724 = vsel %vm636, %v704, 0.0
        %v725 = vsel %vm637, %v708, 0.0
        %v726 = vsel %vm638, %v712, 0.0
        %v727 = vsel %vm639, %v716, 0.0
        %v728 = vsel %vm640, %v720, 0.0
        %v729 = vsel %vm641, %v692, 0.0
        %v730 = vsel %vm642, %v696, 0.0
        %v731 = vsel %vm643, %v700, 0.0
        %v732 = vsel %vm644, %v704, 0.0
        %v733 = vsel %vm645, %v708, 0.0
        %v734 = vsel %vm646, %v712, 0.0
        %v735 = vsel %vm647, %v716, 0.0
        %v736 = vsel %vm648, %v720, 0.0
        %v737 = vlaneseq
        %v738 = vshrl.u32 %v737, 7
        %v739 = vsub.s32 1, %v738
        %v740 = vrot.slane %v195, %v739
        %v741 = vlaneseq
        %v742 = vshrl.u32 %v741, 7
        %v743 = vsub.s32 5, %v742
        %v744 = vrot.slane %v195, %v743
        %v745 = vlaneseq
        %v746 = vshrl.u32 %v745, 7
        %v747 = vsub.s32 1, %v746
        %v748 = vrot.slane %v197, %v747
        %v749 = vlaneseq
        %v750 = vshrl.u32 %v749, 7
        %v751 = vsub.s32 5, %v750
        %v752 = vrot.slane %v197, %v751
        %v753 = vlaneseq
        %v754 = vshrl.u32 %v753, 7
        %v755 = vsub.s32 1, %v754
        %v756 = vrot.slane %v199, %v755
        %v757 = vlaneseq
        %v758 = vshrl.u32 %v757, 7
        %v759 = vsub.s32 5, %v758
        %v760 = vrot.slane %v199, %v759
        %v761 = vlaneseq
        %v762 = vshrl.u32 %v761, 7
        %v763 = vsub.s32 1, %v762
        %v764 = vrot.slane %v201, %v763
        %v765 = vlaneseq
        %v766 = vshrl.u32 %v765, 7
        %v767 = vsub.s32 5, %v766
        %v768 = vrot.slane %v201, %v767
        %v769 = vlaneseq
        %v770 = vshrl.u32 %v769, 7
        %v771 = vsub.s32 1, %v770
        %v772 = vrot.slane %v740, %v771
        %v773 = vlaneseq
        %v774 = vshrl.u32 %v773, 7
        %v775 = vsub.s32 1, %v774
        %v776 = vrot.slane %v744, %v775
        %v777 = vlaneseq
        %v778 = vshrl.u32 %v777, 7
        %v779 = vsub.s32 1, %v778
        %v780 = vrot.slane %v748, %v779
        %v781 = vlaneseq
        %v782 = vshrl.u32 %v781, 7
        %v783 = vsub.s32 1, %v782
        %v784 = vrot.slane %v752, %v783
        %v785 = vlaneseq
        %v786 = vshrl.u32 %v785, 7
        %v787 = vsub.s32 1, %v786
        %v788 = vrot.slane %v756, %v787
        %v789 = vlaneseq
        %v790 = vshrl.u32 %v789, 7
        %v791 = vsub.s32 1, %v790
        %v792 = vrot.slane %v760, %v791
        %v793 = vlaneseq
        %v794 = vshrl.u32 %v793, 7
        %v795 = vsub.s32 1, %v794
        %v796 = vrot.slane %v764, %v795
        %v797 = vlaneseq
        %v798 = vshrl.u32 %v797, 7
        %v799 = vsub.s32 1, %v798
        %v800 = vrot.slane %v768, %v799
        %vm801 = vcmp.eq.s32.totalorder %v203, %v772
        %vm802 = vcmp.eq.s32.totalorder %v203, %v776
        %vm803 = vcmp.eq.s32.totalorder %v203, %v780
        %vm804 = vcmp.eq.s32.totalorder %v203, %v784
        %vm805 = vcmp.eq.s32.totalorder %v203, %v788
        %vm806 = vcmp.eq.s32.totalorder %v203, %v792
        %vm807 = vcmp.eq.s32.totalorder %v203, %v796
        %vm808 = vcmp.eq.s32.totalorder %v203, %v800
        %vm809 = vcmp.eq.s32.totalorder %v204, %v772
        %vm810 = vcmp.eq.s32.totalorder %v204, %v776
        %vm811 = vcmp.eq.s32.totalorder %v204, %v780
        %vm812 = vcmp.eq.s32.totalorder %v204, %v784
        %vm813 = vcmp.eq.s32.totalorder %v204, %v788
        %vm814 = vcmp.eq.s32.totalorder %v204, %v792
        %vm815 = vcmp.eq.s32.totalorder %v204, %v796
        %vm816 = vcmp.eq.s32.totalorder %v204, %v800
        %v817 = vlaneseq
        %v818 = vshrl.u32 %v817, 7
        %v819 = vsub.s32 1, %v818
        %v820 = vrot.slane %v182, %v819
        %v821 = vlaneseq
        %v822 = vshrl.u32 %v821, 7
        %v823 = vsub.s32 5, %v822
        %v824 = vrot.slane %v182, %v823
        %v825 = vlaneseq
        %v826 = vshrl.u32 %v825, 7
        %v827 = vsub.s32 1, %v826
        %v828 = vrot.slane %v183, %v827
        %v829 = vlaneseq
        %v830 = vshrl.u32 %v829, 7
        %v831 = vsub.s32 5, %v830
        %v832 = vrot.slane %v183, %v831
        %v833 = vlaneseq
        %v834 = vshrl.u32 %v833, 7
        %v835 = vsub.s32 1, %v834
        %v836 = vrot.slane %v184, %v835
        %v837 = vlaneseq
        %v838 = vshrl.u32 %v837, 7
        %v839 = vsub.s32 5, %v838
        %v840 = vrot.slane %v184, %v839
        %v841 = vlaneseq
        %v842 = vshrl.u32 %v841, 7
        %v843 = vsub.s32 1, %v842
        %v844 = vrot.slane %v185, %v843
        %v845 = vlaneseq
        %v846 = vshrl.u32 %v845, 7
        %v847 = vsub.s32 5, %v846
        %v848 = vrot.slane %v185, %v847
        %v857 = vlaneseq
        %v858 = vshrl.u32 %v857, 7
        %v859 = vsub.s32 1, %v858
        %v860 = vrot.slane %v820, %v859
        %v861 = vlaneseq
        %v862 = vshrl.u32 %v861, 7
        %v863 = vsub.s32 1, %v862
        %v864 = vrot.slane %v824, %v863
        %v865 = vlaneseq
        %v866 = vshrl.u32 %v865, 7
        %v867 = vsub.s32 1, %v866
        %v868 = vrot.slane %v828, %v867
        %v869 = vlaneseq
        %v870 = vshrl.u32 %v869, 7
        %v871 = vsub.s32 1, %v870
        %v872 = vrot.slane %v832, %v871
        %v873 = vlaneseq
        %v874 = vshrl.u32 %v873, 7
        %v875 = vsub.s32 1, %v874
        %v876 = vrot.slane %v836, %v875
        %v877 = vlaneseq
        %v878 = vshrl.u32 %v877, 7
        %v879 = vsub.s32 1, %v878
        %v880 = vrot.slane %v840, %v879
        %v881 = vlaneseq
        %v882 = vshrl.u32 %v881, 7
        %v883 = vsub.s32 1, %v882
        %v884 = vrot.slane %v844, %v883
        %v885 = vlaneseq
        %v886 = vshrl.u32 %v885, 7
        %v887 = vsub.s32 1, %v886
        %v888 = vrot.slane %v848, %v887
        %v889 = vsel %vm801, %v860, 0.0
        %v890 = vsel %vm802, %v864, 0.0
        %v891 = vsel %vm803, %v868, 0.0
        %v892 = vsel %vm804, %v872, 0.0
        %v893 = vsel %vm805, %v876, 0.0
        %v894 = vsel %vm806, %v880, 0.0
        %v895 = vsel %vm807, %v884, 0.0
        %v896 = vsel %vm808, %v888, 0.0
        %v897 = vsel %vm809, %v860, 0.0
        %v898 = vsel %vm810, %v864, 0.0
        %v899 = vsel %vm811, %v868, 0.0
        %v900 = vsel %vm812, %v872, 0.0
        %v901 = vsel %vm813, %v876, 0.0
        %v902 = vsel %vm814, %v880, 0.0
        %v903 = vsel %vm815, %v884, 0.0
        %v904 = vsel %vm816, %v888, 0.0
        %v905 = vadd.f32 %v721, %v889
        %v906 = vadd.f32 %v722, %v890
        %v907 = vadd.f32 %v723, %v891
        %v908 = vadd.f32 %v724, %v892
        %v909 = vadd.f32 %v725, %v893
        %v910 = vadd.f32 %v726, %v894
        %v911 = vadd.f32 %v727, %v895
        %v912 = vadd.f32 %v728, %v896
        %v913 = vadd.f32 %v729, %v897
        %v914 = vadd.f32 %v730, %v898
        %v915 = vadd.f32 %v731, %v899
        %v916 = vadd.f32 %v732, %v900
        %v917 = vadd.f32 %v733, %v901
        %v918 = vadd.f32 %v734, %v902
        %v919 = vadd.f32 %v735, %v903
        %v920 = vadd.f32 %v736, %v904
        %v921 = vlaneseq
        %v922 = vshrl.u32 %v921, 7
        %v923 = vsub.s32 2, %v922
        %v924 = vrot.slane %v186, %v923
        %v925 = vlaneseq
        %v926 = vshrl.u32 %v925, 7
        %v927 = vsub.s32 6, %v926
        %v928 = vrot.slane %v186, %v927
        %v929 = vlaneseq
        %v930 = vshrl.u32 %v929, 7
        %v931 = vsub.s32 2, %v930
        %v932 = vrot.slane %v187, %v931
        %v933 = vlaneseq
        %v934 = vshrl.u32 %v933, 7
        %v935 = vsub.s32 6, %v934
        %v936 = vrot.slane %v187, %v935
        %v937 = vlaneseq
        %v938 = vshrl.u32 %v937, 7
        %v939 = vsub.s32 2, %v938
        %v940 = vrot.slane %v188, %v939
        %v941 = vlaneseq
        %v942 = vshrl.u32 %v941, 7
        %v943 = vsub.s32 6, %v942
        %v944 = vrot.slane %v188, %v943
        %v945 = vlaneseq
        %v946 = vshrl.u32 %v945, 7
        %v947 = vsub.s32 2, %v946
        %v948 = vrot.slane %v189, %v947
        %v949 = vlaneseq
        %v950 = vshrl.u32 %v949, 7
        %v951 = vsub.s32 6, %v950
        %v952 = vrot.slane %v189, %v951
        %v953 = vlaneseq
        %v954 = vshrl.u32 %v953, 7
        %v955 = vsub.s32 2, %v954
        %v956 = vrot.slane %v924, %v955
        %v957 = vlaneseq
        %v958 = vshrl.u32 %v957, 7
        %v959 = vsub.s32 2, %v958
        %v960 = vrot.slane %v928, %v959
        %v961 = vlaneseq
        %v962 = vshrl.u32 %v961, 7
        %v963 = vsub.s32 2, %v962
        %v964 = vrot.slane %v932, %v963
        %v965 = vlaneseq
        %v966 = vshrl.u32 %v965, 7
        %v967 = vsub.s32 2, %v966
        %v968 = vrot.slane %v936, %v967
        %v969 = vlaneseq
        %v970 = vshrl.u32 %v969, 7
        %v971 = vsub.s32 2, %v970
        %v972 = vrot.slane %v940, %v971
        %v973 = vlaneseq
        %v974 = vshrl.u32 %v973, 7
        %v975 = vsub.s32 2, %v974
        %v976 = vrot.slane %v944, %v975
        %v977 = vlaneseq
        %v978 = vshrl.u32 %v977, 7
        %v979 = vsub.s32 2, %v978
        %v980 = vrot.slane %v948, %v979
        %v981 = vlaneseq
        %v982 = vshrl.u32 %v981, 7
        %v983 = vsub.s32 2, %v982
        %v984 = vrot.slane %v952, %v983
        %vm985 = vcmp.eq.s32.totalorder %v203, %v956
        %vm986 = vcmp.eq.s32.totalorder %v203, %v960
        %vm987 = vcmp.eq.s32.totalorder %v203, %v964
        %vm988 = vcmp.eq.s32.totalorder %v203, %v968
        %vm989 = vcmp.eq.s32.totalorder %v203, %v972
        %vm990 = vcmp.eq.s32.totalorder %v203, %v976
        %vm991 = vcmp.eq.s32.totalorder %v203, %v980
        %vm992 = vcmp.eq.s32.totalorder %v203, %v984
        %vm993 = vcmp.eq.s32.totalorder %v204, %v956
        %vm994 = vcmp.eq.s32.totalorder %v204, %v960
        %vm995 = vcmp.eq.s32.totalorder %v204, %v964
        %vm996 = vcmp.eq.s32.totalorder %v204, %v968
        %vm997 = vcmp.eq.s32.totalorder %v204, %v972
        %vm998 = vcmp.eq.s32.totalorder %v204, %v976
        %vm999 = vcmp.eq.s32.totalorder %v204, %v980
        %vm1000 = vcmp.eq.s32.totalorder %v204, %v984
        %v1001 = vlaneseq
        %v1002 = vshrl.u32 %v1001, 7
        %v1003 = vsub.s32 2, %v1002
        %v1004 = vrot.slane %v285, %v1003
        %v1005 = vlaneseq
        %v1006 = vshrl.u32 %v1005, 7
        %v1007 = vsub.s32 6, %v1006
        %v1008 = vrot.slane %v285, %v1007
        %v1009 = vlaneseq
        %v1010 = vshrl.u32 %v1009, 7
        %v1011 = vsub.s32 2, %v1010
        %v1012 = vrot.slane %v286, %v1011
        %v1013 = vlaneseq
        %v1014 = vshrl.u32 %v1013, 7
        %v1015 = vsub.s32 6, %v1014
        %v1016 = vrot.slane %v286, %v1015
        %v1017 = vlaneseq
        %v1018 = vshrl.u32 %v1017, 7
        %v1019 = vsub.s32 2, %v1018
        %v1020 = vrot.slane %v287, %v1019
        %v1021 = vlaneseq
        %v1022 = vshrl.u32 %v1021, 7
        %v1023 = vsub.s32 6, %v1022
        %v1024 = vrot.slane %v287, %v1023
        %v1025 = vlaneseq
        %v1026 = vshrl.u32 %v1025, 7
        %v1027 = vsub.s32 2, %v1026
        %v1028 = vrot.slane %v288, %v1027
        %v1029 = vlaneseq
        %v1030 = vshrl.u32 %v1029, 7
        %v1031 = vsub.s32 6, %v1030
        %v1032 = vrot.slane %v288, %v1031
        %v1041 = vlaneseq
        %v1042 = vshrl.u32 %v1041, 7
        %v1043 = vsub.s32 2, %v1042
        %v1044 = vrot.slane %v1004, %v1043
        %v1045 = vlaneseq
        %v1046 = vshrl.u32 %v1045, 7
        %v1047 = vsub.s32 2, %v1046
        %v1048 = vrot.slane %v1008, %v1047
        %v1049 = vlaneseq
        %v1050 = vshrl.u32 %v1049, 7
        %v1051 = vsub.s32 2, %v1050
        %v1052 = vrot.slane %v1012, %v1051
        %v1053 = vlaneseq
        %v1054 = vshrl.u32 %v1053, 7
        %v1055 = vsub.s32 2, %v1054
        %v1056 = vrot.slane %v1016, %v1055
        %v1057 = vlaneseq
        %v1058 = vshrl.u32 %v1057, 7
        %v1059 = vsub.s32 2, %v1058
        %v1060 = vrot.slane %v1020, %v1059
        %v1061 = vlaneseq
        %v1062 = vshrl.u32 %v1061, 7
        %v1063 = vsub.s32 2, %v1062
        %v1064 = vrot.slane %v1024, %v1063
        %v1065 = vlaneseq
        %v1066 = vshrl.u32 %v1065, 7
        %v1067 = vsub.s32 2, %v1066
        %v1068 = vrot.slane %v1028, %v1067
        %v1069 = vlaneseq
        %v1070 = vshrl.u32 %v1069, 7
        %v1071 = vsub.s32 2, %v1070
        %v1072 = vrot.slane %v1032, %v1071
        %v1073 = vsel %vm985, %v1044, 0.0
        %v1074 = vsel %vm986, %v1048, 0.0
        %v1075 = vsel %vm987, %v1052, 0.0
        %v1076 = vsel %vm988, %v1056, 0.0
        %v1077 = vsel %vm989, %v1060, 0.0
        %v1078 = vsel %vm990, %v1064, 0.0
        %v1079 = vsel %vm991, %v1068, 0.0
        %v1080 = vsel %vm992, %v1072, 0.0
        %v1081 = vsel %vm993, %v1044, 0.0
        %v1082 = vsel %vm994, %v1048, 0.0
        %v1083 = vsel %vm995, %v1052, 0.0
        %v1084 = vsel %vm996, %v1056, 0.0
        %v1085 = vsel %vm997, %v1060, 0.0
        %v1086 = vsel %vm998, %v1064, 0.0
        %v1087 = vsel %vm999, %v1068, 0.0
        %v1088 = vsel %vm1000, %v1072, 0.0
        %v1089 = vlaneseq
        %v1090 = vshrl.u32 %v1089, 7
        %v1091 = vsub.s32 2, %v1090
        %v1092 = vrot.slane %v195, %v1091
        %v1093 = vlaneseq
        %v1094 = vshrl.u32 %v1093, 7
        %v1095 = vsub.s32 6, %v1094
        %v1096 = vrot.slane %v195, %v1095
        %v1097 = vlaneseq
        %v1098 = vshrl.u32 %v1097, 7
        %v1099 = vsub.s32 2, %v1098
        %v1100 = vrot.slane %v197, %v1099
        %v1101 = vlaneseq
        %v1102 = vshrl.u32 %v1101, 7
        %v1103 = vsub.s32 6, %v1102
        %v1104 = vrot.slane %v197, %v1103
        %v1105 = vlaneseq
        %v1106 = vshrl.u32 %v1105, 7
        %v1107 = vsub.s32 2, %v1106
        %v1108 = vrot.slane %v199, %v1107
        %v1109 = vlaneseq
        %v1110 = vshrl.u32 %v1109, 7
        %v1111 = vsub.s32 6, %v1110
        %v1112 = vrot.slane %v199, %v1111
        %v1113 = vlaneseq
        %v1114 = vshrl.u32 %v1113, 7
        %v1115 = vsub.s32 2, %v1114
        %v1116 = vrot.slane %v201, %v1115
        %v1117 = vlaneseq
        %v1118 = vshrl.u32 %v1117, 7
        %v1119 = vsub.s32 6, %v1118
        %v1120 = vrot.slane %v201, %v1119
        %v1121 = vlaneseq
        %v1122 = vshrl.u32 %v1121, 7
        %v1123 = vsub.s32 2, %v1122
        %v1124 = vrot.slane %v1092, %v1123
        %v1125 = vlaneseq
        %v1126 = vshrl.u32 %v1125, 7
        %v1127 = vsub.s32 2, %v1126
        %v1128 = vrot.slane %v1096, %v1127
        %v1129 = vlaneseq
        %v1130 = vshrl.u32 %v1129, 7
        %v1131 = vsub.s32 2, %v1130
        %v1132 = vrot.slane %v1100, %v1131
        %v1133 = vlaneseq
        %v1134 = vshrl.u32 %v1133, 7
        %v1135 = vsub.s32 2, %v1134
        %v1136 = vrot.slane %v1104, %v1135
        %v1137 = vlaneseq
        %v1138 = vshrl.u32 %v1137, 7
        %v1139 = vsub.s32 2, %v1138
        %v1140 = vrot.slane %v1108, %v1139
        %v1141 = vlaneseq
        %v1142 = vshrl.u32 %v1141, 7
        %v1143 = vsub.s32 2, %v1142
        %v1144 = vrot.slane %v1112, %v1143
        %v1145 = vlaneseq
        %v1146 = vshrl.u32 %v1145, 7
        %v1147 = vsub.s32 2, %v1146
        %v1148 = vrot.slane %v1116, %v1147
        %v1149 = vlaneseq
        %v1150 = vshrl.u32 %v1149, 7
        %v1151 = vsub.s32 2, %v1150
        %v1152 = vrot.slane %v1120, %v1151
        %vm1153 = vcmp.eq.s32.totalorder %v203, %v1124
        %vm1154 = vcmp.eq.s32.totalorder %v203, %v1128
        %vm1155 = vcmp.eq.s32.totalorder %v203, %v1132
        %vm1156 = vcmp.eq.s32.totalorder %v203, %v1136
        %vm1157 = vcmp.eq.s32.totalorder %v203, %v1140
        %vm1158 = vcmp.eq.s32.totalorder %v203, %v1144
        %vm1159 = vcmp.eq.s32.totalorder %v203, %v1148
        %vm1160 = vcmp.eq.s32.totalorder %v203, %v1152
        %vm1161 = vcmp.eq.s32.totalorder %v204, %v1124
        %vm1162 = vcmp.eq.s32.totalorder %v204, %v1128
        %vm1163 = vcmp.eq.s32.totalorder %v204, %v1132
        %vm1164 = vcmp.eq.s32.totalorder %v204, %v1136
        %vm1165 = vcmp.eq.s32.totalorder %v204, %v1140
        %vm1166 = vcmp.eq.s32.totalorder %v204, %v1144
        %vm1167 = vcmp.eq.s32.totalorder %v204, %v1148
        %vm1168 = vcmp.eq.s32.totalorder %v204, %v1152
        %v1169 = vlaneseq
        %v1170 = vshrl.u32 %v1169, 7
        %v1171 = vsub.s32 2, %v1170
        %v1172 = vrot.slane %v182, %v1171
        %v1173 = vlaneseq
        %v1174 = vshrl.u32 %v1173, 7
        %v1175 = vsub.s32 6, %v1174
        %v1176 = vrot.slane %v182, %v1175
        %v1177 = vlaneseq
        %v1178 = vshrl.u32 %v1177, 7
        %v1179 = vsub.s32 2, %v1178
        %v1180 = vrot.slane %v183, %v1179
        %v1181 = vlaneseq
        %v1182 = vshrl.u32 %v1181, 7
        %v1183 = vsub.s32 6, %v1182
        %v1184 = vrot.slane %v183, %v1183
        %v1185 = vlaneseq
        %v1186 = vshrl.u32 %v1185, 7
        %v1187 = vsub.s32 2, %v1186
        %v1188 = vrot.slane %v184, %v1187
        %v1189 = vlaneseq
        %v1190 = vshrl.u32 %v1189, 7
        %v1191 = vsub.s32 6, %v1190
        %v1192 = vrot.slane %v184, %v1191
        %v1193 = vlaneseq
        %v1194 = vshrl.u32 %v1193, 7
        %v1195 = vsub.s32 2, %v1194
        %v1196 = vrot.slane %v185, %v1195
        %v1197 = vlaneseq
        %v1198 = vshrl.u32 %v1197, 7
        %v1199 = vsub.s32 6, %v1198
        %v1200 = vrot.slane %v185, %v1199
        %v1209 = vlaneseq
        %v1210 = vshrl.u32 %v1209, 7
        %v1211 = vsub.s32 2, %v1210
        %v1212 = vrot.slane %v1172, %v1211
        %v1213 = vlaneseq
        %v1214 = vshrl.u32 %v1213, 7
        %v1215 = vsub.s32 2, %v1214
        %v1216 = vrot.slane %v1176, %v1215
        %v1217 = vlaneseq
        %v1218 = vshrl.u32 %v1217, 7
        %v1219 = vsub.s32 2, %v1218
        %v1220 = vrot.slane %v1180, %v1219
        %v1221 = vlaneseq
        %v1222 = vshrl.u32 %v1221, 7
        %v1223 = vsub.s32 2, %v1222
        %v1224 = vrot.slane %v1184, %v1223
        %v1225 = vlaneseq
        %v1226 = vshrl.u32 %v1225, 7
        %v1227 = vsub.s32 2, %v1226
        %v1228 = vrot.slane %v1188, %v1227
        %v1229 = vlaneseq
        %v1230 = vshrl.u32 %v1229, 7
        %v1231 = vsub.s32 2, %v1230
        %v1232 = vrot.slane %v1192, %v1231
        %v1233 = vlaneseq
        %v1234 = vshrl.u32 %v1233, 7
        %v1235 = vsub.s32 2, %v1234
        %v1236 = vrot.slane %v1196, %v1235
        %v1237 = vlaneseq
        %v1238 = vshrl.u32 %v1237, 7
        %v1239 = vsub.s32 2, %v1238
        %v1240 = vrot.slane %v1200, %v1239
        %v1241 = vsel %vm1153, %v1212, 0.0
        %v1242 = vsel %vm1154, %v1216, 0.0
        %v1243 = vsel %vm1155, %v1220, 0.0
        %v1244 = vsel %vm1156, %v1224, 0.0
        %v1245 = vsel %vm1157, %v1228, 0.0
        %v1246 = vsel %vm1158, %v1232, 0.0
        %v1247 = vsel %vm1159, %v1236, 0.0
        %v1248 = vsel %vm1160, %v1240, 0.0
        %v1249 = vsel %vm1161, %v1212, 0.0
        %v1250 = vsel %vm1162, %v1216, 0.0
        %v1251 = vsel %vm1163, %v1220, 0.0
        %v1252 = vsel %vm1164, %v1224, 0.0
        %v1253 = vsel %vm1165, %v1228, 0.0
        %v1254 = vsel %vm1166, %v1232, 0.0
        %v1255 = vsel %vm1167, %v1236, 0.0
        %v1256 = vsel %vm1168, %v1240, 0.0
        %v1257 = vadd.f32 %v1073, %v1241
        %v1258 = vadd.f32 %v1074, %v1242
        %v1259 = vadd.f32 %v1075, %v1243
        %v1260 = vadd.f32 %v1076, %v1244
        %v1261 = vadd.f32 %v1077, %v1245
        %v1262 = vadd.f32 %v1078, %v1246
        %v1263 = vadd.f32 %v1079, %v1247
        %v1264 = vadd.f32 %v1080, %v1248
        %v1265 = vadd.f32 %v1081, %v1249
        %v1266 = vadd.f32 %v1082, %v1250
        %v1267 = vadd.f32 %v1083, %v1251
        %v1268 = vadd.f32 %v1084, %v1252
        %v1269 = vadd.f32 %v1085, %v1253
        %v1270 = vadd.f32 %v1086, %v1254
        %v1271 = vadd.f32 %v1087, %v1255
        %v1272 = vadd.f32 %v1088, %v1256
        %v1273 = vpack.c.bf16 %v561, %v553
        %v1274 = vpack.c.bf16 %v562, %v554
        %v1275 = vpack.c.bf16 %v563, %v555
        %v1276 = vpack.c.bf16 %v564, %v556
        %v1277 = vpack.c.bf16 %v565, %v557
        %v1278 = vpack.c.bf16 %v566, %v558
        %v1279 = vpack.c.bf16 %v567, %v559
        %v1280 = vpack.c.bf16 %v568, %v560
        %v1281 = vpack.c.bf16 %v913, %v905
        %v1282 = vpack.c.bf16 %v914, %v906
        %v1283 = vpack.c.bf16 %v915, %v907
        %v1284 = vpack.c.bf16 %v916, %v908
        %v1285 = vpack.c.bf16 %v917, %v909
        %v1286 = vpack.c.bf16 %v918, %v910
        %v1287 = vpack.c.bf16 %v919, %v911
        %v1288 = vpack.c.bf16 %v920, %v912
        %v1289 = vld [vmem:[%s1] sm:$0xf]
        %v1290 = vld [vmem:[%s1 + $0x4] sm:$0xf]
        %v1291 = vld [vmem:[%s1 + $0x8] sm:$0xf]
        %v1292 = vld [vmem:[%s1 + $0xc] sm:$0xf]
        %v1293 = vld [vmem:[%s1 + $0x10] sm:$0xf]
        %v1294 = vld [vmem:[%s1 + $0x14] sm:$0xf]
        %v1295 = vld [vmem:[%s1 + $0x18] sm:$0xf]
        %v1296 = vld [vmem:[%s1 + $0x1c] sm:$0xf]
        %v1297 = vld [vmem:[%s1 + $0x20] sm:$0xf]
        %v1298 = vld [vmem:[%s1 + $0x24] sm:$0xf]
        %v1299 = vld [vmem:[%s1 + $0x28] sm:$0xf]
        %v1300 = vld [vmem:[%s1 + $0x2c] sm:$0xf]
        %v1301 = vld [vmem:[%s1 + $0x30] sm:$0xf]
        %v1302 = vld [vmem:[%s1 + $0x34] sm:$0xf]
        %v1303 = vld [vmem:[%s1 + $0x38] sm:$0xf]
        %v1304 = vld [vmem:[%s1 + $0x3c] sm:$0xf]
        %v1321 = vunpack.c.l.b16 %v1289
        %v1322 = vunpack.c.l.b16 %v1290
        %v1323 = vunpack.c.l.b16 %v1291
        %v1324 = vunpack.c.l.b16 %v1292
        %v1325 = vunpack.c.l.b16 %v1293
        %v1326 = vunpack.c.l.b16 %v1294
        %v1327 = vunpack.c.l.b16 %v1295
        %v1328 = vunpack.c.l.b16 %v1296
        %v1329 = vunpack.c.l.b16 %v1297
        %v1330 = vunpack.c.l.b16 %v1298
        %v1331 = vunpack.c.l.b16 %v1299
        %v1332 = vunpack.c.l.b16 %v1300
        %v1333 = vunpack.c.l.b16 %v1301
        %v1334 = vunpack.c.l.b16 %v1302
        %v1335 = vunpack.c.l.b16 %v1303
        %v1336 = vunpack.c.l.b16 %v1304
        %v1337 = vpack.c.b16 %v1322, %v1321
        %v1338 = vpack.c.b16 %v1324, %v1323
        %v1339 = vpack.c.b16 %v1326, %v1325
        %v1340 = vpack.c.b16 %v1328, %v1327
        %v1341 = vpack.c.b16 %v1330, %v1329
        %v1342 = vpack.c.b16 %v1332, %v1331
        %v1343 = vpack.c.b16 %v1334, %v1333
        %v1344 = vpack.c.b16 %v1336, %v1335
        %vm1345 = vcmask 130048
        %v1347 = vsel %vm1345, %v1337, 0
        %v1350 = vsel %vm1345, %v1338, 0
        %v1353 = vsel %vm1345, %v1339, 0
        %v1356 = vsel %vm1345, %v1340, 0
        %v1359 = vsel %vm1345, %v1341, 0
        %v1362 = vsel %vm1345, %v1342, 0
        %v1365 = vsel %vm1345, %v1343, 0
        %v1368 = vsel %vm1345, %v1344, 0
        %1370 = vmatprep.subr.bf16.mxu0 0
        %1371 = vmatpush1.bf16.msra.mxu0 0
        %1372 = vmatprep.subr.bf16.mxu0 0
        %1373 = vmatpush1.bf16.msra.mxu0 0
        %1374 = vmatprep.subr.bf16.mxu0 0
        %1375 = vmatpush1.bf16.msra.mxu0 0
        %1376 = vmatprep.subr.bf16.mxu0 0
        %1377 = vmatpush1.bf16.msra.mxu0 0
        %1378 = vmatprep.subr.bf16.mxu0 0
        %1379 = vmatpush1.bf16.msra.mxu0 0
        %1380 = vmatprep.subr.bf16.mxu0 0
        %1381 = vmatpush1.bf16.msra.mxu0 0
        %1382 = vmatprep.subr.bf16.mxu0 0
        %1383 = vmatpush1.bf16.msra.mxu0 0
        %1384 = vmatprep.subr.bf16.mxu0 %v1274
        %1385 = vmatpush1.bf16.msra.mxu0 %v1273
        %1386 = vmatprep.subr.bf16.mxu0 0
        %1387 = vmatpush2.bf16.msra.mxu0 0
        %1388 = vmatprep.subr.bf16.mxu0 0
        %1389 = vmatpush2.bf16.msra.mxu0 0
        %1390 = vmatprep.subr.bf16.mxu0 0
        %1391 = vmatpush2.bf16.msra.mxu0 0
        %1392 = vmatprep.subr.bf16.mxu0 0
        %1393 = vmatpush2.bf16.msra.mxu0 0
        %1394 = vmatprep.subr.bf16.mxu0 0
        %1395 = vmatpush2.bf16.msra.mxu0 0
        %1396 = vmatprep.subr.bf16.mxu0 0
        %1397 = vmatpush2.bf16.msra.mxu0 0
        %1398 = vmatprep.subr.bf16.mxu0 0
        %1399 = vmatpush2.bf16.msra.mxu0 0
        %1400 = vmatprep.subr.bf16.mxu0 0
        %1401 = vmatpush2.bf16.msra.mxu0 0
        %1402 = vmatprep.mubr.bf16.mxu0 0
        %1403 = vmatmul.mubr.bf16.gmra.mxu0 %v1347
        %v1404 = vpop.f32.mrf.mxu0
        %v1405 = vadd.f32 0.0, %v1404
        %v1406 = vpop.f32.mrf.mxu0
        %v1407 = vadd.f32 0.0, %v1406
        %v1408 = vpop.f32.mrf.mxu0
        %v1409 = vadd.f32 0.0, %v1408
        %v1410 = vpop.f32.mrf.mxu0
        %v1411 = vadd.f32 0.0, %v1410
        %1412 = vmatprep.mubr.bf16.mxu0 0
        %1413 = vmatmul.mubr.bf16.gmra.mxu0 %v1350
        %v1414 = vpop.f32.mrf.mxu0
        %v1415 = vadd.f32 0.0, %v1414
        %v1416 = vpop.f32.mrf.mxu0
        %v1417 = vadd.f32 0.0, %v1416
        %v1418 = vpop.f32.mrf.mxu0
        %v1419 = vadd.f32 0.0, %v1418
        %v1420 = vpop.f32.mrf.mxu0
        %v1421 = vadd.f32 0.0, %v1420
        %1422 = vmatprep.mubr.bf16.mxu0 0
        %1423 = vmatmul.mubr.bf16.gmra.mxu0 %v1353
        %v1424 = vpop.f32.mrf.mxu0
        %v1425 = vadd.f32 0.0, %v1424
        %v1426 = vpop.f32.mrf.mxu0
        %v1427 = vadd.f32 0.0, %v1426
        %v1428 = vpop.f32.mrf.mxu0
        %v1429 = vadd.f32 0.0, %v1428
        %v1430 = vpop.f32.mrf.mxu0
        %v1431 = vadd.f32 0.0, %v1430
        %1432 = vmatprep.mubr.bf16.mxu0 0
        %1433 = vmatmul.mubr.bf16.gmra.mxu0 %v1356
        %v1434 = vpop.f32.mrf.mxu0
        %v1435 = vadd.f32 0.0, %v1434
        %v1436 = vpop.f32.mrf.mxu0
        %v1437 = vadd.f32 0.0, %v1436
        %v1438 = vpop.f32.mrf.mxu0
        %v1439 = vadd.f32 0.0, %v1438
        %v1440 = vpop.f32.mrf.mxu0
        %v1441 = vadd.f32 0.0, %v1440
        %1442 = vmatprep.mubr.bf16.mxu0 0
        %1443 = vmatmul.mubr.bf16.gmra.mxu0 %v1359
        %v1444 = vpop.f32.mrf.mxu0
        %v1445 = vadd.f32 0.0, %v1444
        %v1446 = vpop.f32.mrf.mxu0
        %v1447 = vadd.f32 0.0, %v1446
        %v1448 = vpop.f32.mrf.mxu0
        %v1449 = vadd.f32 0.0, %v1448
        %v1450 = vpop.f32.mrf.mxu0
        %v1451 = vadd.f32 0.0, %v1450
        %1452 = vmatprep.mubr.bf16.mxu0 0
        %1453 = vmatmul.mubr.bf16.gmra.mxu0 %v1362
        %v1454 = vpop.f32.mrf.mxu0
        %v1455 = vadd.f32 0.0, %v1454
        %v1456 = vpop.f32.mrf.mxu0
        %v1457 = vadd.f32 0.0, %v1456
        %v1458 = vpop.f32.mrf.mxu0
        %v1459 = vadd.f32 0.0, %v1458
        %v1460 = vpop.f32.mrf.mxu0
        %v1461 = vadd.f32 0.0, %v1460
        %1462 = vmatprep.mubr.bf16.mxu0 0
        %1463 = vmatmul.mubr.bf16.gmra.mxu0 %v1365
        %v1464 = vpop.f32.mrf.mxu0
        %v1465 = vadd.f32 0.0, %v1464
        %v1466 = vpop.f32.mrf.mxu0
        %v1467 = vadd.f32 0.0, %v1466
        %v1468 = vpop.f32.mrf.mxu0
        %v1469 = vadd.f32 0.0, %v1468
        %v1470 = vpop.f32.mrf.mxu0
        %v1471 = vadd.f32 0.0, %v1470
        %1472 = vmatprep.mubr.bf16.mxu0 0
        %1473 = vmatmul.mubr.bf16.gmra.mxu0 %v1368
        %v1474 = vpop.f32.mrf.mxu0
        %v1475 = vadd.f32 0.0, %v1474
        %v1476 = vpop.f32.mrf.mxu0
        %v1477 = vadd.f32 0.0, %v1476
        %v1478 = vpop.f32.mrf.mxu0
        %v1479 = vadd.f32 0.0, %v1478
        %v1480 = vpop.f32.mrf.mxu0
        %v1481 = vadd.f32 0.0, %v1480
        %1482 = vdwg.mxu0
        %1483 = vmatprep.subr.bf16.mxu0 0
        %1484 = vmatpush1.bf16.msra.mxu0 0
        %1485 = vmatprep.subr.bf16.mxu0 0
        %1486 = vmatpush1.bf16.msra.mxu0 0
        %1487 = vmatprep.subr.bf16.mxu0 0
        %1488 = vmatpush1.bf16.msra.mxu0 0
        %1489 = vmatprep.subr.bf16.mxu0 0
        %1490 = vmatpush1.bf16.msra.mxu0 0
        %1491 = vmatprep.subr.bf16.mxu0 0
        %1492 = vmatpush1.bf16.msra.mxu0 0
        %1493 = vmatprep.subr.bf16.mxu0 0
        %1494 = vmatpush1.bf16.msra.mxu0 0
        %1495 = vmatprep.subr.bf16.mxu0 0
        %1496 = vmatpush1.bf16.msra.mxu0 0
        %1497 = vmatprep.subr.bf16.mxu0 %v1276
        %1498 = vmatpush1.bf16.msra.mxu0 %v1275
        %1499 = vmatprep.subr.bf16.mxu0 0
        %1500 = vmatpush2.bf16.msra.mxu0 0
        %1501 = vmatprep.subr.bf16.mxu0 0
        %1502 = vmatpush2.bf16.msra.mxu0 0
        %1503 = vmatprep.subr.bf16.mxu0 0
        %1504 = vmatpush2.bf16.msra.mxu0 0
        %1505 = vmatprep.subr.bf16.mxu0 0
        %1506 = vmatpush2.bf16.msra.mxu0 0
        %1507 = vmatprep.subr.bf16.mxu0 0
        %1508 = vmatpush2.bf16.msra.mxu0 0
        %1509 = vmatprep.subr.bf16.mxu0 0
        %1510 = vmatpush2.bf16.msra.mxu0 0
        %1511 = vmatprep.subr.bf16.mxu0 0
        %1512 = vmatpush2.bf16.msra.mxu0 0
        %1513 = vmatprep.subr.bf16.mxu0 0
        %1514 = vmatpush2.bf16.msra.mxu0 0
        %1515 = vmatprep.mubr.bf16.mxu0 0
        %1516 = vmatmul.mubr.bf16.gmra.mxu0 %v1347
        %v1517 = vpop.f32.mrf.mxu0
        %v1518 = vadd.f32 0.0, %v1517
        %v1519 = vpop.f32.mrf.mxu0
        %v1520 = vadd.f32 0.0, %v1519
        %v1521 = vpop.f32.mrf.mxu0
        %v1522 = vadd.f32 0.0, %v1521
        %v1523 = vpop.f32.mrf.mxu0
        %v1524 = vadd.f32 0.0, %v1523
        %1525 = vmatprep.mubr.bf16.mxu0 0
        %1526 = vmatmul.mubr.bf16.gmra.mxu0 %v1350
        %v1527 = vpop.f32.mrf.mxu0
        %v1528 = vadd.f32 0.0, %v1527
        %v1529 = vpop.f32.mrf.mxu0
        %v1530 = vadd.f32 0.0, %v1529
        %v1531 = vpop.f32.mrf.mxu0
        %v1532 = vadd.f32 0.0, %v1531
        %v1533 = vpop.f32.mrf.mxu0
        %v1534 = vadd.f32 0.0, %v1533
        %1535 = vmatprep.mubr.bf16.mxu0 0
        %1536 = vmatmul.mubr.bf16.gmra.mxu0 %v1353
        %v1537 = vpop.f32.mrf.mxu0
        %v1538 = vadd.f32 0.0, %v1537
        %v1539 = vpop.f32.mrf.mxu0
        %v1540 = vadd.f32 0.0, %v1539
        %v1541 = vpop.f32.mrf.mxu0
        %v1542 = vadd.f32 0.0, %v1541
        %v1543 = vpop.f32.mrf.mxu0
        %v1544 = vadd.f32 0.0, %v1543
        %1545 = vmatprep.mubr.bf16.mxu0 0
        %1546 = vmatmul.mubr.bf16.gmra.mxu0 %v1356
        %v1547 = vpop.f32.mrf.mxu0
        %v1548 = vadd.f32 0.0, %v1547
        %v1549 = vpop.f32.mrf.mxu0
        %v1550 = vadd.f32 0.0, %v1549
        %v1551 = vpop.f32.mrf.mxu0
        %v1552 = vadd.f32 0.0, %v1551
        %v1553 = vpop.f32.mrf.mxu0
        %v1554 = vadd.f32 0.0, %v1553
        %1555 = vmatprep.mubr.bf16.mxu0 0
        %1556 = vmatmul.mubr.bf16.gmra.mxu0 %v1359
        %v1557 = vpop.f32.mrf.mxu0
        %v1558 = vadd.f32 0.0, %v1557
        %v1559 = vpop.f32.mrf.mxu0
        %v1560 = vadd.f32 0.0, %v1559
        %v1561 = vpop.f32.mrf.mxu0
        %v1562 = vadd.f32 0.0, %v1561
        %v1563 = vpop.f32.mrf.mxu0
        %v1564 = vadd.f32 0.0, %v1563
        %1565 = vmatprep.mubr.bf16.mxu0 0
        %1566 = vmatmul.mubr.bf16.gmra.mxu0 %v1362
        %v1567 = vpop.f32.mrf.mxu0
        %v1568 = vadd.f32 0.0, %v1567
        %v1569 = vpop.f32.mrf.mxu0
        %v1570 = vadd.f32 0.0, %v1569
        %v1571 = vpop.f32.mrf.mxu0
        %v1572 = vadd.f32 0.0, %v1571
        %v1573 = vpop.f32.mrf.mxu0
        %v1574 = vadd.f32 0.0, %v1573
        %1575 = vmatprep.mubr.bf16.mxu0 0
        %1576 = vmatmul.mubr.bf16.gmra.mxu0 %v1365
        %v1577 = vpop.f32.mrf.mxu0
        %v1578 = vadd.f32 0.0, %v1577
        %v1579 = vpop.f32.mrf.mxu0
        %v1580 = vadd.f32 0.0, %v1579
        %v1581 = vpop.f32.mrf.mxu0
        %v1582 = vadd.f32 0.0, %v1581
        %v1583 = vpop.f32.mrf.mxu0
        %v1584 = vadd.f32 0.0, %v1583
        %1585 = vmatprep.mubr.bf16.mxu0 0
        %1586 = vmatmul.mubr.bf16.gmra.mxu0 %v1368
        %v1587 = vpop.f32.mrf.mxu0
        %v1588 = vadd.f32 0.0, %v1587
        %v1589 = vpop.f32.mrf.mxu0
        %v1590 = vadd.f32 0.0, %v1589
        %v1591 = vpop.f32.mrf.mxu0
        %v1592 = vadd.f32 0.0, %v1591
        %v1593 = vpop.f32.mrf.mxu0
        %v1594 = vadd.f32 0.0, %v1593
        %1595 = vdwg.mxu0
        %1596 = vmatprep.subr.bf16.mxu0 0
        %1597 = vmatpush1.bf16.msra.mxu0 0
        %1598 = vmatprep.subr.bf16.mxu0 0
        %1599 = vmatpush1.bf16.msra.mxu0 0
        %1600 = vmatprep.subr.bf16.mxu0 0
        %1601 = vmatpush1.bf16.msra.mxu0 0
        %1602 = vmatprep.subr.bf16.mxu0 0
        %1603 = vmatpush1.bf16.msra.mxu0 0
        %1604 = vmatprep.subr.bf16.mxu0 0
        %1605 = vmatpush1.bf16.msra.mxu0 0
        %1606 = vmatprep.subr.bf16.mxu0 0
        %1607 = vmatpush1.bf16.msra.mxu0 0
        %1608 = vmatprep.subr.bf16.mxu0 0
        %1609 = vmatpush1.bf16.msra.mxu0 0
        %1610 = vmatprep.subr.bf16.mxu0 %v1278
        %1611 = vmatpush1.bf16.msra.mxu0 %v1277
        %1612 = vmatprep.subr.bf16.mxu0 0
        %1613 = vmatpush2.bf16.msra.mxu0 0
        %1614 = vmatprep.subr.bf16.mxu0 0
        %1615 = vmatpush2.bf16.msra.mxu0 0
        %1616 = vmatprep.subr.bf16.mxu0 0
        %1617 = vmatpush2.bf16.msra.mxu0 0
        %1618 = vmatprep.subr.bf16.mxu0 0
        %1619 = vmatpush2.bf16.msra.mxu0 0
        %1620 = vmatprep.subr.bf16.mxu0 0
        %1621 = vmatpush2.bf16.msra.mxu0 0
        %1622 = vmatprep.subr.bf16.mxu0 0
        %1623 = vmatpush2.bf16.msra.mxu0 0
        %1624 = vmatprep.subr.bf16.mxu0 0
        %1625 = vmatpush2.bf16.msra.mxu0 0
        %1626 = vmatprep.subr.bf16.mxu0 0
        %1627 = vmatpush2.bf16.msra.mxu0 0
        %1628 = vmatprep.mubr.bf16.mxu0 0
        %1629 = vmatmul.mubr.bf16.gmra.mxu0 %v1347
        %v1630 = vpop.f32.mrf.mxu0
        %v1631 = vadd.f32 0.0, %v1630
        %v1632 = vpop.f32.mrf.mxu0
        %v1633 = vadd.f32 0.0, %v1632
        %v1634 = vpop.f32.mrf.mxu0
        %v1635 = vadd.f32 0.0, %v1634
        %v1636 = vpop.f32.mrf.mxu0
        %v1637 = vadd.f32 0.0, %v1636
        %1638 = vmatprep.mubr.bf16.mxu0 0
        %1639 = vmatmul.mubr.bf16.gmra.mxu0 %v1350
        %v1640 = vpop.f32.mrf.mxu0
        %v1641 = vadd.f32 0.0, %v1640
        %v1642 = vpop.f32.mrf.mxu0
        %v1643 = vadd.f32 0.0, %v1642
        %v1644 = vpop.f32.mrf.mxu0
        %v1645 = vadd.f32 0.0, %v1644
        %v1646 = vpop.f32.mrf.mxu0
        %v1647 = vadd.f32 0.0, %v1646
        %1648 = vmatprep.mubr.bf16.mxu0 0
        %1649 = vmatmul.mubr.bf16.gmra.mxu0 %v1353
        %v1650 = vpop.f32.mrf.mxu0
        %v1651 = vadd.f32 0.0, %v1650
        %v1652 = vpop.f32.mrf.mxu0
        %v1653 = vadd.f32 0.0, %v1652
        %v1654 = vpop.f32.mrf.mxu0
        %v1655 = vadd.f32 0.0, %v1654
        %v1656 = vpop.f32.mrf.mxu0
        %v1657 = vadd.f32 0.0, %v1656
        %1658 = vmatprep.mubr.bf16.mxu0 0
        %1659 = vmatmul.mubr.bf16.gmra.mxu0 %v1356
        %v1660 = vpop.f32.mrf.mxu0
        %v1661 = vadd.f32 0.0, %v1660
        %v1662 = vpop.f32.mrf.mxu0
        %v1663 = vadd.f32 0.0, %v1662
        %v1664 = vpop.f32.mrf.mxu0
        %v1665 = vadd.f32 0.0, %v1664
        %v1666 = vpop.f32.mrf.mxu0
        %v1667 = vadd.f32 0.0, %v1666
        %1668 = vmatprep.mubr.bf16.mxu0 0
        %1669 = vmatmul.mubr.bf16.gmra.mxu0 %v1359
        %v1670 = vpop.f32.mrf.mxu0
        %v1671 = vadd.f32 0.0, %v1670
        %v1672 = vpop.f32.mrf.mxu0
        %v1673 = vadd.f32 0.0, %v1672
        %v1674 = vpop.f32.mrf.mxu0
        %v1675 = vadd.f32 0.0, %v1674
        %v1676 = vpop.f32.mrf.mxu0
        %v1677 = vadd.f32 0.0, %v1676
        %1678 = vmatprep.mubr.bf16.mxu0 0
        %1679 = vmatmul.mubr.bf16.gmra.mxu0 %v1362
        %v1680 = vpop.f32.mrf.mxu0
        %v1681 = vadd.f32 0.0, %v1680
        %v1682 = vpop.f32.mrf.mxu0
        %v1683 = vadd.f32 0.0, %v1682
        %v1684 = vpop.f32.mrf.mxu0
        %v1685 = vadd.f32 0.0, %v1684
        %v1686 = vpop.f32.mrf.mxu0
        %v1687 = vadd.f32 0.0, %v1686
        %1688 = vmatprep.mubr.bf16.mxu0 0
        %1689 = vmatmul.mubr.bf16.gmra.mxu0 %v1365
        %v1690 = vpop.f32.mrf.mxu0
        %v1691 = vadd.f32 0.0, %v1690
        %v1692 = vpop.f32.mrf.mxu0
        %v1693 = vadd.f32 0.0, %v1692
        %v1694 = vpop.f32.mrf.mxu0
        %v1695 = vadd.f32 0.0, %v1694
        %v1696 = vpop.f32.mrf.mxu0
        %v1697 = vadd.f32 0.0, %v1696
        %1698 = vmatprep.mubr.bf16.mxu0 0
        %1699 = vmatmul.mubr.bf16.gmra.mxu0 %v1368
        %v1700 = vpop.f32.mrf.mxu0
        %v1701 = vadd.f32 0.0, %v1700
        %v1702 = vpop.f32.mrf.mxu0
        %v1703 = vadd.f32 0.0, %v1702
        %v1704 = vpop.f32.mrf.mxu0
        %v1705 = vadd.f32 0.0, %v1704
        %v1706 = vpop.f32.mrf.mxu0
        %v1707 = vadd.f32 0.0, %v1706
        %1708 = vdwg.mxu0
        %1709 = vmatprep.subr.bf16.mxu0 0
        %1710 = vmatpush1.bf16.msra.mxu0 0
        %1711 = vmatprep.subr.bf16.mxu0 0
        %1712 = vmatpush1.bf16.msra.mxu0 0
        %1713 = vmatprep.subr.bf16.mxu0 0
        %1714 = vmatpush1.bf16.msra.mxu0 0
        %1715 = vmatprep.subr.bf16.mxu0 0
        %1716 = vmatpush1.bf16.msra.mxu0 0
        %1717 = vmatprep.subr.bf16.mxu0 0
        %1718 = vmatpush1.bf16.msra.mxu0 0
        %1719 = vmatprep.subr.bf16.mxu0 0
        %1720 = vmatpush1.bf16.msra.mxu0 0
        %1721 = vmatprep.subr.bf16.mxu0 0
        %1722 = vmatpush1.bf16.msra.mxu0 0
        %1723 = vmatprep.subr.bf16.mxu0 %v1280
        %1724 = vmatpush1.bf16.msra.mxu0 %v1279
        %1725 = vmatprep.subr.bf16.mxu0 0
        %1726 = vmatpush2.bf16.msra.mxu0 0
        %1727 = vmatprep.subr.bf16.mxu0 0
        %1728 = vmatpush2.bf16.msra.mxu0 0
        %1729 = vmatprep.subr.bf16.mxu0 0
        %1730 = vmatpush2.bf16.msra.mxu0 0
        %1731 = vmatprep.subr.bf16.mxu0 0
        %1732 = vmatpush2.bf16.msra.mxu0 0
        %1733 = vmatprep.subr.bf16.mxu0 0
        %1734 = vmatpush2.bf16.msra.mxu0 0
        %1735 = vmatprep.subr.bf16.mxu0 0
        %1736 = vmatpush2.bf16.msra.mxu0 0
        %1737 = vmatprep.subr.bf16.mxu0 0
        %1738 = vmatpush2.bf16.msra.mxu0 0
        %1739 = vmatprep.subr.bf16.mxu0 0
        %1740 = vmatpush2.bf16.msra.mxu0 0
        %1741 = vmatprep.mubr.bf16.mxu0 0
        %1742 = vmatmul.mubr.bf16.gmra.mxu0 %v1347
        %v1743 = vpop.f32.mrf.mxu0
        %v1744 = vadd.f32 0.0, %v1743
        %v1745 = vpop.f32.mrf.mxu0
        %v1746 = vadd.f32 0.0, %v1745
        %v1747 = vpop.f32.mrf.mxu0
        %v1748 = vadd.f32 0.0, %v1747
        %v1749 = vpop.f32.mrf.mxu0
        %v1750 = vadd.f32 0.0, %v1749
        %1751 = vmatprep.mubr.bf16.mxu0 0
        %1752 = vmatmul.mubr.bf16.gmra.mxu0 %v1350
        %v1753 = vpop.f32.mrf.mxu0
        %v1754 = vadd.f32 0.0, %v1753
        %v1755 = vpop.f32.mrf.mxu0
        %v1756 = vadd.f32 0.0, %v1755
        %v1757 = vpop.f32.mrf.mxu0
        %v1758 = vadd.f32 0.0, %v1757
        %v1759 = vpop.f32.mrf.mxu0
        %v1760 = vadd.f32 0.0, %v1759
        %1761 = vmatprep.mubr.bf16.mxu0 0
        %1762 = vmatmul.mubr.bf16.gmra.mxu0 %v1353
        %v1763 = vpop.f32.mrf.mxu0
        %v1764 = vadd.f32 0.0, %v1763
        %v1765 = vpop.f32.mrf.mxu0
        %v1766 = vadd.f32 0.0, %v1765
        %v1767 = vpop.f32.mrf.mxu0
        %v1768 = vadd.f32 0.0, %v1767
        %v1769 = vpop.f32.mrf.mxu0
        %v1770 = vadd.f32 0.0, %v1769
        %1771 = vmatprep.mubr.bf16.mxu0 0
        %1772 = vmatmul.mubr.bf16.gmra.mxu0 %v1356
        %v1773 = vpop.f32.mrf.mxu0
        %v1774 = vadd.f32 0.0, %v1773
        %v1775 = vpop.f32.mrf.mxu0
        %v1776 = vadd.f32 0.0, %v1775
        %v1777 = vpop.f32.mrf.mxu0
        %v1778 = vadd.f32 0.0, %v1777
        %v1779 = vpop.f32.mrf.mxu0
        %v1780 = vadd.f32 0.0, %v1779
        %1781 = vmatprep.mubr.bf16.mxu0 0
        %1782 = vmatmul.mubr.bf16.gmra.mxu0 %v1359
        %v1783 = vpop.f32.mrf.mxu0
        %v1784 = vadd.f32 0.0, %v1783
        %v1785 = vpop.f32.mrf.mxu0
        %v1786 = vadd.f32 0.0, %v1785
        %v1787 = vpop.f32.mrf.mxu0
        %v1788 = vadd.f32 0.0, %v1787
        %v1789 = vpop.f32.mrf.mxu0
        %v1790 = vadd.f32 0.0, %v1789
        %1791 = vmatprep.mubr.bf16.mxu0 0
        %1792 = vmatmul.mubr.bf16.gmra.mxu0 %v1362
        %v1793 = vpop.f32.mrf.mxu0
        %v1794 = vadd.f32 0.0, %v1793
        %v1795 = vpop.f32.mrf.mxu0
        %v1796 = vadd.f32 0.0, %v1795
        %v1797 = vpop.f32.mrf.mxu0
        %v1798 = vadd.f32 0.0, %v1797
        %v1799 = vpop.f32.mrf.mxu0
        %v1800 = vadd.f32 0.0, %v1799
        %1801 = vmatprep.mubr.bf16.mxu0 0
        %1802 = vmatmul.mubr.bf16.gmra.mxu0 %v1365
        %v1803 = vpop.f32.mrf.mxu0
        %v1804 = vadd.f32 0.0, %v1803
        %v1805 = vpop.f32.mrf.mxu0
        %v1806 = vadd.f32 0.0, %v1805
        %v1807 = vpop.f32.mrf.mxu0
        %v1808 = vadd.f32 0.0, %v1807
        %v1809 = vpop.f32.mrf.mxu0
        %v1810 = vadd.f32 0.0, %v1809
        %1811 = vmatprep.mubr.bf16.mxu0 0
        %1812 = vmatmul.mubr.bf16.gmra.mxu0 %v1368
        %v1813 = vpop.f32.mrf.mxu0
        %v1814 = vadd.f32 0.0, %v1813
        %v1815 = vpop.f32.mrf.mxu0
        %v1816 = vadd.f32 0.0, %v1815
        %v1817 = vpop.f32.mrf.mxu0
        %v1818 = vadd.f32 0.0, %v1817
        %v1819 = vpop.f32.mrf.mxu0
        %v1820 = vadd.f32 0.0, %v1819
        %1821 = vdwg.mxu0
        %v1822 = vmul.f32 %v1405, %v905
        %v1823 = vmul.f32 %v1407, %v906
        %v1824 = vmul.f32 %v1518, %v907
        %v1825 = vmul.f32 %v1520, %v908
        %v1826 = vmul.f32 %v1631, %v909
        %v1827 = vmul.f32 %v1633, %v910
        %v1828 = vmul.f32 %v1744, %v911
        %v1829 = vmul.f32 %v1746, %v912
        %v1830 = vmul.f32 %v1409, %v913
        %v1831 = vmul.f32 %v1411, %v914
        %v1832 = vmul.f32 %v1522, %v915
        %v1833 = vmul.f32 %v1524, %v916
        %v1834 = vmul.f32 %v1635, %v917
        %v1835 = vmul.f32 %v1637, %v918
        %v1836 = vmul.f32 %v1748, %v919
        %v1837 = vmul.f32 %v1750, %v920
        %v1838 = vmul.f32 %v1415, %v905
        %v1839 = vmul.f32 %v1417, %v906
        %v1840 = vmul.f32 %v1528, %v907
        %v1841 = vmul.f32 %v1530, %v908
        %v1842 = vmul.f32 %v1641, %v909
        %v1843 = vmul.f32 %v1643, %v910
        %v1844 = vmul.f32 %v1754, %v911
        %v1845 = vmul.f32 %v1756, %v912
        %v1846 = vmul.f32 %v1419, %v913
        %v1847 = vmul.f32 %v1421, %v914
        %v1848 = vmul.f32 %v1532, %v915
        %v1849 = vmul.f32 %v1534, %v916
        %v1850 = vmul.f32 %v1645, %v917
        %v1851 = vmul.f32 %v1647, %v918
        %v1852 = vmul.f32 %v1758, %v919
        %v1853 = vmul.f32 %v1760, %v920
        %v1854 = vmul.f32 %v1425, %v905
        %v1855 = vmul.f32 %v1427, %v906
        %v1856 = vmul.f32 %v1538, %v907
        %v1857 = vmul.f32 %v1540, %v908
        %v1858 = vmul.f32 %v1651, %v909
        %v1859 = vmul.f32 %v1653, %v910
        %v1860 = vmul.f32 %v1764, %v911
        %v1861 = vmul.f32 %v1766, %v912
        %v1862 = vmul.f32 %v1429, %v913
        %v1863 = vmul.f32 %v1431, %v914
        %v1864 = vmul.f32 %v1542, %v915
        %v1865 = vmul.f32 %v1544, %v916
        %v1866 = vmul.f32 %v1655, %v917
        %v1867 = vmul.f32 %v1657, %v918
        %v1868 = vmul.f32 %v1768, %v919
        %v1869 = vmul.f32 %v1770, %v920
        %v1870 = vmul.f32 %v1435, %v905
        %v1871 = vmul.f32 %v1437, %v906
        %v1872 = vmul.f32 %v1548, %v907
        %v1873 = vmul.f32 %v1550, %v908
        %v1874 = vmul.f32 %v1661, %v909
        %v1875 = vmul.f32 %v1663, %v910
        %v1876 = vmul.f32 %v1774, %v911
        %v1877 = vmul.f32 %v1776, %v912
        %v1878 = vmul.f32 %v1439, %v913
        %v1879 = vmul.f32 %v1441, %v914
        %v1880 = vmul.f32 %v1552, %v915
        %v1881 = vmul.f32 %v1554, %v916
        %v1882 = vmul.f32 %v1665, %v917
        %v1883 = vmul.f32 %v1667, %v918
        %v1884 = vmul.f32 %v1778, %v919
        %v1885 = vmul.f32 %v1780, %v920
        %v1886 = vmul.f32 %v1445, %v905
        %v1887 = vmul.f32 %v1447, %v906
        %v1888 = vmul.f32 %v1558, %v907
        %v1889 = vmul.f32 %v1560, %v908
        %v1890 = vmul.f32 %v1671, %v909
        %v1891 = vmul.f32 %v1673, %v910
        %v1892 = vmul.f32 %v1784, %v911
        %v1893 = vmul.f32 %v1786, %v912
        %v1894 = vmul.f32 %v1449, %v913
        %v1895 = vmul.f32 %v1451, %v914
        %v1896 = vmul.f32 %v1562, %v915
        %v1897 = vmul.f32 %v1564, %v916
        %v1898 = vmul.f32 %v1675, %v917
        %v1899 = vmul.f32 %v1677, %v918
        %v1900 = vmul.f32 %v1788, %v919
        %v1901 = vmul.f32 %v1790, %v920
        %v1902 = vmul.f32 %v1455, %v905
        %v1903 = vmul.f32 %v1457, %v906
        %v1904 = vmul.f32 %v1568, %v907
        %v1905 = vmul.f32 %v1570, %v908
        %v1906 = vmul.f32 %v1681, %v909
        %v1907 = vmul.f32 %v1683, %v910
        %v1908 = vmul.f32 %v1794, %v911
        %v1909 = vmul.f32 %v1796, %v912
        %v1910 = vmul.f32 %v1459, %v913
        %v1911 = vmul.f32 %v1461, %v914
        %v1912 = vmul.f32 %v1572, %v915
        %v1913 = vmul.f32 %v1574, %v916
        %v1914 = vmul.f32 %v1685, %v917
        %v1915 = vmul.f32 %v1687, %v918
        %v1916 = vmul.f32 %v1798, %v919
        %v1917 = vmul.f32 %v1800, %v920
        %v1918 = vmul.f32 %v1465, %v905
        %v1919 = vmul.f32 %v1467, %v906
        %v1920 = vmul.f32 %v1578, %v907
        %v1921 = vmul.f32 %v1580, %v908
        %v1922 = vmul.f32 %v1691, %v909
        %v1923 = vmul.f32 %v1693, %v910
        %v1924 = vmul.f32 %v1804, %v911
        %v1925 = vmul.f32 %v1806, %v912
        %v1926 = vmul.f32 %v1469, %v913
        %v1927 = vmul.f32 %v1471, %v914
        %v1928 = vmul.f32 %v1582, %v915
        %v1929 = vmul.f32 %v1584, %v916
        %v1930 = vmul.f32 %v1695, %v917
        %v1931 = vmul.f32 %v1697, %v918
        %v1932 = vmul.f32 %v1808, %v919
        %v1933 = vmul.f32 %v1810, %v920
        %v1934 = vmul.f32 %v1475, %v905
        %v1935 = vmul.f32 %v1477, %v906
        %v1936 = vmul.f32 %v1588, %v907
        %v1937 = vmul.f32 %v1590, %v908
        %v1938 = vmul.f32 %v1701, %v909
        %v1939 = vmul.f32 %v1703, %v910
        %v1940 = vmul.f32 %v1814, %v911
        %v1941 = vmul.f32 %v1816, %v912
        %v1942 = vmul.f32 %v1479, %v913
        %v1943 = vmul.f32 %v1481, %v914
        %v1944 = vmul.f32 %v1592, %v915
        %v1945 = vmul.f32 %v1594, %v916
        %v1946 = vmul.f32 %v1705, %v917
        %v1947 = vmul.f32 %v1707, %v918
        %v1948 = vmul.f32 %v1818, %v919
        %v1949 = vmul.f32 %v1820, %v920
        %v1950 = vadd.f32 %v1822, %v1830
        %v1951 = vrot.slane %v1950, 4
        %v1952 = vadd.f32 %v1950, %v1951
        %v1953 = vrot.slane %v1952, 2
        %v1954 = vadd.f32 %v1952, %v1953
        %v1955 = vrot.slane %v1954, 1
        %v1956 = vadd.f32 %v1954, %v1955
        %v1957 = vadd.f32 %v1823, %v1831
        %v1958 = vrot.slane %v1957, 4
        %v1959 = vadd.f32 %v1957, %v1958
        %v1960 = vrot.slane %v1959, 2
        %v1961 = vadd.f32 %v1959, %v1960
        %v1962 = vrot.slane %v1961, 1
        %v1963 = vadd.f32 %v1961, %v1962
        %v1964 = vadd.f32 %v1824, %v1832
        %v1965 = vrot.slane %v1964, 4
        %v1966 = vadd.f32 %v1964, %v1965
        %v1967 = vrot.slane %v1966, 2
        %v1968 = vadd.f32 %v1966, %v1967
        %v1969 = vrot.slane %v1968, 1
        %v1970 = vadd.f32 %v1968, %v1969
        %v1971 = vadd.f32 %v1825, %v1833
        %v1972 = vrot.slane %v1971, 4
        %v1973 = vadd.f32 %v1971, %v1972
        %v1974 = vrot.slane %v1973, 2
        %v1975 = vadd.f32 %v1973, %v1974
        %v1976 = vrot.slane %v1975, 1
        %v1977 = vadd.f32 %v1975, %v1976
        %v1978 = vadd.f32 %v1826, %v1834
        %v1979 = vrot.slane %v1978, 4
        %v1980 = vadd.f32 %v1978, %v1979
        %v1981 = vrot.slane %v1980, 2
        %v1982 = vadd.f32 %v1980, %v1981
        %v1983 = vrot.slane %v1982, 1
        %v1984 = vadd.f32 %v1982, %v1983
        %v1985 = vadd.f32 %v1827, %v1835
        %v1986 = vrot.slane %v1985, 4
        %v1987 = vadd.f32 %v1985, %v1986
        %v1988 = vrot.slane %v1987, 2
        %v1989 = vadd.f32 %v1987, %v1988
        %v1990 = vrot.slane %v1989, 1
        %v1991 = vadd.f32 %v1989, %v1990
        %v1992 = vadd.f32 %v1828, %v1836
        %v1993 = vrot.slane %v1992, 4
        %v1994 = vadd.f32 %v1992, %v1993
        %v1995 = vrot.slane %v1994, 2
        %v1996 = vadd.f32 %v1994, %v1995
        %v1997 = vrot.slane %v1996, 1
        %v1998 = vadd.f32 %v1996, %v1997
        %v1999 = vadd.f32 %v1829, %v1837
        %v2000 = vrot.slane %v1999, 4
        %v2001 = vadd.f32 %v1999, %v2000
        %v2002 = vrot.slane %v2001, 2
        %v2003 = vadd.f32 %v2001, %v2002
        %v2004 = vrot.slane %v2003, 1
        %v2005 = vadd.f32 %v2003, %v2004
        %v2006 = vadd.f32 %v1838, %v1846
        %v2007 = vrot.slane %v2006, 4
        %v2008 = vadd.f32 %v2006, %v2007
        %v2009 = vrot.slane %v2008, 2
        %v2010 = vadd.f32 %v2008, %v2009
        %v2011 = vrot.slane %v2010, 1
        %v2012 = vadd.f32 %v2010, %v2011
        %v2013 = vadd.f32 %v1839, %v1847
        %v2014 = vrot.slane %v2013, 4
        %v2015 = vadd.f32 %v2013, %v2014
        %v2016 = vrot.slane %v2015, 2
        %v2017 = vadd.f32 %v2015, %v2016
        %v2018 = vrot.slane %v2017, 1
        %v2019 = vadd.f32 %v2017, %v2018
        %v2020 = vadd.f32 %v1840, %v1848
        %v2021 = vrot.slane %v2020, 4
        %v2022 = vadd.f32 %v2020, %v2021
        %v2023 = vrot.slane %v2022, 2
        %v2024 = vadd.f32 %v2022, %v2023
        %v2025 = vrot.slane %v2024, 1
        %v2026 = vadd.f32 %v2024, %v2025
        %v2027 = vadd.f32 %v1841, %v1849
        %v2028 = vrot.slane %v2027, 4
        %v2029 = vadd.f32 %v2027, %v2028
        %v2030 = vrot.slane %v2029, 2
        %v2031 = vadd.f32 %v2029, %v2030
        %v2032 = vrot.slane %v2031, 1
        %v2033 = vadd.f32 %v2031, %v2032
        %v2034 = vadd.f32 %v1842, %v1850
        %v2035 = vrot.slane %v2034, 4
        %v2036 = vadd.f32 %v2034, %v2035
        %v2037 = vrot.slane %v2036, 2
        %v2038 = vadd.f32 %v2036, %v2037
        %v2039 = vrot.slane %v2038, 1
        %v2040 = vadd.f32 %v2038, %v2039
        %v2041 = vadd.f32 %v1843, %v1851
        %v2042 = vrot.slane %v2041, 4
        %v2043 = vadd.f32 %v2041, %v2042
        %v2044 = vrot.slane %v2043, 2
        %v2045 = vadd.f32 %v2043, %v2044
        %v2046 = vrot.slane %v2045, 1
        %v2047 = vadd.f32 %v2045, %v2046
        %v2048 = vadd.f32 %v1844, %v1852
        %v2049 = vrot.slane %v2048, 4
        %v2050 = vadd.f32 %v2048, %v2049
        %v2051 = vrot.slane %v2050, 2
        %v2052 = vadd.f32 %v2050, %v2051
        %v2053 = vrot.slane %v2052, 1
        %v2054 = vadd.f32 %v2052, %v2053
        %v2055 = vadd.f32 %v1845, %v1853
        %v2056 = vrot.slane %v2055, 4
        %v2057 = vadd.f32 %v2055, %v2056
        %v2058 = vrot.slane %v2057, 2
        %v2059 = vadd.f32 %v2057, %v2058
        %v2060 = vrot.slane %v2059, 1
        %v2061 = vadd.f32 %v2059, %v2060
        %v2062 = vadd.f32 %v1854, %v1862
        %v2063 = vrot.slane %v2062, 4
        %v2064 = vadd.f32 %v2062, %v2063
        %v2065 = vrot.slane %v2064, 2
        %v2066 = vadd.f32 %v2064, %v2065
        %v2067 = vrot.slane %v2066, 1
        %v2068 = vadd.f32 %v2066, %v2067
        %v2069 = vadd.f32 %v1855, %v1863
        %v2070 = vrot.slane %v2069, 4
        %v2071 = vadd.f32 %v2069, %v2070
        %v2072 = vrot.slane %v2071, 2
        %v2073 = vadd.f32 %v2071, %v2072
        %v2074 = vrot.slane %v2073, 1
        %v2075 = vadd.f32 %v2073, %v2074
        %v2076 = vadd.f32 %v1856, %v1864
        %v2077 = vrot.slane %v2076, 4
        %v2078 = vadd.f32 %v2076, %v2077
        %v2079 = vrot.slane %v2078, 2
        %v2080 = vadd.f32 %v2078, %v2079
        %v2081 = vrot.slane %v2080, 1
        %v2082 = vadd.f32 %v2080, %v2081
        %v2083 = vadd.f32 %v1857, %v1865
        %v2084 = vrot.slane %v2083, 4
        %v2085 = vadd.f32 %v2083, %v2084
        %v2086 = vrot.slane %v2085, 2
        %v2087 = vadd.f32 %v2085, %v2086
        %v2088 = vrot.slane %v2087, 1
        %v2089 = vadd.f32 %v2087, %v2088
        %v2090 = vadd.f32 %v1858, %v1866
        %v2091 = vrot.slane %v2090, 4
        %v2092 = vadd.f32 %v2090, %v2091
        %v2093 = vrot.slane %v2092, 2
        %v2094 = vadd.f32 %v2092, %v2093
        %v2095 = vrot.slane %v2094, 1
        %v2096 = vadd.f32 %v2094, %v2095
        %v2097 = vadd.f32 %v1859, %v1867
        %v2098 = vrot.slane %v2097, 4
        %v2099 = vadd.f32 %v2097, %v2098
        %v2100 = vrot.slane %v2099, 2
        %v2101 = vadd.f32 %v2099, %v2100
        %v2102 = vrot.slane %v2101, 1
        %v2103 = vadd.f32 %v2101, %v2102
        %v2104 = vadd.f32 %v1860, %v1868
        %v2105 = vrot.slane %v2104, 4
        %v2106 = vadd.f32 %v2104, %v2105
        %v2107 = vrot.slane %v2106, 2
        %v2108 = vadd.f32 %v2106, %v2107
        %v2109 = vrot.slane %v2108, 1
        %v2110 = vadd.f32 %v2108, %v2109
        %v2111 = vadd.f32 %v1861, %v1869
        %v2112 = vrot.slane %v2111, 4
        %v2113 = vadd.f32 %v2111, %v2112
        %v2114 = vrot.slane %v2113, 2
        %v2115 = vadd.f32 %v2113, %v2114
        %v2116 = vrot.slane %v2115, 1
        %v2117 = vadd.f32 %v2115, %v2116
        %v2118 = vadd.f32 %v1870, %v1878
        %v2119 = vrot.slane %v2118, 4
        %v2120 = vadd.f32 %v2118, %v2119
        %v2121 = vrot.slane %v2120, 2
        %v2122 = vadd.f32 %v2120, %v2121
        %v2123 = vrot.slane %v2122, 1
        %v2124 = vadd.f32 %v2122, %v2123
        %v2125 = vadd.f32 %v1871, %v1879
        %v2126 = vrot.slane %v2125, 4
        %v2127 = vadd.f32 %v2125, %v2126
        %v2128 = vrot.slane %v2127, 2
        %v2129 = vadd.f32 %v2127, %v2128
        %v2130 = vrot.slane %v2129, 1
        %v2131 = vadd.f32 %v2129, %v2130
        %v2132 = vadd.f32 %v1872, %v1880
        %v2133 = vrot.slane %v2132, 4
        %v2134 = vadd.f32 %v2132, %v2133
        %v2135 = vrot.slane %v2134, 2
        %v2136 = vadd.f32 %v2134, %v2135
        %v2137 = vrot.slane %v2136, 1
        %v2138 = vadd.f32 %v2136, %v2137
        %v2139 = vadd.f32 %v1873, %v1881
        %v2140 = vrot.slane %v2139, 4
        %v2141 = vadd.f32 %v2139, %v2140
        %v2142 = vrot.slane %v2141, 2
        %v2143 = vadd.f32 %v2141, %v2142
        %v2144 = vrot.slane %v2143, 1
        %v2145 = vadd.f32 %v2143, %v2144
        %v2146 = vadd.f32 %v1874, %v1882
        %v2147 = vrot.slane %v2146, 4
        %v2148 = vadd.f32 %v2146, %v2147
        %v2149 = vrot.slane %v2148, 2
        %v2150 = vadd.f32 %v2148, %v2149
        %v2151 = vrot.slane %v2150, 1
        %v2152 = vadd.f32 %v2150, %v2151
        %v2153 = vadd.f32 %v1875, %v1883
        %v2154 = vrot.slane %v2153, 4
        %v2155 = vadd.f32 %v2153, %v2154
        %v2156 = vrot.slane %v2155, 2
        %v2157 = vadd.f32 %v2155, %v2156
        %v2158 = vrot.slane %v2157, 1
        %v2159 = vadd.f32 %v2157, %v2158
        %v2160 = vadd.f32 %v1876, %v1884
        %v2161 = vrot.slane %v2160, 4
        %v2162 = vadd.f32 %v2160, %v2161
        %v2163 = vrot.slane %v2162, 2
        %v2164 = vadd.f32 %v2162, %v2163
        %v2165 = vrot.slane %v2164, 1
        %v2166 = vadd.f32 %v2164, %v2165
        %v2167 = vadd.f32 %v1877, %v1885
        %v2168 = vrot.slane %v2167, 4
        %v2169 = vadd.f32 %v2167, %v2168
        %v2170 = vrot.slane %v2169, 2
        %v2171 = vadd.f32 %v2169, %v2170
        %v2172 = vrot.slane %v2171, 1
        %v2173 = vadd.f32 %v2171, %v2172
        %v2174 = vadd.f32 %v1886, %v1894
        %v2175 = vrot.slane %v2174, 4
        %v2176 = vadd.f32 %v2174, %v2175
        %v2177 = vrot.slane %v2176, 2
        %v2178 = vadd.f32 %v2176, %v2177
        %v2179 = vrot.slane %v2178, 1
        %v2180 = vadd.f32 %v2178, %v2179
        %v2181 = vadd.f32 %v1887, %v1895
        %v2182 = vrot.slane %v2181, 4
        %v2183 = vadd.f32 %v2181, %v2182
        %v2184 = vrot.slane %v2183, 2
        %v2185 = vadd.f32 %v2183, %v2184
        %v2186 = vrot.slane %v2185, 1
        %v2187 = vadd.f32 %v2185, %v2186
        %v2188 = vadd.f32 %v1888, %v1896
        %v2189 = vrot.slane %v2188, 4
        %v2190 = vadd.f32 %v2188, %v2189
        %v2191 = vrot.slane %v2190, 2
        %v2192 = vadd.f32 %v2190, %v2191
        %v2193 = vrot.slane %v2192, 1
        %v2194 = vadd.f32 %v2192, %v2193
        %v2195 = vadd.f32 %v1889, %v1897
        %v2196 = vrot.slane %v2195, 4
        %v2197 = vadd.f32 %v2195, %v2196
        %v2198 = vrot.slane %v2197, 2
        %v2199 = vadd.f32 %v2197, %v2198
        %v2200 = vrot.slane %v2199, 1
        %v2201 = vadd.f32 %v2199, %v2200
        %v2202 = vadd.f32 %v1890, %v1898
        %v2203 = vrot.slane %v2202, 4
        %v2204 = vadd.f32 %v2202, %v2203
        %v2205 = vrot.slane %v2204, 2
        %v2206 = vadd.f32 %v2204, %v2205
        %v2207 = vrot.slane %v2206, 1
        %v2208 = vadd.f32 %v2206, %v2207
        %v2209 = vadd.f32 %v1891, %v1899
        %v2210 = vrot.slane %v2209, 4
        %v2211 = vadd.f32 %v2209, %v2210
        %v2212 = vrot.slane %v2211, 2
        %v2213 = vadd.f32 %v2211, %v2212
        %v2214 = vrot.slane %v2213, 1
        %v2215 = vadd.f32 %v2213, %v2214
        %v2216 = vadd.f32 %v1892, %v1900
        %v2217 = vrot.slane %v2216, 4
        %v2218 = vadd.f32 %v2216, %v2217
        %v2219 = vrot.slane %v2218, 2
        %v2220 = vadd.f32 %v2218, %v2219
        %v2221 = vrot.slane %v2220, 1
        %v2222 = vadd.f32 %v2220, %v2221
        %v2223 = vadd.f32 %v1893, %v1901
        %v2224 = vrot.slane %v2223, 4
        %v2225 = vadd.f32 %v2223, %v2224
        %v2226 = vrot.slane %v2225, 2
        %v2227 = vadd.f32 %v2225, %v2226
        %v2228 = vrot.slane %v2227, 1
        %v2229 = vadd.f32 %v2227, %v2228
        %v2230 = vadd.f32 %v1902, %v1910
        %v2231 = vrot.slane %v2230, 4
        %v2232 = vadd.f32 %v2230, %v2231
        %v2233 = vrot.slane %v2232, 2
        %v2234 = vadd.f32 %v2232, %v2233
        %v2235 = vrot.slane %v2234, 1
        %v2236 = vadd.f32 %v2234, %v2235
        %v2237 = vadd.f32 %v1903, %v1911
        %v2238 = vrot.slane %v2237, 4
        %v2239 = vadd.f32 %v2237, %v2238
        %v2240 = vrot.slane %v2239, 2
        %v2241 = vadd.f32 %v2239, %v2240
        %v2242 = vrot.slane %v2241, 1
        %v2243 = vadd.f32 %v2241, %v2242
        %v2244 = vadd.f32 %v1904, %v1912
        %v2245 = vrot.slane %v2244, 4
        %v2246 = vadd.f32 %v2244, %v2245
        %v2247 = vrot.slane %v2246, 2
        %v2248 = vadd.f32 %v2246, %v2247
        %v2249 = vrot.slane %v2248, 1
        %v2250 = vadd.f32 %v2248, %v2249
        %v2251 = vadd.f32 %v1905, %v1913
        %v2252 = vrot.slane %v2251, 4
        %v2253 = vadd.f32 %v2251, %v2252
        %v2254 = vrot.slane %v2253, 2
        %v2255 = vadd.f32 %v2253, %v2254
        %v2256 = vrot.slane %v2255, 1
        %v2257 = vadd.f32 %v2255, %v2256
        %v2258 = vadd.f32 %v1906, %v1914
        %v2259 = vrot.slane %v2258, 4
        %v2260 = vadd.f32 %v2258, %v2259
        %v2261 = vrot.slane %v2260, 2
        %v2262 = vadd.f32 %v2260, %v2261
        %v2263 = vrot.slane %v2262, 1
        %v2264 = vadd.f32 %v2262, %v2263
        %v2265 = vadd.f32 %v1907, %v1915
        %v2266 = vrot.slane %v2265, 4
        %v2267 = vadd.f32 %v2265, %v2266
        %v2268 = vrot.slane %v2267, 2
        %v2269 = vadd.f32 %v2267, %v2268
        %v2270 = vrot.slane %v2269, 1
        %v2271 = vadd.f32 %v2269, %v2270
        %v2272 = vadd.f32 %v1908, %v1916
        %v2273 = vrot.slane %v2272, 4
        %v2274 = vadd.f32 %v2272, %v2273
        %v2275 = vrot.slane %v2274, 2
        %v2276 = vadd.f32 %v2274, %v2275
        %v2277 = vrot.slane %v2276, 1
        %v2278 = vadd.f32 %v2276, %v2277
        %v2279 = vadd.f32 %v1909, %v1917
        %v2280 = vrot.slane %v2279, 4
        %v2281 = vadd.f32 %v2279, %v2280
        %v2282 = vrot.slane %v2281, 2
        %v2283 = vadd.f32 %v2281, %v2282
        %v2284 = vrot.slane %v2283, 1
        %v2285 = vadd.f32 %v2283, %v2284
        %v2286 = vadd.f32 %v1918, %v1926
        %v2287 = vrot.slane %v2286, 4
        %v2288 = vadd.f32 %v2286, %v2287
        %v2289 = vrot.slane %v2288, 2
        %v2290 = vadd.f32 %v2288, %v2289
        %v2291 = vrot.slane %v2290, 1
        %v2292 = vadd.f32 %v2290, %v2291
        %v2293 = vadd.f32 %v1919, %v1927
        %v2294 = vrot.slane %v2293, 4
        %v2295 = vadd.f32 %v2293, %v2294
        %v2296 = vrot.slane %v2295, 2
        %v2297 = vadd.f32 %v2295, %v2296
        %v2298 = vrot.slane %v2297, 1
        %v2299 = vadd.f32 %v2297, %v2298
        %v2300 = vadd.f32 %v1920, %v1928
        %v2301 = vrot.slane %v2300, 4
        %v2302 = vadd.f32 %v2300, %v2301
        %v2303 = vrot.slane %v2302, 2
        %v2304 = vadd.f32 %v2302, %v2303
        %v2305 = vrot.slane %v2304, 1
        %v2306 = vadd.f32 %v2304, %v2305
        %v2307 = vadd.f32 %v1921, %v1929
        %v2308 = vrot.slane %v2307, 4
        %v2309 = vadd.f32 %v2307, %v2308
        %v2310 = vrot.slane %v2309, 2
        %v2311 = vadd.f32 %v2309, %v2310
        %v2312 = vrot.slane %v2311, 1
        %v2313 = vadd.f32 %v2311, %v2312
        %v2314 = vadd.f32 %v1922, %v1930
        %v2315 = vrot.slane %v2314, 4
        %v2316 = vadd.f32 %v2314, %v2315
        %v2317 = vrot.slane %v2316, 2
        %v2318 = vadd.f32 %v2316, %v2317
        %v2319 = vrot.slane %v2318, 1
        %v2320 = vadd.f32 %v2318, %v2319
        %v2321 = vadd.f32 %v1923, %v1931
        %v2322 = vrot.slane %v2321, 4
        %v2323 = vadd.f32 %v2321, %v2322
        %v2324 = vrot.slane %v2323, 2
        %v2325 = vadd.f32 %v2323, %v2324
        %v2326 = vrot.slane %v2325, 1
        %v2327 = vadd.f32 %v2325, %v2326
        %v2328 = vadd.f32 %v1924, %v1932
        %v2329 = vrot.slane %v2328, 4
        %v2330 = vadd.f32 %v2328, %v2329
        %v2331 = vrot.slane %v2330, 2
        %v2332 = vadd.f32 %v2330, %v2331
        %v2333 = vrot.slane %v2332, 1
        %v2334 = vadd.f32 %v2332, %v2333
        %v2335 = vadd.f32 %v1925, %v1933
        %v2336 = vrot.slane %v2335, 4
        %v2337 = vadd.f32 %v2335, %v2336
        %v2338 = vrot.slane %v2337, 2
        %v2339 = vadd.f32 %v2337, %v2338
        %v2340 = vrot.slane %v2339, 1
        %v2341 = vadd.f32 %v2339, %v2340
        %v2342 = vadd.f32 %v1934, %v1942
        %v2343 = vrot.slane %v2342, 4
        %v2344 = vadd.f32 %v2342, %v2343
        %v2345 = vrot.slane %v2344, 2
        %v2346 = vadd.f32 %v2344, %v2345
        %v2347 = vrot.slane %v2346, 1
        %v2348 = vadd.f32 %v2346, %v2347
        %v2349 = vadd.f32 %v1935, %v1943
        %v2350 = vrot.slane %v2349, 4
        %v2351 = vadd.f32 %v2349, %v2350
        %v2352 = vrot.slane %v2351, 2
        %v2353 = vadd.f32 %v2351, %v2352
        %v2354 = vrot.slane %v2353, 1
        %v2355 = vadd.f32 %v2353, %v2354
        %v2356 = vadd.f32 %v1936, %v1944
        %v2357 = vrot.slane %v2356, 4
        %v2358 = vadd.f32 %v2356, %v2357
        %v2359 = vrot.slane %v2358, 2
        %v2360 = vadd.f32 %v2358, %v2359
        %v2361 = vrot.slane %v2360, 1
        %v2362 = vadd.f32 %v2360, %v2361
        %v2363 = vadd.f32 %v1937, %v1945
        %v2364 = vrot.slane %v2363, 4
        %v2365 = vadd.f32 %v2363, %v2364
        %v2366 = vrot.slane %v2365, 2
        %v2367 = vadd.f32 %v2365, %v2366
        %v2368 = vrot.slane %v2367, 1
        %v2369 = vadd.f32 %v2367, %v2368
        %v2370 = vadd.f32 %v1938, %v1946
        %v2371 = vrot.slane %v2370, 4
        %v2372 = vadd.f32 %v2370, %v2371
        %v2373 = vrot.slane %v2372, 2
        %v2374 = vadd.f32 %v2372, %v2373
        %v2375 = vrot.slane %v2374, 1
        %v2376 = vadd.f32 %v2374, %v2375
        %v2377 = vadd.f32 %v1939, %v1947
        %v2378 = vrot.slane %v2377, 4
        %v2379 = vadd.f32 %v2377, %v2378
        %v2380 = vrot.slane %v2379, 2
        %v2381 = vadd.f32 %v2379, %v2380
        %v2382 = vrot.slane %v2381, 1
        %v2383 = vadd.f32 %v2381, %v2382
        %v2384 = vadd.f32 %v1940, %v1948
        %v2385 = vrot.slane %v2384, 4
        %v2386 = vadd.f32 %v2384, %v2385
        %v2387 = vrot.slane %v2386, 2
        %v2388 = vadd.f32 %v2386, %v2387
        %v2389 = vrot.slane %v2388, 1
        %v2390 = vadd.f32 %v2388, %v2389
        %v2391 = vadd.f32 %v1941, %v1949
        %v2392 = vrot.slane %v2391, 4
        %v2393 = vadd.f32 %v2391, %v2392
        %v2394 = vrot.slane %v2393, 2
        %v2395 = vadd.f32 %v2393, %v2394
        %v2396 = vrot.slane %v2395, 1
        %v2397 = vadd.f32 %v2395, %v2396
        %vm2462 = vcmask 1041409
        %v2463 = vsel %vm2462, %v2012, %v1956
        %vm2464 = vcmask 1042434
        %v2465 = vsel %vm2464, %v2068, %v2463
        %vm2466 = vcmask 1043459
        %v2467 = vsel %vm2466, %v2124, %v2465
        %vm2468 = vcmask 1044484
        %v2469 = vsel %vm2468, %v2180, %v2467
        %vm2470 = vcmask 1045509
        %v2471 = vsel %vm2470, %v2236, %v2469
        %vm2472 = vcmask 1046534
        %v2473 = vsel %vm2472, %v2292, %v2471
        %vm2474 = vcmask 1047559
        %v2475 = vsel %vm2474, %v2348, %v2473
        %v2476 = vsel %vm2462, %v2019, %v1963
        %v2477 = vsel %vm2464, %v2075, %v2476
        %v2478 = vsel %vm2466, %v2131, %v2477
        %v2479 = vsel %vm2468, %v2187, %v2478
        %v2480 = vsel %vm2470, %v2243, %v2479
        %v2481 = vsel %vm2472, %v2299, %v2480
        %v2482 = vsel %vm2474, %v2355, %v2481
        %v2483 = vsel %vm2462, %v2026, %v1970
        %v2484 = vsel %vm2464, %v2082, %v2483
        %v2485 = vsel %vm2466, %v2138, %v2484
        %v2486 = vsel %vm2468, %v2194, %v2485
        %v2487 = vsel %vm2470, %v2250, %v2486
        %v2488 = vsel %vm2472, %v2306, %v2487
        %v2489 = vsel %vm2474, %v2362, %v2488
        %v2490 = vsel %vm2462, %v2033, %v1977
        %v2491 = vsel %vm2464, %v2089, %v2490
        %v2492 = vsel %vm2466, %v2145, %v2491
        %v2493 = vsel %vm2468, %v2201, %v2492
        %v2494 = vsel %vm2470, %v2257, %v2493
        %v2495 = vsel %vm2472, %v2313, %v2494
        %v2496 = vsel %vm2474, %v2369, %v2495
        %v2497 = vsel %vm2462, %v2040, %v1984
        %v2498 = vsel %vm2464, %v2096, %v2497
        %v2499 = vsel %vm2466, %v2152, %v2498
        %v2500 = vsel %vm2468, %v2208, %v2499
        %v2501 = vsel %vm2470, %v2264, %v2500
        %v2502 = vsel %vm2472, %v2320, %v2501
        %v2503 = vsel %vm2474, %v2376, %v2502
        %v2504 = vsel %vm2462, %v2047, %v1991
        %v2505 = vsel %vm2464, %v2103, %v2504
        %v2506 = vsel %vm2466, %v2159, %v2505
        %v2507 = vsel %vm2468, %v2215, %v2506
        %v2508 = vsel %vm2470, %v2271, %v2507
        %v2509 = vsel %vm2472, %v2327, %v2508
        %v2510 = vsel %vm2474, %v2383, %v2509
        %v2511 = vsel %vm2462, %v2054, %v1998
        %v2512 = vsel %vm2464, %v2110, %v2511
        %v2513 = vsel %vm2466, %v2166, %v2512
        %v2514 = vsel %vm2468, %v2222, %v2513
        %v2515 = vsel %vm2470, %v2278, %v2514
        %v2516 = vsel %vm2472, %v2334, %v2515
        %v2517 = vsel %vm2474, %v2390, %v2516
        %v2518 = vsel %vm2462, %v2061, %v2005
        %v2519 = vsel %vm2464, %v2117, %v2518
        %v2520 = vsel %vm2466, %v2173, %v2519
        %v2521 = vsel %vm2468, %v2229, %v2520
        %v2522 = vsel %vm2470, %v2285, %v2521
        %v2523 = vsel %vm2472, %v2341, %v2522
        %v2524 = vsel %vm2474, %v2397, %v2523
        %2533 = vst [vmem:[%s137] sm:$0xff] %v2475
        %2534 = vst [vmem:[%s137 + $0x8] sm:$0xff] %v2482
        %2535 = vst [vmem:[%s137 + $0x10] sm:$0xff] %v2489
        %2536 = vst [vmem:[%s137 + $0x18] sm:$0xff] %v2496
        %2537 = vst [vmem:[%s137 + $0x20] sm:$0xff] %v2503
        %2538 = vst [vmem:[%s137 + $0x28] sm:$0xff] %v2510
        %2539 = vst [vmem:[%s137 + $0x30] sm:$0xff] %v2517
        %2540 = vst [vmem:[%s137 + $0x38] sm:$0xff] %v2524
        %s2541 = scalar_lea.vmem %s1, 64
        %v2542 = vld [vmem:[%s2541] sm:$0xf]
        %v2543 = vld [vmem:[%s2541 + $0x4] sm:$0xf]
        %v2544 = vld [vmem:[%s2541 + $0x8] sm:$0xf]
        %v2545 = vld [vmem:[%s2541 + $0xc] sm:$0xf]
        %v2546 = vld [vmem:[%s2541 + $0x10] sm:$0xf]
        %v2547 = vld [vmem:[%s2541 + $0x14] sm:$0xf]
        %v2548 = vld [vmem:[%s2541 + $0x18] sm:$0xf]
        %v2549 = vld [vmem:[%s2541 + $0x1c] sm:$0xf]
        %v2550 = vld [vmem:[%s2541 + $0x20] sm:$0xf]
        %v2551 = vld [vmem:[%s2541 + $0x24] sm:$0xf]
        %v2552 = vld [vmem:[%s2541 + $0x28] sm:$0xf]
        %v2553 = vld [vmem:[%s2541 + $0x2c] sm:$0xf]
        %v2554 = vld [vmem:[%s2541 + $0x30] sm:$0xf]
        %v2555 = vld [vmem:[%s2541 + $0x34] sm:$0xf]
        %v2556 = vld [vmem:[%s2541 + $0x38] sm:$0xf]
        %v2557 = vld [vmem:[%s2541 + $0x3c] sm:$0xf]
        %v2574 = vunpack.c.l.b16 %v2542
        %v2575 = vunpack.c.l.b16 %v2543
        %v2576 = vunpack.c.l.b16 %v2544
        %v2577 = vunpack.c.l.b16 %v2545
        %v2578 = vunpack.c.l.b16 %v2546
        %v2579 = vunpack.c.l.b16 %v2547
        %v2580 = vunpack.c.l.b16 %v2548
        %v2581 = vunpack.c.l.b16 %v2549
        %v2582 = vunpack.c.l.b16 %v2550
        %v2583 = vunpack.c.l.b16 %v2551
        %v2584 = vunpack.c.l.b16 %v2552
        %v2585 = vunpack.c.l.b16 %v2553
        %v2586 = vunpack.c.l.b16 %v2554
        %v2587 = vunpack.c.l.b16 %v2555
        %v2588 = vunpack.c.l.b16 %v2556
        %v2589 = vunpack.c.l.b16 %v2557
        %v2590 = vpack.c.b16 %v2575, %v2574
        %v2591 = vpack.c.b16 %v2577, %v2576
        %v2592 = vpack.c.b16 %v2579, %v2578
        %v2593 = vpack.c.b16 %v2581, %v2580
        %v2594 = vpack.c.b16 %v2583, %v2582
        %v2595 = vpack.c.b16 %v2585, %v2584
        %v2596 = vpack.c.b16 %v2587, %v2586
        %v2597 = vpack.c.b16 %v2589, %v2588
        %v2599 = vsel %vm1345, %v2590, 0
        %v2602 = vsel %vm1345, %v2591, 0
        %v2605 = vsel %vm1345, %v2592, 0
        %v2608 = vsel %vm1345, %v2593, 0
        %v2611 = vsel %vm1345, %v2594, 0
        %v2614 = vsel %vm1345, %v2595, 0
        %v2617 = vsel %vm1345, %v2596, 0
        %v2620 = vsel %vm1345, %v2597, 0
        %2622 = vmatprep.subr.bf16.mxu0 0
        %2623 = vmatpush1.bf16.msra.mxu0 0
        %2624 = vmatprep.subr.bf16.mxu0 0
        %2625 = vmatpush1.bf16.msra.mxu0 0
        %2626 = vmatprep.subr.bf16.mxu0 0
        %2627 = vmatpush1.bf16.msra.mxu0 0
        %2628 = vmatprep.subr.bf16.mxu0 0
        %2629 = vmatpush1.bf16.msra.mxu0 0
        %2630 = vmatprep.subr.bf16.mxu0 0
        %2631 = vmatpush1.bf16.msra.mxu0 0
        %2632 = vmatprep.subr.bf16.mxu0 0
        %2633 = vmatpush1.bf16.msra.mxu0 0
        %2634 = vmatprep.subr.bf16.mxu0 0
        %2635 = vmatpush1.bf16.msra.mxu0 0
        %2636 = vmatprep.subr.bf16.mxu0 %v1282
        %2637 = vmatpush1.bf16.msra.mxu0 %v1281
        %2638 = vmatprep.subr.bf16.mxu0 0
        %2639 = vmatpush2.bf16.msra.mxu0 0
        %2640 = vmatprep.subr.bf16.mxu0 0
        %2641 = vmatpush2.bf16.msra.mxu0 0
        %2642 = vmatprep.subr.bf16.mxu0 0
        %2643 = vmatpush2.bf16.msra.mxu0 0
        %2644 = vmatprep.subr.bf16.mxu0 0
        %2645 = vmatpush2.bf16.msra.mxu0 0
        %2646 = vmatprep.subr.bf16.mxu0 0
        %2647 = vmatpush2.bf16.msra.mxu0 0
        %2648 = vmatprep.subr.bf16.mxu0 0
        %2649 = vmatpush2.bf16.msra.mxu0 0
        %2650 = vmatprep.subr.bf16.mxu0 0
        %2651 = vmatpush2.bf16.msra.mxu0 0
        %2652 = vmatprep.subr.bf16.mxu0 0
        %2653 = vmatpush2.bf16.msra.mxu0 0
        %2654 = vmatprep.mubr.bf16.mxu0 0
        %2655 = vmatmul.mubr.bf16.gmra.mxu0 %v2599
        %v2656 = vpop.f32.mrf.mxu0
        %v2657 = vadd.f32 0.0, %v2656
        %v2658 = vpop.f32.mrf.mxu0
        %v2659 = vadd.f32 0.0, %v2658
        %v2660 = vpop.f32.mrf.mxu0
        %v2661 = vadd.f32 0.0, %v2660
        %v2662 = vpop.f32.mrf.mxu0
        %v2663 = vadd.f32 0.0, %v2662
        %2664 = vmatprep.mubr.bf16.mxu0 0
        %2665 = vmatmul.mubr.bf16.gmra.mxu0 %v2602
        %v2666 = vpop.f32.mrf.mxu0
        %v2667 = vadd.f32 0.0, %v2666
        %v2668 = vpop.f32.mrf.mxu0
        %v2669 = vadd.f32 0.0, %v2668
        %v2670 = vpop.f32.mrf.mxu0
        %v2671 = vadd.f32 0.0, %v2670
        %v2672 = vpop.f32.mrf.mxu0
        %v2673 = vadd.f32 0.0, %v2672
        %2674 = vmatprep.mubr.bf16.mxu0 0
        %2675 = vmatmul.mubr.bf16.gmra.mxu0 %v2605
        %v2676 = vpop.f32.mrf.mxu0
        %v2677 = vadd.f32 0.0, %v2676
        %v2678 = vpop.f32.mrf.mxu0
        %v2679 = vadd.f32 0.0, %v2678
        %v2680 = vpop.f32.mrf.mxu0
        %v2681 = vadd.f32 0.0, %v2680
        %v2682 = vpop.f32.mrf.mxu0
        %v2683 = vadd.f32 0.0, %v2682
        %2684 = vmatprep.mubr.bf16.mxu0 0
        %2685 = vmatmul.mubr.bf16.gmra.mxu0 %v2608
        %v2686 = vpop.f32.mrf.mxu0
        %v2687 = vadd.f32 0.0, %v2686
        %v2688 = vpop.f32.mrf.mxu0
        %v2689 = vadd.f32 0.0, %v2688
        %v2690 = vpop.f32.mrf.mxu0
        %v2691 = vadd.f32 0.0, %v2690
        %v2692 = vpop.f32.mrf.mxu0
        %v2693 = vadd.f32 0.0, %v2692
        %2694 = vmatprep.mubr.bf16.mxu0 0
        %2695 = vmatmul.mubr.bf16.gmra.mxu0 %v2611
        %v2696 = vpop.f32.mrf.mxu0
        %v2697 = vadd.f32 0.0, %v2696
        %v2698 = vpop.f32.mrf.mxu0
        %v2699 = vadd.f32 0.0, %v2698
        %v2700 = vpop.f32.mrf.mxu0
        %v2701 = vadd.f32 0.0, %v2700
        %v2702 = vpop.f32.mrf.mxu0
        %v2703 = vadd.f32 0.0, %v2702
        %2704 = vmatprep.mubr.bf16.mxu0 0
        %2705 = vmatmul.mubr.bf16.gmra.mxu0 %v2614
        %v2706 = vpop.f32.mrf.mxu0
        %v2707 = vadd.f32 0.0, %v2706
        %v2708 = vpop.f32.mrf.mxu0
        %v2709 = vadd.f32 0.0, %v2708
        %v2710 = vpop.f32.mrf.mxu0
        %v2711 = vadd.f32 0.0, %v2710
        %v2712 = vpop.f32.mrf.mxu0
        %v2713 = vadd.f32 0.0, %v2712
        %2714 = vmatprep.mubr.bf16.mxu0 0
        %2715 = vmatmul.mubr.bf16.gmra.mxu0 %v2617
        %v2716 = vpop.f32.mrf.mxu0
        %v2717 = vadd.f32 0.0, %v2716
        %v2718 = vpop.f32.mrf.mxu0
        %v2719 = vadd.f32 0.0, %v2718
        %v2720 = vpop.f32.mrf.mxu0
        %v2721 = vadd.f32 0.0, %v2720
        %v2722 = vpop.f32.mrf.mxu0
        %v2723 = vadd.f32 0.0, %v2722
        %2724 = vmatprep.mubr.bf16.mxu0 0
        %2725 = vmatmul.mubr.bf16.gmra.mxu0 %v2620
        %v2726 = vpop.f32.mrf.mxu0
        %v2727 = vadd.f32 0.0, %v2726
        %v2728 = vpop.f32.mrf.mxu0
        %v2729 = vadd.f32 0.0, %v2728
        %v2730 = vpop.f32.mrf.mxu0
        %v2731 = vadd.f32 0.0, %v2730
        %v2732 = vpop.f32.mrf.mxu0
        %v2733 = vadd.f32 0.0, %v2732
        %2734 = vdwg.mxu0
        %2735 = vmatprep.subr.bf16.mxu0 0
        %2736 = vmatpush1.bf16.msra.mxu0 0
        %2737 = vmatprep.subr.bf16.mxu0 0
        %2738 = vmatpush1.bf16.msra.mxu0 0
        %2739 = vmatprep.subr.bf16.mxu0 0
        %2740 = vmatpush1.bf16.msra.mxu0 0
        %2741 = vmatprep.subr.bf16.mxu0 0
        %2742 = vmatpush1.bf16.msra.mxu0 0
        %2743 = vmatprep.subr.bf16.mxu0 0
        %2744 = vmatpush1.bf16.msra.mxu0 0
        %2745 = vmatprep.subr.bf16.mxu0 0
        %2746 = vmatpush1.bf16.msra.mxu0 0
        %2747 = vmatprep.subr.bf16.mxu0 0
        %2748 = vmatpush1.bf16.msra.mxu0 0
        %2749 = vmatprep.subr.bf16.mxu0 %v1284
        %2750 = vmatpush1.bf16.msra.mxu0 %v1283
        %2751 = vmatprep.subr.bf16.mxu0 0
        %2752 = vmatpush2.bf16.msra.mxu0 0
        %2753 = vmatprep.subr.bf16.mxu0 0
        %2754 = vmatpush2.bf16.msra.mxu0 0
        %2755 = vmatprep.subr.bf16.mxu0 0
        %2756 = vmatpush2.bf16.msra.mxu0 0
        %2757 = vmatprep.subr.bf16.mxu0 0
        %2758 = vmatpush2.bf16.msra.mxu0 0
        %2759 = vmatprep.subr.bf16.mxu0 0
        %2760 = vmatpush2.bf16.msra.mxu0 0
        %2761 = vmatprep.subr.bf16.mxu0 0
        %2762 = vmatpush2.bf16.msra.mxu0 0
        %2763 = vmatprep.subr.bf16.mxu0 0
        %2764 = vmatpush2.bf16.msra.mxu0 0
        %2765 = vmatprep.subr.bf16.mxu0 0
        %2766 = vmatpush2.bf16.msra.mxu0 0
        %2767 = vmatprep.mubr.bf16.mxu0 0
        %2768 = vmatmul.mubr.bf16.gmra.mxu0 %v2599
        %v2769 = vpop.f32.mrf.mxu0
        %v2770 = vadd.f32 0.0, %v2769
        %v2771 = vpop.f32.mrf.mxu0
        %v2772 = vadd.f32 0.0, %v2771
        %v2773 = vpop.f32.mrf.mxu0
        %v2774 = vadd.f32 0.0, %v2773
        %v2775 = vpop.f32.mrf.mxu0
        %v2776 = vadd.f32 0.0, %v2775
        %2777 = vmatprep.mubr.bf16.mxu0 0
        %2778 = vmatmul.mubr.bf16.gmra.mxu0 %v2602
        %v2779 = vpop.f32.mrf.mxu0
        %v2780 = vadd.f32 0.0, %v2779
        %v2781 = vpop.f32.mrf.mxu0
        %v2782 = vadd.f32 0.0, %v2781
        %v2783 = vpop.f32.mrf.mxu0
        %v2784 = vadd.f32 0.0, %v2783
        %v2785 = vpop.f32.mrf.mxu0
        %v2786 = vadd.f32 0.0, %v2785
        %2787 = vmatprep.mubr.bf16.mxu0 0
        %2788 = vmatmul.mubr.bf16.gmra.mxu0 %v2605
        %v2789 = vpop.f32.mrf.mxu0
        %v2790 = vadd.f32 0.0, %v2789
        %v2791 = vpop.f32.mrf.mxu0
        %v2792 = vadd.f32 0.0, %v2791
        %v2793 = vpop.f32.mrf.mxu0
        %v2794 = vadd.f32 0.0, %v2793
        %v2795 = vpop.f32.mrf.mxu0
        %v2796 = vadd.f32 0.0, %v2795
        %2797 = vmatprep.mubr.bf16.mxu0 0
        %2798 = vmatmul.mubr.bf16.gmra.mxu0 %v2608
        %v2799 = vpop.f32.mrf.mxu0
        %v2800 = vadd.f32 0.0, %v2799
        %v2801 = vpop.f32.mrf.mxu0
        %v2802 = vadd.f32 0.0, %v2801
        %v2803 = vpop.f32.mrf.mxu0
        %v2804 = vadd.f32 0.0, %v2803
        %v2805 = vpop.f32.mrf.mxu0
        %v2806 = vadd.f32 0.0, %v2805
        %2807 = vmatprep.mubr.bf16.mxu0 0
        %2808 = vmatmul.mubr.bf16.gmra.mxu0 %v2611
        %v2809 = vpop.f32.mrf.mxu0
        %v2810 = vadd.f32 0.0, %v2809
        %v2811 = vpop.f32.mrf.mxu0
        %v2812 = vadd.f32 0.0, %v2811
        %v2813 = vpop.f32.mrf.mxu0
        %v2814 = vadd.f32 0.0, %v2813
        %v2815 = vpop.f32.mrf.mxu0
        %v2816 = vadd.f32 0.0, %v2815
        %2817 = vmatprep.mubr.bf16.mxu0 0
        %2818 = vmatmul.mubr.bf16.gmra.mxu0 %v2614
        %v2819 = vpop.f32.mrf.mxu0
        %v2820 = vadd.f32 0.0, %v2819
        %v2821 = vpop.f32.mrf.mxu0
        %v2822 = vadd.f32 0.0, %v2821
        %v2823 = vpop.f32.mrf.mxu0
        %v2824 = vadd.f32 0.0, %v2823
        %v2825 = vpop.f32.mrf.mxu0
        %v2826 = vadd.f32 0.0, %v2825
        %2827 = vmatprep.mubr.bf16.mxu0 0
        %2828 = vmatmul.mubr.bf16.gmra.mxu0 %v2617
        %v2829 = vpop.f32.mrf.mxu0
        %v2830 = vadd.f32 0.0, %v2829
        %v2831 = vpop.f32.mrf.mxu0
        %v2832 = vadd.f32 0.0, %v2831
        %v2833 = vpop.f32.mrf.mxu0
        %v2834 = vadd.f32 0.0, %v2833
        %v2835 = vpop.f32.mrf.mxu0
        %v2836 = vadd.f32 0.0, %v2835
        %2837 = vmatprep.mubr.bf16.mxu0 0
        %2838 = vmatmul.mubr.bf16.gmra.mxu0 %v2620
        %v2839 = vpop.f32.mrf.mxu0
        %v2840 = vadd.f32 0.0, %v2839
        %v2841 = vpop.f32.mrf.mxu0
        %v2842 = vadd.f32 0.0, %v2841
        %v2843 = vpop.f32.mrf.mxu0
        %v2844 = vadd.f32 0.0, %v2843
        %v2845 = vpop.f32.mrf.mxu0
        %v2846 = vadd.f32 0.0, %v2845
        %2847 = vdwg.mxu0
        %2848 = vmatprep.subr.bf16.mxu0 0
        %2849 = vmatpush1.bf16.msra.mxu0 0
        %2850 = vmatprep.subr.bf16.mxu0 0
        %2851 = vmatpush1.bf16.msra.mxu0 0
        %2852 = vmatprep.subr.bf16.mxu0 0
        %2853 = vmatpush1.bf16.msra.mxu0 0
        %2854 = vmatprep.subr.bf16.mxu0 0
        %2855 = vmatpush1.bf16.msra.mxu0 0
        %2856 = vmatprep.subr.bf16.mxu0 0
        %2857 = vmatpush1.bf16.msra.mxu0 0
        %2858 = vmatprep.subr.bf16.mxu0 0
        %2859 = vmatpush1.bf16.msra.mxu0 0
        %2860 = vmatprep.subr.bf16.mxu0 0
        %2861 = vmatpush1.bf16.msra.mxu0 0
        %2862 = vmatprep.subr.bf16.mxu0 %v1286
        %2863 = vmatpush1.bf16.msra.mxu0 %v1285
        %2864 = vmatprep.subr.bf16.mxu0 0
        %2865 = vmatpush2.bf16.msra.mxu0 0
        %2866 = vmatprep.subr.bf16.mxu0 0
        %2867 = vmatpush2.bf16.msra.mxu0 0
        %2868 = vmatprep.subr.bf16.mxu0 0
        %2869 = vmatpush2.bf16.msra.mxu0 0
        %2870 = vmatprep.subr.bf16.mxu0 0
        %2871 = vmatpush2.bf16.msra.mxu0 0
        %2872 = vmatprep.subr.bf16.mxu0 0
        %2873 = vmatpush2.bf16.msra.mxu0 0
        %2874 = vmatprep.subr.bf16.mxu0 0
        %2875 = vmatpush2.bf16.msra.mxu0 0
        %2876 = vmatprep.subr.bf16.mxu0 0
        %2877 = vmatpush2.bf16.msra.mxu0 0
        %2878 = vmatprep.subr.bf16.mxu0 0
        %2879 = vmatpush2.bf16.msra.mxu0 0
        %2880 = vmatprep.mubr.bf16.mxu0 0
        %2881 = vmatmul.mubr.bf16.gmra.mxu0 %v2599
        %v2882 = vpop.f32.mrf.mxu0
        %v2883 = vadd.f32 0.0, %v2882
        %v2884 = vpop.f32.mrf.mxu0
        %v2885 = vadd.f32 0.0, %v2884
        %v2886 = vpop.f32.mrf.mxu0
        %v2887 = vadd.f32 0.0, %v2886
        %v2888 = vpop.f32.mrf.mxu0
        %v2889 = vadd.f32 0.0, %v2888
        %2890 = vmatprep.mubr.bf16.mxu0 0
        %2891 = vmatmul.mubr.bf16.gmra.mxu0 %v2602
        %v2892 = vpop.f32.mrf.mxu0
        %v2893 = vadd.f32 0.0, %v2892
        %v2894 = vpop.f32.mrf.mxu0
        %v2895 = vadd.f32 0.0, %v2894
        %v2896 = vpop.f32.mrf.mxu0
        %v2897 = vadd.f32 0.0, %v2896
        %v2898 = vpop.f32.mrf.mxu0
        %v2899 = vadd.f32 0.0, %v2898
        %2900 = vmatprep.mubr.bf16.mxu0 0
        %2901 = vmatmul.mubr.bf16.gmra.mxu0 %v2605
        %v2902 = vpop.f32.mrf.mxu0
        %v2903 = vadd.f32 0.0, %v2902
        %v2904 = vpop.f32.mrf.mxu0
        %v2905 = vadd.f32 0.0, %v2904
        %v2906 = vpop.f32.mrf.mxu0
        %v2907 = vadd.f32 0.0, %v2906
        %v2908 = vpop.f32.mrf.mxu0
        %v2909 = vadd.f32 0.0, %v2908
        %2910 = vmatprep.mubr.bf16.mxu0 0
        %2911 = vmatmul.mubr.bf16.gmra.mxu0 %v2608
        %v2912 = vpop.f32.mrf.mxu0
        %v2913 = vadd.f32 0.0, %v2912
        %v2914 = vpop.f32.mrf.mxu0
        %v2915 = vadd.f32 0.0, %v2914
        %v2916 = vpop.f32.mrf.mxu0
        %v2917 = vadd.f32 0.0, %v2916
        %v2918 = vpop.f32.mrf.mxu0
        %v2919 = vadd.f32 0.0, %v2918
        %2920 = vmatprep.mubr.bf16.mxu0 0
        %2921 = vmatmul.mubr.bf16.gmra.mxu0 %v2611
        %v2922 = vpop.f32.mrf.mxu0
        %v2923 = vadd.f32 0.0, %v2922
        %v2924 = vpop.f32.mrf.mxu0
        %v2925 = vadd.f32 0.0, %v2924
        %v2926 = vpop.f32.mrf.mxu0
        %v2927 = vadd.f32 0.0, %v2926
        %v2928 = vpop.f32.mrf.mxu0
        %v2929 = vadd.f32 0.0, %v2928
        %2930 = vmatprep.mubr.bf16.mxu0 0
        %2931 = vmatmul.mubr.bf16.gmra.mxu0 %v2614
        %v2932 = vpop.f32.mrf.mxu0
        %v2933 = vadd.f32 0.0, %v2932
        %v2934 = vpop.f32.mrf.mxu0
        %v2935 = vadd.f32 0.0, %v2934
        %v2936 = vpop.f32.mrf.mxu0
        %v2937 = vadd.f32 0.0, %v2936
        %v2938 = vpop.f32.mrf.mxu0
        %v2939 = vadd.f32 0.0, %v2938
        %2940 = vmatprep.mubr.bf16.mxu0 0
        %2941 = vmatmul.mubr.bf16.gmra.mxu0 %v2617
        %v2942 = vpop.f32.mrf.mxu0
        %v2943 = vadd.f32 0.0, %v2942
        %v2944 = vpop.f32.mrf.mxu0
        %v2945 = vadd.f32 0.0, %v2944
        %v2946 = vpop.f32.mrf.mxu0
        %v2947 = vadd.f32 0.0, %v2946
        %v2948 = vpop.f32.mrf.mxu0
        %v2949 = vadd.f32 0.0, %v2948
        %2950 = vmatprep.mubr.bf16.mxu0 0
        %2951 = vmatmul.mubr.bf16.gmra.mxu0 %v2620
        %v2952 = vpop.f32.mrf.mxu0
        %v2953 = vadd.f32 0.0, %v2952
        %v2954 = vpop.f32.mrf.mxu0
        %v2955 = vadd.f32 0.0, %v2954
        %v2956 = vpop.f32.mrf.mxu0
        %v2957 = vadd.f32 0.0, %v2956
        %v2958 = vpop.f32.mrf.mxu0
        %v2959 = vadd.f32 0.0, %v2958
        %2960 = vdwg.mxu0
        %2961 = vmatprep.subr.bf16.mxu0 0
        %2962 = vmatpush1.bf16.msra.mxu0 0
        %2963 = vmatprep.subr.bf16.mxu0 0
        %2964 = vmatpush1.bf16.msra.mxu0 0
        %2965 = vmatprep.subr.bf16.mxu0 0
        %2966 = vmatpush1.bf16.msra.mxu0 0
        %2967 = vmatprep.subr.bf16.mxu0 0
        %2968 = vmatpush1.bf16.msra.mxu0 0
        %2969 = vmatprep.subr.bf16.mxu0 0
        %2970 = vmatpush1.bf16.msra.mxu0 0
        %2971 = vmatprep.subr.bf16.mxu0 0
        %2972 = vmatpush1.bf16.msra.mxu0 0
        %2973 = vmatprep.subr.bf16.mxu0 0
        %2974 = vmatpush1.bf16.msra.mxu0 0
        %2975 = vmatprep.subr.bf16.mxu0 %v1288
        %2976 = vmatpush1.bf16.msra.mxu0 %v1287
        %2977 = vmatprep.subr.bf16.mxu0 0
        %2978 = vmatpush2.bf16.msra.mxu0 0
        %2979 = vmatprep.subr.bf16.mxu0 0
        %2980 = vmatpush2.bf16.msra.mxu0 0
        %2981 = vmatprep.subr.bf16.mxu0 0
        %2982 = vmatpush2.bf16.msra.mxu0 0
        %2983 = vmatprep.subr.bf16.mxu0 0
        %2984 = vmatpush2.bf16.msra.mxu0 0
        %2985 = vmatprep.subr.bf16.mxu0 0
        %2986 = vmatpush2.bf16.msra.mxu0 0
        %2987 = vmatprep.subr.bf16.mxu0 0
        %2988 = vmatpush2.bf16.msra.mxu0 0
        %2989 = vmatprep.subr.bf16.mxu0 0
        %2990 = vmatpush2.bf16.msra.mxu0 0
        %2991 = vmatprep.subr.bf16.mxu0 0
        %2992 = vmatpush2.bf16.msra.mxu0 0
        %2993 = vmatprep.mubr.bf16.mxu0 0
        %2994 = vmatmul.mubr.bf16.gmra.mxu0 %v2599
        %v2995 = vpop.f32.mrf.mxu0
        %v2996 = vadd.f32 0.0, %v2995
        %v2997 = vpop.f32.mrf.mxu0
        %v2998 = vadd.f32 0.0, %v2997
        %v2999 = vpop.f32.mrf.mxu0
        %v3000 = vadd.f32 0.0, %v2999
        %v3001 = vpop.f32.mrf.mxu0
        %v3002 = vadd.f32 0.0, %v3001
        %3003 = vmatprep.mubr.bf16.mxu0 0
        %3004 = vmatmul.mubr.bf16.gmra.mxu0 %v2602
        %v3005 = vpop.f32.mrf.mxu0
        %v3006 = vadd.f32 0.0, %v3005
        %v3007 = vpop.f32.mrf.mxu0
        %v3008 = vadd.f32 0.0, %v3007
        %v3009 = vpop.f32.mrf.mxu0
        %v3010 = vadd.f32 0.0, %v3009
        %v3011 = vpop.f32.mrf.mxu0
        %v3012 = vadd.f32 0.0, %v3011
        %3013 = vmatprep.mubr.bf16.mxu0 0
        %3014 = vmatmul.mubr.bf16.gmra.mxu0 %v2605
        %v3015 = vpop.f32.mrf.mxu0
        %v3016 = vadd.f32 0.0, %v3015
        %v3017 = vpop.f32.mrf.mxu0
        %v3018 = vadd.f32 0.0, %v3017
        %v3019 = vpop.f32.mrf.mxu0
        %v3020 = vadd.f32 0.0, %v3019
        %v3021 = vpop.f32.mrf.mxu0
        %v3022 = vadd.f32 0.0, %v3021
        %3023 = vmatprep.mubr.bf16.mxu0 0
        %3024 = vmatmul.mubr.bf16.gmra.mxu0 %v2608
        %v3025 = vpop.f32.mrf.mxu0
        %v3026 = vadd.f32 0.0, %v3025
        %v3027 = vpop.f32.mrf.mxu0
        %v3028 = vadd.f32 0.0, %v3027
        %v3029 = vpop.f32.mrf.mxu0
        %v3030 = vadd.f32 0.0, %v3029
        %v3031 = vpop.f32.mrf.mxu0
        %v3032 = vadd.f32 0.0, %v3031
        %3033 = vmatprep.mubr.bf16.mxu0 0
        %3034 = vmatmul.mubr.bf16.gmra.mxu0 %v2611
        %v3035 = vpop.f32.mrf.mxu0
        %v3036 = vadd.f32 0.0, %v3035
        %v3037 = vpop.f32.mrf.mxu0
        %v3038 = vadd.f32 0.0, %v3037
        %v3039 = vpop.f32.mrf.mxu0
        %v3040 = vadd.f32 0.0, %v3039
        %v3041 = vpop.f32.mrf.mxu0
        %v3042 = vadd.f32 0.0, %v3041
        %3043 = vmatprep.mubr.bf16.mxu0 0
        %3044 = vmatmul.mubr.bf16.gmra.mxu0 %v2614
        %v3045 = vpop.f32.mrf.mxu0
        %v3046 = vadd.f32 0.0, %v3045
        %v3047 = vpop.f32.mrf.mxu0
        %v3048 = vadd.f32 0.0, %v3047
        %v3049 = vpop.f32.mrf.mxu0
        %v3050 = vadd.f32 0.0, %v3049
        %v3051 = vpop.f32.mrf.mxu0
        %v3052 = vadd.f32 0.0, %v3051
        %3053 = vmatprep.mubr.bf16.mxu0 0
        %3054 = vmatmul.mubr.bf16.gmra.mxu0 %v2617
        %v3055 = vpop.f32.mrf.mxu0
        %v3056 = vadd.f32 0.0, %v3055
        %v3057 = vpop.f32.mrf.mxu0
        %v3058 = vadd.f32 0.0, %v3057
        %v3059 = vpop.f32.mrf.mxu0
        %v3060 = vadd.f32 0.0, %v3059
        %v3061 = vpop.f32.mrf.mxu0
        %v3062 = vadd.f32 0.0, %v3061
        %3063 = vmatprep.mubr.bf16.mxu0 0
        %3064 = vmatmul.mubr.bf16.gmra.mxu0 %v2620
        %v3065 = vpop.f32.mrf.mxu0
        %v3066 = vadd.f32 0.0, %v3065
        %v3067 = vpop.f32.mrf.mxu0
        %v3068 = vadd.f32 0.0, %v3067
        %v3069 = vpop.f32.mrf.mxu0
        %v3070 = vadd.f32 0.0, %v3069
        %v3071 = vpop.f32.mrf.mxu0
        %v3072 = vadd.f32 0.0, %v3071
        %3073 = vdwg.mxu0
        %v3074 = vmul.f32 %v2657, %v1257
        %v3075 = vmul.f32 %v2659, %v1258
        %v3076 = vmul.f32 %v2770, %v1259
        %v3077 = vmul.f32 %v2772, %v1260
        %v3078 = vmul.f32 %v2883, %v1261
        %v3079 = vmul.f32 %v2885, %v1262
        %v3080 = vmul.f32 %v2996, %v1263
        %v3081 = vmul.f32 %v2998, %v1264
        %v3082 = vmul.f32 %v2661, %v1265
        %v3083 = vmul.f32 %v2663, %v1266
        %v3084 = vmul.f32 %v2774, %v1267
        %v3085 = vmul.f32 %v2776, %v1268
        %v3086 = vmul.f32 %v2887, %v1269
        %v3087 = vmul.f32 %v2889, %v1270
        %v3088 = vmul.f32 %v3000, %v1271
        %v3089 = vmul.f32 %v3002, %v1272
        %v3090 = vmul.f32 %v2667, %v1257
        %v3091 = vmul.f32 %v2669, %v1258
        %v3092 = vmul.f32 %v2780, %v1259
        %v3093 = vmul.f32 %v2782, %v1260
        %v3094 = vmul.f32 %v2893, %v1261
        %v3095 = vmul.f32 %v2895, %v1262
        %v3096 = vmul.f32 %v3006, %v1263
        %v3097 = vmul.f32 %v3008, %v1264
        %v3098 = vmul.f32 %v2671, %v1265
        %v3099 = vmul.f32 %v2673, %v1266
        %v3100 = vmul.f32 %v2784, %v1267
        %v3101 = vmul.f32 %v2786, %v1268
        %v3102 = vmul.f32 %v2897, %v1269
        %v3103 = vmul.f32 %v2899, %v1270
        %v3104 = vmul.f32 %v3010, %v1271
        %v3105 = vmul.f32 %v3012, %v1272
        %v3106 = vmul.f32 %v2677, %v1257
        %v3107 = vmul.f32 %v2679, %v1258
        %v3108 = vmul.f32 %v2790, %v1259
        %v3109 = vmul.f32 %v2792, %v1260
        %v3110 = vmul.f32 %v2903, %v1261
        %v3111 = vmul.f32 %v2905, %v1262
        %v3112 = vmul.f32 %v3016, %v1263
        %v3113 = vmul.f32 %v3018, %v1264
        %v3114 = vmul.f32 %v2681, %v1265
        %v3115 = vmul.f32 %v2683, %v1266
        %v3116 = vmul.f32 %v2794, %v1267
        %v3117 = vmul.f32 %v2796, %v1268
        %v3118 = vmul.f32 %v2907, %v1269
        %v3119 = vmul.f32 %v2909, %v1270
        %v3120 = vmul.f32 %v3020, %v1271
        %v3121 = vmul.f32 %v3022, %v1272
        %v3122 = vmul.f32 %v2687, %v1257
        %v3123 = vmul.f32 %v2689, %v1258
        %v3124 = vmul.f32 %v2800, %v1259
        %v3125 = vmul.f32 %v2802, %v1260
        %v3126 = vmul.f32 %v2913, %v1261
        %v3127 = vmul.f32 %v2915, %v1262
        %v3128 = vmul.f32 %v3026, %v1263
        %v3129 = vmul.f32 %v3028, %v1264
        %v3130 = vmul.f32 %v2691, %v1265
        %v3131 = vmul.f32 %v2693, %v1266
        %v3132 = vmul.f32 %v2804, %v1267
        %v3133 = vmul.f32 %v2806, %v1268
        %v3134 = vmul.f32 %v2917, %v1269
        %v3135 = vmul.f32 %v2919, %v1270
        %v3136 = vmul.f32 %v3030, %v1271
        %v3137 = vmul.f32 %v3032, %v1272
        %v3138 = vmul.f32 %v2697, %v1257
        %v3139 = vmul.f32 %v2699, %v1258
        %v3140 = vmul.f32 %v2810, %v1259
        %v3141 = vmul.f32 %v2812, %v1260
        %v3142 = vmul.f32 %v2923, %v1261
        %v3143 = vmul.f32 %v2925, %v1262
        %v3144 = vmul.f32 %v3036, %v1263
        %v3145 = vmul.f32 %v3038, %v1264
        %v3146 = vmul.f32 %v2701, %v1265
        %v3147 = vmul.f32 %v2703, %v1266
        %v3148 = vmul.f32 %v2814, %v1267
        %v3149 = vmul.f32 %v2816, %v1268
        %v3150 = vmul.f32 %v2927, %v1269
        %v3151 = vmul.f32 %v2929, %v1270
        %v3152 = vmul.f32 %v3040, %v1271
        %v3153 = vmul.f32 %v3042, %v1272
        %v3154 = vmul.f32 %v2707, %v1257
        %v3155 = vmul.f32 %v2709, %v1258
        %v3156 = vmul.f32 %v2820, %v1259
        %v3157 = vmul.f32 %v2822, %v1260
        %v3158 = vmul.f32 %v2933, %v1261
        %v3159 = vmul.f32 %v2935, %v1262
        %v3160 = vmul.f32 %v3046, %v1263
        %v3161 = vmul.f32 %v3048, %v1264
        %v3162 = vmul.f32 %v2711, %v1265
        %v3163 = vmul.f32 %v2713, %v1266
        %v3164 = vmul.f32 %v2824, %v1267
        %v3165 = vmul.f32 %v2826, %v1268
        %v3166 = vmul.f32 %v2937, %v1269
        %v3167 = vmul.f32 %v2939, %v1270
        %v3168 = vmul.f32 %v3050, %v1271
        %v3169 = vmul.f32 %v3052, %v1272
        %v3170 = vmul.f32 %v2717, %v1257
        %v3171 = vmul.f32 %v2719, %v1258
        %v3172 = vmul.f32 %v2830, %v1259
        %v3173 = vmul.f32 %v2832, %v1260
        %v3174 = vmul.f32 %v2943, %v1261
        %v3175 = vmul.f32 %v2945, %v1262
        %v3176 = vmul.f32 %v3056, %v1263
        %v3177 = vmul.f32 %v3058, %v1264
        %v3178 = vmul.f32 %v2721, %v1265
        %v3179 = vmul.f32 %v2723, %v1266
        %v3180 = vmul.f32 %v2834, %v1267
        %v3181 = vmul.f32 %v2836, %v1268
        %v3182 = vmul.f32 %v2947, %v1269
        %v3183 = vmul.f32 %v2949, %v1270
        %v3184 = vmul.f32 %v3060, %v1271
        %v3185 = vmul.f32 %v3062, %v1272
        %v3186 = vmul.f32 %v2727, %v1257
        %v3187 = vmul.f32 %v2729, %v1258
        %v3188 = vmul.f32 %v2840, %v1259
        %v3189 = vmul.f32 %v2842, %v1260
        %v3190 = vmul.f32 %v2953, %v1261
        %v3191 = vmul.f32 %v2955, %v1262
        %v3192 = vmul.f32 %v3066, %v1263
        %v3193 = vmul.f32 %v3068, %v1264
        %v3194 = vmul.f32 %v2731, %v1265
        %v3195 = vmul.f32 %v2733, %v1266
        %v3196 = vmul.f32 %v2844, %v1267
        %v3197 = vmul.f32 %v2846, %v1268
        %v3198 = vmul.f32 %v2957, %v1269
        %v3199 = vmul.f32 %v2959, %v1270
        %v3200 = vmul.f32 %v3070, %v1271
        %v3201 = vmul.f32 %v3072, %v1272
        %v3202 = vadd.f32 %v3074, %v3082
        %v3203 = vrot.slane %v3202, 4
        %v3204 = vadd.f32 %v3202, %v3203
        %v3205 = vrot.slane %v3204, 2
        %v3206 = vadd.f32 %v3204, %v3205
        %v3207 = vrot.slane %v3206, 1
        %v3208 = vadd.f32 %v3206, %v3207
        %v3209 = vadd.f32 %v3075, %v3083
        %v3210 = vrot.slane %v3209, 4
        %v3211 = vadd.f32 %v3209, %v3210
        %v3212 = vrot.slane %v3211, 2
        %v3213 = vadd.f32 %v3211, %v3212
        %v3214 = vrot.slane %v3213, 1
        %v3215 = vadd.f32 %v3213, %v3214
        %v3216 = vadd.f32 %v3076, %v3084
        %v3217 = vrot.slane %v3216, 4
        %v3218 = vadd.f32 %v3216, %v3217
        %v3219 = vrot.slane %v3218, 2
        %v3220 = vadd.f32 %v3218, %v3219
        %v3221 = vrot.slane %v3220, 1
        %v3222 = vadd.f32 %v3220, %v3221
        %v3223 = vadd.f32 %v3077, %v3085
        %v3224 = vrot.slane %v3223, 4
        %v3225 = vadd.f32 %v3223, %v3224
        %v3226 = vrot.slane %v3225, 2
        %v3227 = vadd.f32 %v3225, %v3226
        %v3228 = vrot.slane %v3227, 1
        %v3229 = vadd.f32 %v3227, %v3228
        %v3230 = vadd.f32 %v3078, %v3086
        %v3231 = vrot.slane %v3230, 4
        %v3232 = vadd.f32 %v3230, %v3231
        %v3233 = vrot.slane %v3232, 2
        %v3234 = vadd.f32 %v3232, %v3233
        %v3235 = vrot.slane %v3234, 1
        %v3236 = vadd.f32 %v3234, %v3235
        %v3237 = vadd.f32 %v3079, %v3087
        %v3238 = vrot.slane %v3237, 4
        %v3239 = vadd.f32 %v3237, %v3238
        %v3240 = vrot.slane %v3239, 2
        %v3241 = vadd.f32 %v3239, %v3240
        %v3242 = vrot.slane %v3241, 1
        %v3243 = vadd.f32 %v3241, %v3242
        %v3244 = vadd.f32 %v3080, %v3088
        %v3245 = vrot.slane %v3244, 4
        %v3246 = vadd.f32 %v3244, %v3245
        %v3247 = vrot.slane %v3246, 2
        %v3248 = vadd.f32 %v3246, %v3247
        %v3249 = vrot.slane %v3248, 1
        %v3250 = vadd.f32 %v3248, %v3249
        %v3251 = vadd.f32 %v3081, %v3089
        %v3252 = vrot.slane %v3251, 4
        %v3253 = vadd.f32 %v3251, %v3252
        %v3254 = vrot.slane %v3253, 2
        %v3255 = vadd.f32 %v3253, %v3254
        %v3256 = vrot.slane %v3255, 1
        %v3257 = vadd.f32 %v3255, %v3256
        %v3258 = vadd.f32 %v3090, %v3098
        %v3259 = vrot.slane %v3258, 4
        %v3260 = vadd.f32 %v3258, %v3259
        %v3261 = vrot.slane %v3260, 2
        %v3262 = vadd.f32 %v3260, %v3261
        %v3263 = vrot.slane %v3262, 1
        %v3264 = vadd.f32 %v3262, %v3263
        %v3265 = vadd.f32 %v3091, %v3099
        %v3266 = vrot.slane %v3265, 4
        %v3267 = vadd.f32 %v3265, %v3266
        %v3268 = vrot.slane %v3267, 2
        %v3269 = vadd.f32 %v3267, %v3268
        %v3270 = vrot.slane %v3269, 1
        %v3271 = vadd.f32 %v3269, %v3270
        %v3272 = vadd.f32 %v3092, %v3100
        %v3273 = vrot.slane %v3272, 4
        %v3274 = vadd.f32 %v3272, %v3273
        %v3275 = vrot.slane %v3274, 2
        %v3276 = vadd.f32 %v3274, %v3275
        %v3277 = vrot.slane %v3276, 1
        %v3278 = vadd.f32 %v3276, %v3277
        %v3279 = vadd.f32 %v3093, %v3101
        %v3280 = vrot.slane %v3279, 4
        %v3281 = vadd.f32 %v3279, %v3280
        %v3282 = vrot.slane %v3281, 2
        %v3283 = vadd.f32 %v3281, %v3282
        %v3284 = vrot.slane %v3283, 1
        %v3285 = vadd.f32 %v3283, %v3284
        %v3286 = vadd.f32 %v3094, %v3102
        %v3287 = vrot.slane %v3286, 4
        %v3288 = vadd.f32 %v3286, %v3287
        %v3289 = vrot.slane %v3288, 2
        %v3290 = vadd.f32 %v3288, %v3289
        %v3291 = vrot.slane %v3290, 1
        %v3292 = vadd.f32 %v3290, %v3291
        %v3293 = vadd.f32 %v3095, %v3103
        %v3294 = vrot.slane %v3293, 4
        %v3295 = vadd.f32 %v3293, %v3294
        %v3296 = vrot.slane %v3295, 2
        %v3297 = vadd.f32 %v3295, %v3296
        %v3298 = vrot.slane %v3297, 1
        %v3299 = vadd.f32 %v3297, %v3298
        %v3300 = vadd.f32 %v3096, %v3104
        %v3301 = vrot.slane %v3300, 4
        %v3302 = vadd.f32 %v3300, %v3301
        %v3303 = vrot.slane %v3302, 2
        %v3304 = vadd.f32 %v3302, %v3303
        %v3305 = vrot.slane %v3304, 1
        %v3306 = vadd.f32 %v3304, %v3305
        %v3307 = vadd.f32 %v3097, %v3105
        %v3308 = vrot.slane %v3307, 4
        %v3309 = vadd.f32 %v3307, %v3308
        %v3310 = vrot.slane %v3309, 2
        %v3311 = vadd.f32 %v3309, %v3310
        %v3312 = vrot.slane %v3311, 1
        %v3313 = vadd.f32 %v3311, %v3312
        %v3314 = vadd.f32 %v3106, %v3114
        %v3315 = vrot.slane %v3314, 4
        %v3316 = vadd.f32 %v3314, %v3315
        %v3317 = vrot.slane %v3316, 2
        %v3318 = vadd.f32 %v3316, %v3317
        %v3319 = vrot.slane %v3318, 1
        %v3320 = vadd.f32 %v3318, %v3319
        %v3321 = vadd.f32 %v3107, %v3115
        %v3322 = vrot.slane %v3321, 4
        %v3323 = vadd.f32 %v3321, %v3322
        %v3324 = vrot.slane %v3323, 2
        %v3325 = vadd.f32 %v3323, %v3324
        %v3326 = vrot.slane %v3325, 1
        %v3327 = vadd.f32 %v3325, %v3326
        %v3328 = vadd.f32 %v3108, %v3116
        %v3329 = vrot.slane %v3328, 4
        %v3330 = vadd.f32 %v3328, %v3329
        %v3331 = vrot.slane %v3330, 2
        %v3332 = vadd.f32 %v3330, %v3331
        %v3333 = vrot.slane %v3332, 1
        %v3334 = vadd.f32 %v3332, %v3333
        %v3335 = vadd.f32 %v3109, %v3117
        %v3336 = vrot.slane %v3335, 4
        %v3337 = vadd.f32 %v3335, %v3336
        %v3338 = vrot.slane %v3337, 2
        %v3339 = vadd.f32 %v3337, %v3338
        %v3340 = vrot.slane %v3339, 1
        %v3341 = vadd.f32 %v3339, %v3340
        %v3342 = vadd.f32 %v3110, %v3118
        %v3343 = vrot.slane %v3342, 4
        %v3344 = vadd.f32 %v3342, %v3343
        %v3345 = vrot.slane %v3344, 2
        %v3346 = vadd.f32 %v3344, %v3345
        %v3347 = vrot.slane %v3346, 1
        %v3348 = vadd.f32 %v3346, %v3347
        %v3349 = vadd.f32 %v3111, %v3119
        %v3350 = vrot.slane %v3349, 4
        %v3351 = vadd.f32 %v3349, %v3350
        %v3352 = vrot.slane %v3351, 2
        %v3353 = vadd.f32 %v3351, %v3352
        %v3354 = vrot.slane %v3353, 1
        %v3355 = vadd.f32 %v3353, %v3354
        %v3356 = vadd.f32 %v3112, %v3120
        %v3357 = vrot.slane %v3356, 4
        %v3358 = vadd.f32 %v3356, %v3357
        %v3359 = vrot.slane %v3358, 2
        %v3360 = vadd.f32 %v3358, %v3359
        %v3361 = vrot.slane %v3360, 1
        %v3362 = vadd.f32 %v3360, %v3361
        %v3363 = vadd.f32 %v3113, %v3121
        %v3364 = vrot.slane %v3363, 4
        %v3365 = vadd.f32 %v3363, %v3364
        %v3366 = vrot.slane %v3365, 2
        %v3367 = vadd.f32 %v3365, %v3366
        %v3368 = vrot.slane %v3367, 1
        %v3369 = vadd.f32 %v3367, %v3368
        %v3370 = vadd.f32 %v3122, %v3130
        %v3371 = vrot.slane %v3370, 4
        %v3372 = vadd.f32 %v3370, %v3371
        %v3373 = vrot.slane %v3372, 2
        %v3374 = vadd.f32 %v3372, %v3373
        %v3375 = vrot.slane %v3374, 1
        %v3376 = vadd.f32 %v3374, %v3375
        %v3377 = vadd.f32 %v3123, %v3131
        %v3378 = vrot.slane %v3377, 4
        %v3379 = vadd.f32 %v3377, %v3378
        %v3380 = vrot.slane %v3379, 2
        %v3381 = vadd.f32 %v3379, %v3380
        %v3382 = vrot.slane %v3381, 1
        %v3383 = vadd.f32 %v3381, %v3382
        %v3384 = vadd.f32 %v3124, %v3132
        %v3385 = vrot.slane %v3384, 4
        %v3386 = vadd.f32 %v3384, %v3385
        %v3387 = vrot.slane %v3386, 2
        %v3388 = vadd.f32 %v3386, %v3387
        %v3389 = vrot.slane %v3388, 1
        %v3390 = vadd.f32 %v3388, %v3389
        %v3391 = vadd.f32 %v3125, %v3133
        %v3392 = vrot.slane %v3391, 4
        %v3393 = vadd.f32 %v3391, %v3392
        %v3394 = vrot.slane %v3393, 2
        %v3395 = vadd.f32 %v3393, %v3394
        %v3396 = vrot.slane %v3395, 1
        %v3397 = vadd.f32 %v3395, %v3396
        %v3398 = vadd.f32 %v3126, %v3134
        %v3399 = vrot.slane %v3398, 4
        %v3400 = vadd.f32 %v3398, %v3399
        %v3401 = vrot.slane %v3400, 2
        %v3402 = vadd.f32 %v3400, %v3401
        %v3403 = vrot.slane %v3402, 1
        %v3404 = vadd.f32 %v3402, %v3403
        %v3405 = vadd.f32 %v3127, %v3135
        %v3406 = vrot.slane %v3405, 4
        %v3407 = vadd.f32 %v3405, %v3406
        %v3408 = vrot.slane %v3407, 2
        %v3409 = vadd.f32 %v3407, %v3408
        %v3410 = vrot.slane %v3409, 1
        %v3411 = vadd.f32 %v3409, %v3410
        %v3412 = vadd.f32 %v3128, %v3136
        %v3413 = vrot.slane %v3412, 4
        %v3414 = vadd.f32 %v3412, %v3413
        %v3415 = vrot.slane %v3414, 2
        %v3416 = vadd.f32 %v3414, %v3415
        %v3417 = vrot.slane %v3416, 1
        %v3418 = vadd.f32 %v3416, %v3417
        %v3419 = vadd.f32 %v3129, %v3137
        %v3420 = vrot.slane %v3419, 4
        %v3421 = vadd.f32 %v3419, %v3420
        %v3422 = vrot.slane %v3421, 2
        %v3423 = vadd.f32 %v3421, %v3422
        %v3424 = vrot.slane %v3423, 1
        %v3425 = vadd.f32 %v3423, %v3424
        %v3426 = vadd.f32 %v3138, %v3146
        %v3427 = vrot.slane %v3426, 4
        %v3428 = vadd.f32 %v3426, %v3427
        %v3429 = vrot.slane %v3428, 2
        %v3430 = vadd.f32 %v3428, %v3429
        %v3431 = vrot.slane %v3430, 1
        %v3432 = vadd.f32 %v3430, %v3431
        %v3433 = vadd.f32 %v3139, %v3147
        %v3434 = vrot.slane %v3433, 4
        %v3435 = vadd.f32 %v3433, %v3434
        %v3436 = vrot.slane %v3435, 2
        %v3437 = vadd.f32 %v3435, %v3436
        %v3438 = vrot.slane %v3437, 1
        %v3439 = vadd.f32 %v3437, %v3438
        %v3440 = vadd.f32 %v3140, %v3148
        %v3441 = vrot.slane %v3440, 4
        %v3442 = vadd.f32 %v3440, %v3441
        %v3443 = vrot.slane %v3442, 2
        %v3444 = vadd.f32 %v3442, %v3443
        %v3445 = vrot.slane %v3444, 1
        %v3446 = vadd.f32 %v3444, %v3445
        %v3447 = vadd.f32 %v3141, %v3149
        %v3448 = vrot.slane %v3447, 4
        %v3449 = vadd.f32 %v3447, %v3448
        %v3450 = vrot.slane %v3449, 2
        %v3451 = vadd.f32 %v3449, %v3450
        %v3452 = vrot.slane %v3451, 1
        %v3453 = vadd.f32 %v3451, %v3452
        %v3454 = vadd.f32 %v3142, %v3150
        %v3455 = vrot.slane %v3454, 4
        %v3456 = vadd.f32 %v3454, %v3455
        %v3457 = vrot.slane %v3456, 2
        %v3458 = vadd.f32 %v3456, %v3457
        %v3459 = vrot.slane %v3458, 1
        %v3460 = vadd.f32 %v3458, %v3459
        %v3461 = vadd.f32 %v3143, %v3151
        %v3462 = vrot.slane %v3461, 4
        %v3463 = vadd.f32 %v3461, %v3462
        %v3464 = vrot.slane %v3463, 2
        %v3465 = vadd.f32 %v3463, %v3464
        %v3466 = vrot.slane %v3465, 1
        %v3467 = vadd.f32 %v3465, %v3466
        %v3468 = vadd.f32 %v3144, %v3152
        %v3469 = vrot.slane %v3468, 4
        %v3470 = vadd.f32 %v3468, %v3469
        %v3471 = vrot.slane %v3470, 2
        %v3472 = vadd.f32 %v3470, %v3471
        %v3473 = vrot.slane %v3472, 1
        %v3474 = vadd.f32 %v3472, %v3473
        %v3475 = vadd.f32 %v3145, %v3153
        %v3476 = vrot.slane %v3475, 4
        %v3477 = vadd.f32 %v3475, %v3476
        %v3478 = vrot.slane %v3477, 2
        %v3479 = vadd.f32 %v3477, %v3478
        %v3480 = vrot.slane %v3479, 1
        %v3481 = vadd.f32 %v3479, %v3480
        %v3482 = vadd.f32 %v3154, %v3162
        %v3483 = vrot.slane %v3482, 4
        %v3484 = vadd.f32 %v3482, %v3483
        %v3485 = vrot.slane %v3484, 2
        %v3486 = vadd.f32 %v3484, %v3485
        %v3487 = vrot.slane %v3486, 1
        %v3488 = vadd.f32 %v3486, %v3487
        %v3489 = vadd.f32 %v3155, %v3163
        %v3490 = vrot.slane %v3489, 4
        %v3491 = vadd.f32 %v3489, %v3490
        %v3492 = vrot.slane %v3491, 2
        %v3493 = vadd.f32 %v3491, %v3492
        %v3494 = vrot.slane %v3493, 1
        %v3495 = vadd.f32 %v3493, %v3494
        %v3496 = vadd.f32 %v3156, %v3164
        %v3497 = vrot.slane %v3496, 4
        %v3498 = vadd.f32 %v3496, %v3497
        %v3499 = vrot.slane %v3498, 2
        %v3500 = vadd.f32 %v3498, %v3499
        %v3501 = vrot.slane %v3500, 1
        %v3502 = vadd.f32 %v3500, %v3501
        %v3503 = vadd.f32 %v3157, %v3165
        %v3504 = vrot.slane %v3503, 4
        %v3505 = vadd.f32 %v3503, %v3504
        %v3506 = vrot.slane %v3505, 2
        %v3507 = vadd.f32 %v3505, %v3506
        %v3508 = vrot.slane %v3507, 1
        %v3509 = vadd.f32 %v3507, %v3508
        %v3510 = vadd.f32 %v3158, %v3166
        %v3511 = vrot.slane %v3510, 4
        %v3512 = vadd.f32 %v3510, %v3511
        %v3513 = vrot.slane %v3512, 2
        %v3514 = vadd.f32 %v3512, %v3513
        %v3515 = vrot.slane %v3514, 1
        %v3516 = vadd.f32 %v3514, %v3515
        %v3517 = vadd.f32 %v3159, %v3167
        %v3518 = vrot.slane %v3517, 4
        %v3519 = vadd.f32 %v3517, %v3518
        %v3520 = vrot.slane %v3519, 2
        %v3521 = vadd.f32 %v3519, %v3520
        %v3522 = vrot.slane %v3521, 1
        %v3523 = vadd.f32 %v3521, %v3522
        %v3524 = vadd.f32 %v3160, %v3168
        %v3525 = vrot.slane %v3524, 4
        %v3526 = vadd.f32 %v3524, %v3525
        %v3527 = vrot.slane %v3526, 2
        %v3528 = vadd.f32 %v3526, %v3527
        %v3529 = vrot.slane %v3528, 1
        %v3530 = vadd.f32 %v3528, %v3529
        %v3531 = vadd.f32 %v3161, %v3169
        %v3532 = vrot.slane %v3531, 4
        %v3533 = vadd.f32 %v3531, %v3532
        %v3534 = vrot.slane %v3533, 2
        %v3535 = vadd.f32 %v3533, %v3534
        %v3536 = vrot.slane %v3535, 1
        %v3537 = vadd.f32 %v3535, %v3536
        %v3538 = vadd.f32 %v3170, %v3178
        %v3539 = vrot.slane %v3538, 4
        %v3540 = vadd.f32 %v3538, %v3539
        %v3541 = vrot.slane %v3540, 2
        %v3542 = vadd.f32 %v3540, %v3541
        %v3543 = vrot.slane %v3542, 1
        %v3544 = vadd.f32 %v3542, %v3543
        %v3545 = vadd.f32 %v3171, %v3179
        %v3546 = vrot.slane %v3545, 4
        %v3547 = vadd.f32 %v3545, %v3546
        %v3548 = vrot.slane %v3547, 2
        %v3549 = vadd.f32 %v3547, %v3548
        %v3550 = vrot.slane %v3549, 1
        %v3551 = vadd.f32 %v3549, %v3550
        %v3552 = vadd.f32 %v3172, %v3180
        %v3553 = vrot.slane %v3552, 4
        %v3554 = vadd.f32 %v3552, %v3553
        %v3555 = vrot.slane %v3554, 2
        %v3556 = vadd.f32 %v3554, %v3555
        %v3557 = vrot.slane %v3556, 1
        %v3558 = vadd.f32 %v3556, %v3557
        %v3559 = vadd.f32 %v3173, %v3181
        %v3560 = vrot.slane %v3559, 4
        %v3561 = vadd.f32 %v3559, %v3560
        %v3562 = vrot.slane %v3561, 2
        %v3563 = vadd.f32 %v3561, %v3562
        %v3564 = vrot.slane %v3563, 1
        %v3565 = vadd.f32 %v3563, %v3564
        %v3566 = vadd.f32 %v3174, %v3182
        %v3567 = vrot.slane %v3566, 4
        %v3568 = vadd.f32 %v3566, %v3567
        %v3569 = vrot.slane %v3568, 2
        %v3570 = vadd.f32 %v3568, %v3569
        %v3571 = vrot.slane %v3570, 1
        %v3572 = vadd.f32 %v3570, %v3571
        %v3573 = vadd.f32 %v3175, %v3183
        %v3574 = vrot.slane %v3573, 4
        %v3575 = vadd.f32 %v3573, %v3574
        %v3576 = vrot.slane %v3575, 2
        %v3577 = vadd.f32 %v3575, %v3576
        %v3578 = vrot.slane %v3577, 1
        %v3579 = vadd.f32 %v3577, %v3578
        %v3580 = vadd.f32 %v3176, %v3184
        %v3581 = vrot.slane %v3580, 4
        %v3582 = vadd.f32 %v3580, %v3581
        %v3583 = vrot.slane %v3582, 2
        %v3584 = vadd.f32 %v3582, %v3583
        %v3585 = vrot.slane %v3584, 1
        %v3586 = vadd.f32 %v3584, %v3585
        %v3587 = vadd.f32 %v3177, %v3185
        %v3588 = vrot.slane %v3587, 4
        %v3589 = vadd.f32 %v3587, %v3588
        %v3590 = vrot.slane %v3589, 2
        %v3591 = vadd.f32 %v3589, %v3590
        %v3592 = vrot.slane %v3591, 1
        %v3593 = vadd.f32 %v3591, %v3592
        %v3594 = vadd.f32 %v3186, %v3194
        %v3595 = vrot.slane %v3594, 4
        %v3596 = vadd.f32 %v3594, %v3595
        %v3597 = vrot.slane %v3596, 2
        %v3598 = vadd.f32 %v3596, %v3597
        %v3599 = vrot.slane %v3598, 1
        %v3600 = vadd.f32 %v3598, %v3599
        %v3601 = vadd.f32 %v3187, %v3195
        %v3602 = vrot.slane %v3601, 4
        %v3603 = vadd.f32 %v3601, %v3602
        %v3604 = vrot.slane %v3603, 2
        %v3605 = vadd.f32 %v3603, %v3604
        %v3606 = vrot.slane %v3605, 1
        %v3607 = vadd.f32 %v3605, %v3606
        %v3608 = vadd.f32 %v3188, %v3196
        %v3609 = vrot.slane %v3608, 4
        %v3610 = vadd.f32 %v3608, %v3609
        %v3611 = vrot.slane %v3610, 2
        %v3612 = vadd.f32 %v3610, %v3611
        %v3613 = vrot.slane %v3612, 1
        %v3614 = vadd.f32 %v3612, %v3613
        %v3615 = vadd.f32 %v3189, %v3197
        %v3616 = vrot.slane %v3615, 4
        %v3617 = vadd.f32 %v3615, %v3616
        %v3618 = vrot.slane %v3617, 2
        %v3619 = vadd.f32 %v3617, %v3618
        %v3620 = vrot.slane %v3619, 1
        %v3621 = vadd.f32 %v3619, %v3620
        %v3622 = vadd.f32 %v3190, %v3198
        %v3623 = vrot.slane %v3622, 4
        %v3624 = vadd.f32 %v3622, %v3623
        %v3625 = vrot.slane %v3624, 2
        %v3626 = vadd.f32 %v3624, %v3625
        %v3627 = vrot.slane %v3626, 1
        %v3628 = vadd.f32 %v3626, %v3627
        %v3629 = vadd.f32 %v3191, %v3199
        %v3630 = vrot.slane %v3629, 4
        %v3631 = vadd.f32 %v3629, %v3630
        %v3632 = vrot.slane %v3631, 2
        %v3633 = vadd.f32 %v3631, %v3632
        %v3634 = vrot.slane %v3633, 1
        %v3635 = vadd.f32 %v3633, %v3634
        %v3636 = vadd.f32 %v3192, %v3200
        %v3637 = vrot.slane %v3636, 4
        %v3638 = vadd.f32 %v3636, %v3637
        %v3639 = vrot.slane %v3638, 2
        %v3640 = vadd.f32 %v3638, %v3639
        %v3641 = vrot.slane %v3640, 1
        %v3642 = vadd.f32 %v3640, %v3641
        %v3643 = vadd.f32 %v3193, %v3201
        %v3644 = vrot.slane %v3643, 4
        %v3645 = vadd.f32 %v3643, %v3644
        %v3646 = vrot.slane %v3645, 2
        %v3647 = vadd.f32 %v3645, %v3646
        %v3648 = vrot.slane %v3647, 1
        %v3649 = vadd.f32 %v3647, %v3648
        %v3714 = vsel %vm2462, %v3264, %v3208
        %v3715 = vsel %vm2464, %v3320, %v3714
        %v3716 = vsel %vm2466, %v3376, %v3715
        %v3717 = vsel %vm2468, %v3432, %v3716
        %v3718 = vsel %vm2470, %v3488, %v3717
        %v3719 = vsel %vm2472, %v3544, %v3718
        %v3720 = vsel %vm2474, %v3600, %v3719
        %v3721 = vsel %vm2462, %v3271, %v3215
        %v3722 = vsel %vm2464, %v3327, %v3721
        %v3723 = vsel %vm2466, %v3383, %v3722
        %v3724 = vsel %vm2468, %v3439, %v3723
        %v3725 = vsel %vm2470, %v3495, %v3724
        %v3726 = vsel %vm2472, %v3551, %v3725
        %v3727 = vsel %vm2474, %v3607, %v3726
        %v3728 = vsel %vm2462, %v3278, %v3222
        %v3729 = vsel %vm2464, %v3334, %v3728
        %v3730 = vsel %vm2466, %v3390, %v3729
        %v3731 = vsel %vm2468, %v3446, %v3730
        %v3732 = vsel %vm2470, %v3502, %v3731
        %v3733 = vsel %vm2472, %v3558, %v3732
        %v3734 = vsel %vm2474, %v3614, %v3733
        %v3735 = vsel %vm2462, %v3285, %v3229
        %v3736 = vsel %vm2464, %v3341, %v3735
        %v3737 = vsel %vm2466, %v3397, %v3736
        %v3738 = vsel %vm2468, %v3453, %v3737
        %v3739 = vsel %vm2470, %v3509, %v3738
        %v3740 = vsel %vm2472, %v3565, %v3739
        %v3741 = vsel %vm2474, %v3621, %v3740
        %v3742 = vsel %vm2462, %v3292, %v3236
        %v3743 = vsel %vm2464, %v3348, %v3742
        %v3744 = vsel %vm2466, %v3404, %v3743
        %v3745 = vsel %vm2468, %v3460, %v3744
        %v3746 = vsel %vm2470, %v3516, %v3745
        %v3747 = vsel %vm2472, %v3572, %v3746
        %v3748 = vsel %vm2474, %v3628, %v3747
        %v3749 = vsel %vm2462, %v3299, %v3243
        %v3750 = vsel %vm2464, %v3355, %v3749
        %v3751 = vsel %vm2466, %v3411, %v3750
        %v3752 = vsel %vm2468, %v3467, %v3751
        %v3753 = vsel %vm2470, %v3523, %v3752
        %v3754 = vsel %vm2472, %v3579, %v3753
        %v3755 = vsel %vm2474, %v3635, %v3754
        %v3756 = vsel %vm2462, %v3306, %v3250
        %v3757 = vsel %vm2464, %v3362, %v3756
        %v3758 = vsel %vm2466, %v3418, %v3757
        %v3759 = vsel %vm2468, %v3474, %v3758
        %v3760 = vsel %vm2470, %v3530, %v3759
        %v3761 = vsel %vm2472, %v3586, %v3760
        %v3762 = vsel %vm2474, %v3642, %v3761
        %v3763 = vsel %vm2462, %v3313, %v3257
        %v3764 = vsel %vm2464, %v3369, %v3763
        %v3765 = vsel %vm2466, %v3425, %v3764
        %v3766 = vsel %vm2468, %v3481, %v3765
        %v3767 = vsel %vm2470, %v3537, %v3766
        %v3768 = vsel %vm2472, %v3593, %v3767
        %v3769 = vsel %vm2474, %v3649, %v3768
        %3778 = vst [vmem:[%s137 + $0x40] sm:$0xff] %v3720
        %3779 = vst [vmem:[%s137 + $0x48] sm:$0xff] %v3727
        %3780 = vst [vmem:[%s137 + $0x50] sm:$0xff] %v3734
        %3781 = vst [vmem:[%s137 + $0x58] sm:$0xff] %v3741
        %3782 = vst [vmem:[%s137 + $0x60] sm:$0xff] %v3748
        %3783 = vst [vmem:[%s137 + $0x68] sm:$0xff] %v3755
        %3784 = vst [vmem:[%s137 + $0x70] sm:$0xff] %v3762
        %3785 = vst [vmem:[%s137 + $0x78] sm:$0xff] %v3769
        %s3786 = scalar_lea.vmem %s1, 128
        %v3787 = vld [vmem:[%s3786] sm:$0xf]
        %v3788 = vld [vmem:[%s3786 + $0x4] sm:$0xf]
        %v3789 = vld [vmem:[%s3786 + $0x8] sm:$0xf]
        %v3790 = vld [vmem:[%s3786 + $0xc] sm:$0xf]
        %v3791 = vld [vmem:[%s3786 + $0x10] sm:$0xf]
        %v3792 = vld [vmem:[%s3786 + $0x14] sm:$0xf]
        %v3793 = vld [vmem:[%s3786 + $0x18] sm:$0xf]
        %v3794 = vld [vmem:[%s3786 + $0x1c] sm:$0xf]
        %v3795 = vld [vmem:[%s3786 + $0x20] sm:$0xf]
        %v3796 = vld [vmem:[%s3786 + $0x24] sm:$0xf]
        %v3797 = vld [vmem:[%s3786 + $0x28] sm:$0xf]
        %v3798 = vld [vmem:[%s3786 + $0x2c] sm:$0xf]
        %v3799 = vld [vmem:[%s3786 + $0x30] sm:$0xf]
        %v3800 = vld [vmem:[%s3786 + $0x34] sm:$0xf]
        %v3801 = vld [vmem:[%s3786 + $0x38] sm:$0xf]
        %v3802 = vld [vmem:[%s3786 + $0x3c] sm:$0xf]
        %v3819 = vunpack.c.l.b16 %v3787
        %v3820 = vunpack.c.l.b16 %v3788
        %v3821 = vunpack.c.l.b16 %v3789
        %v3822 = vunpack.c.l.b16 %v3790
        %v3823 = vunpack.c.l.b16 %v3791
        %v3824 = vunpack.c.l.b16 %v3792
        %v3825 = vunpack.c.l.b16 %v3793
        %v3826 = vunpack.c.l.b16 %v3794
        %v3827 = vunpack.c.l.b16 %v3795
        %v3828 = vunpack.c.l.b16 %v3796
        %v3829 = vunpack.c.l.b16 %v3797
        %v3830 = vunpack.c.l.b16 %v3798
        %v3831 = vunpack.c.l.b16 %v3799
        %v3832 = vunpack.c.l.b16 %v3800
        %v3833 = vunpack.c.l.b16 %v3801
        %v3834 = vunpack.c.l.b16 %v3802
        %v3835 = vpack.c.b16 %v3820, %v3819
        %v3836 = vpack.c.b16 %v3822, %v3821
        %v3837 = vpack.c.b16 %v3824, %v3823
        %v3838 = vpack.c.b16 %v3826, %v3825
        %v3839 = vpack.c.b16 %v3828, %v3827
        %v3840 = vpack.c.b16 %v3830, %v3829
        %v3841 = vpack.c.b16 %v3832, %v3831
        %v3842 = vpack.c.b16 %v3834, %v3833
        %v3844 = vsel %vm1345, %v3835, 0
        %v3847 = vsel %vm1345, %v3836, 0
        %v3850 = vsel %vm1345, %v3837, 0
        %v3853 = vsel %vm1345, %v3838, 0
        %v3856 = vsel %vm1345, %v3839, 0
        %v3859 = vsel %vm1345, %v3840, 0
        %v3862 = vsel %vm1345, %v3841, 0
        %v3865 = vsel %vm1345, %v3842, 0
        %3867 = vmatprep.subr.bf16.mxu0 0
        %3868 = vmatpush1.bf16.msra.mxu0 0
        %3869 = vmatprep.subr.bf16.mxu0 0
        %3870 = vmatpush1.bf16.msra.mxu0 0
        %3871 = vmatprep.subr.bf16.mxu0 0
        %3872 = vmatpush1.bf16.msra.mxu0 0
        %3873 = vmatprep.subr.bf16.mxu0 0
        %3874 = vmatpush1.bf16.msra.mxu0 0
        %3875 = vmatprep.subr.bf16.mxu0 0
        %3876 = vmatpush1.bf16.msra.mxu0 0
        %3877 = vmatprep.subr.bf16.mxu0 0
        %3878 = vmatpush1.bf16.msra.mxu0 0
        %3879 = vmatprep.subr.bf16.mxu0 0
        %3880 = vmatpush1.bf16.msra.mxu0 0
        %3881 = vmatprep.subr.bf16.mxu0 %v1274
        %3882 = vmatpush1.bf16.msra.mxu0 %v1273
        %3883 = vmatprep.subr.bf16.mxu0 0
        %3884 = vmatpush2.bf16.msra.mxu0 0
        %3885 = vmatprep.subr.bf16.mxu0 0
        %3886 = vmatpush2.bf16.msra.mxu0 0
        %3887 = vmatprep.subr.bf16.mxu0 0
        %3888 = vmatpush2.bf16.msra.mxu0 0
        %3889 = vmatprep.subr.bf16.mxu0 0
        %3890 = vmatpush2.bf16.msra.mxu0 0
        %3891 = vmatprep.subr.bf16.mxu0 0
        %3892 = vmatpush2.bf16.msra.mxu0 0
        %3893 = vmatprep.subr.bf16.mxu0 0
        %3894 = vmatpush2.bf16.msra.mxu0 0
        %3895 = vmatprep.subr.bf16.mxu0 0
        %3896 = vmatpush2.bf16.msra.mxu0 0
        %3897 = vmatprep.subr.bf16.mxu0 0
        %3898 = vmatpush2.bf16.msra.mxu0 0
        %3899 = vmatprep.mubr.bf16.mxu0 0
        %3900 = vmatmul.mubr.bf16.gmra.mxu0 %v3844
        %v3901 = vpop.f32.mrf.mxu0
        %v3902 = vadd.f32 0.0, %v3901
        %v3903 = vpop.f32.mrf.mxu0
        %v3904 = vadd.f32 0.0, %v3903
        %v3905 = vpop.f32.mrf.mxu0
        %v3906 = vadd.f32 0.0, %v3905
        %v3907 = vpop.f32.mrf.mxu0
        %v3908 = vadd.f32 0.0, %v3907
        %3909 = vmatprep.mubr.bf16.mxu0 0
        %3910 = vmatmul.mubr.bf16.gmra.mxu0 %v3847
        %v3911 = vpop.f32.mrf.mxu0
        %v3912 = vadd.f32 0.0, %v3911
        %v3913 = vpop.f32.mrf.mxu0
        %v3914 = vadd.f32 0.0, %v3913
        %v3915 = vpop.f32.mrf.mxu0
        %v3916 = vadd.f32 0.0, %v3915
        %v3917 = vpop.f32.mrf.mxu0
        %v3918 = vadd.f32 0.0, %v3917
        %3919 = vmatprep.mubr.bf16.mxu0 0
        %3920 = vmatmul.mubr.bf16.gmra.mxu0 %v3850
        %v3921 = vpop.f32.mrf.mxu0
        %v3922 = vadd.f32 0.0, %v3921
        %v3923 = vpop.f32.mrf.mxu0
        %v3924 = vadd.f32 0.0, %v3923
        %v3925 = vpop.f32.mrf.mxu0
        %v3926 = vadd.f32 0.0, %v3925
        %v3927 = vpop.f32.mrf.mxu0
        %v3928 = vadd.f32 0.0, %v3927
        %3929 = vmatprep.mubr.bf16.mxu0 0
        %3930 = vmatmul.mubr.bf16.gmra.mxu0 %v3853
        %v3931 = vpop.f32.mrf.mxu0
        %v3932 = vadd.f32 0.0, %v3931
        %v3933 = vpop.f32.mrf.mxu0
        %v3934 = vadd.f32 0.0, %v3933
        %v3935 = vpop.f32.mrf.mxu0
        %v3936 = vadd.f32 0.0, %v3935
        %v3937 = vpop.f32.mrf.mxu0
        %v3938 = vadd.f32 0.0, %v3937
        %3939 = vmatprep.mubr.bf16.mxu0 0
        %3940 = vmatmul.mubr.bf16.gmra.mxu0 %v3856
        %v3941 = vpop.f32.mrf.mxu0
        %v3942 = vadd.f32 0.0, %v3941
        %v3943 = vpop.f32.mrf.mxu0
        %v3944 = vadd.f32 0.0, %v3943
        %v3945 = vpop.f32.mrf.mxu0
        %v3946 = vadd.f32 0.0, %v3945
        %v3947 = vpop.f32.mrf.mxu0
        %v3948 = vadd.f32 0.0, %v3947
        %3949 = vmatprep.mubr.bf16.mxu0 0
        %3950 = vmatmul.mubr.bf16.gmra.mxu0 %v3859
        %v3951 = vpop.f32.mrf.mxu0
        %v3952 = vadd.f32 0.0, %v3951
        %v3953 = vpop.f32.mrf.mxu0
        %v3954 = vadd.f32 0.0, %v3953
        %v3955 = vpop.f32.mrf.mxu0
        %v3956 = vadd.f32 0.0, %v3955
        %v3957 = vpop.f32.mrf.mxu0
        %v3958 = vadd.f32 0.0, %v3957
        %3959 = vmatprep.mubr.bf16.mxu0 0
        %3960 = vmatmul.mubr.bf16.gmra.mxu0 %v3862
        %v3961 = vpop.f32.mrf.mxu0
        %v3962 = vadd.f32 0.0, %v3961
        %v3963 = vpop.f32.mrf.mxu0
        %v3964 = vadd.f32 0.0, %v3963
        %v3965 = vpop.f32.mrf.mxu0
        %v3966 = vadd.f32 0.0, %v3965
        %v3967 = vpop.f32.mrf.mxu0
        %v3968 = vadd.f32 0.0, %v3967
        %3969 = vmatprep.mubr.bf16.mxu0 0
        %3970 = vmatmul.mubr.bf16.gmra.mxu0 %v3865
        %v3971 = vpop.f32.mrf.mxu0
        %v3972 = vadd.f32 0.0, %v3971
        %v3973 = vpop.f32.mrf.mxu0
        %v3974 = vadd.f32 0.0, %v3973
        %v3975 = vpop.f32.mrf.mxu0
        %v3976 = vadd.f32 0.0, %v3975
        %v3977 = vpop.f32.mrf.mxu0
        %v3978 = vadd.f32 0.0, %v3977
        %3979 = vdwg.mxu0
        %3980 = vmatprep.subr.bf16.mxu0 0
        %3981 = vmatpush1.bf16.msra.mxu0 0
        %3982 = vmatprep.subr.bf16.mxu0 0
        %3983 = vmatpush1.bf16.msra.mxu0 0
        %3984 = vmatprep.subr.bf16.mxu0 0
        %3985 = vmatpush1.bf16.msra.mxu0 0
        %3986 = vmatprep.subr.bf16.mxu0 0
        %3987 = vmatpush1.bf16.msra.mxu0 0
        %3988 = vmatprep.subr.bf16.mxu0 0
        %3989 = vmatpush1.bf16.msra.mxu0 0
        %3990 = vmatprep.subr.bf16.mxu0 0
        %3991 = vmatpush1.bf16.msra.mxu0 0
        %3992 = vmatprep.subr.bf16.mxu0 0
        %3993 = vmatpush1.bf16.msra.mxu0 0
        %3994 = vmatprep.subr.bf16.mxu0 %v1276
        %3995 = vmatpush1.bf16.msra.mxu0 %v1275
        %3996 = vmatprep.subr.bf16.mxu0 0
        %3997 = vmatpush2.bf16.msra.mxu0 0
        %3998 = vmatprep.subr.bf16.mxu0 0
        %3999 = vmatpush2.bf16.msra.mxu0 0
        %4000 = vmatprep.subr.bf16.mxu0 0
        %4001 = vmatpush2.bf16.msra.mxu0 0
        %4002 = vmatprep.subr.bf16.mxu0 0
        %4003 = vmatpush2.bf16.msra.mxu0 0
        %4004 = vmatprep.subr.bf16.mxu0 0
        %4005 = vmatpush2.bf16.msra.mxu0 0
        %4006 = vmatprep.subr.bf16.mxu0 0
        %4007 = vmatpush2.bf16.msra.mxu0 0
        %4008 = vmatprep.subr.bf16.mxu0 0
        %4009 = vmatpush2.bf16.msra.mxu0 0
        %4010 = vmatprep.subr.bf16.mxu0 0
        %4011 = vmatpush2.bf16.msra.mxu0 0
        %4012 = vmatprep.mubr.bf16.mxu0 0
        %4013 = vmatmul.mubr.bf16.gmra.mxu0 %v3844
        %v4014 = vpop.f32.mrf.mxu0
        %v4015 = vadd.f32 0.0, %v4014
        %v4016 = vpop.f32.mrf.mxu0
        %v4017 = vadd.f32 0.0, %v4016
        %v4018 = vpop.f32.mrf.mxu0
        %v4019 = vadd.f32 0.0, %v4018
        %v4020 = vpop.f32.mrf.mxu0
        %v4021 = vadd.f32 0.0, %v4020
        %4022 = vmatprep.mubr.bf16.mxu0 0
        %4023 = vmatmul.mubr.bf16.gmra.mxu0 %v3847
        %v4024 = vpop.f32.mrf.mxu0
        %v4025 = vadd.f32 0.0, %v4024
        %v4026 = vpop.f32.mrf.mxu0
        %v4027 = vadd.f32 0.0, %v4026
        %v4028 = vpop.f32.mrf.mxu0
        %v4029 = vadd.f32 0.0, %v4028
        %v4030 = vpop.f32.mrf.mxu0
        %v4031 = vadd.f32 0.0, %v4030
        %4032 = vmatprep.mubr.bf16.mxu0 0
        %4033 = vmatmul.mubr.bf16.gmra.mxu0 %v3850
        %v4034 = vpop.f32.mrf.mxu0
        %v4035 = vadd.f32 0.0, %v4034
        %v4036 = vpop.f32.mrf.mxu0
        %v4037 = vadd.f32 0.0, %v4036
        %v4038 = vpop.f32.mrf.mxu0
        %v4039 = vadd.f32 0.0, %v4038
        %v4040 = vpop.f32.mrf.mxu0
        %v4041 = vadd.f32 0.0, %v4040
        %4042 = vmatprep.mubr.bf16.mxu0 0
        %4043 = vmatmul.mubr.bf16.gmra.mxu0 %v3853
        %v4044 = vpop.f32.mrf.mxu0
        %v4045 = vadd.f32 0.0, %v4044
        %v4046 = vpop.f32.mrf.mxu0
        %v4047 = vadd.f32 0.0, %v4046
        %v4048 = vpop.f32.mrf.mxu0
        %v4049 = vadd.f32 0.0, %v4048
        %v4050 = vpop.f32.mrf.mxu0
        %v4051 = vadd.f32 0.0, %v4050
        %4052 = vmatprep.mubr.bf16.mxu0 0
        %4053 = vmatmul.mubr.bf16.gmra.mxu0 %v3856
        %v4054 = vpop.f32.mrf.mxu0
        %v4055 = vadd.f32 0.0, %v4054
        %v4056 = vpop.f32.mrf.mxu0
        %v4057 = vadd.f32 0.0, %v4056
        %v4058 = vpop.f32.mrf.mxu0
        %v4059 = vadd.f32 0.0, %v4058
        %v4060 = vpop.f32.mrf.mxu0
        %v4061 = vadd.f32 0.0, %v4060
        %4062 = vmatprep.mubr.bf16.mxu0 0
        %4063 = vmatmul.mubr.bf16.gmra.mxu0 %v3859
        %v4064 = vpop.f32.mrf.mxu0
        %v4065 = vadd.f32 0.0, %v4064
        %v4066 = vpop.f32.mrf.mxu0
        %v4067 = vadd.f32 0.0, %v4066
        %v4068 = vpop.f32.mrf.mxu0
        %v4069 = vadd.f32 0.0, %v4068
        %v4070 = vpop.f32.mrf.mxu0
        %v4071 = vadd.f32 0.0, %v4070
        %4072 = vmatprep.mubr.bf16.mxu0 0
        %4073 = vmatmul.mubr.bf16.gmra.mxu0 %v3862
        %v4074 = vpop.f32.mrf.mxu0
        %v4075 = vadd.f32 0.0, %v4074
        %v4076 = vpop.f32.mrf.mxu0
        %v4077 = vadd.f32 0.0, %v4076
        %v4078 = vpop.f32.mrf.mxu0
        %v4079 = vadd.f32 0.0, %v4078
        %v4080 = vpop.f32.mrf.mxu0
        %v4081 = vadd.f32 0.0, %v4080
        %4082 = vmatprep.mubr.bf16.mxu0 0
        %4083 = vmatmul.mubr.bf16.gmra.mxu0 %v3865
        %v4084 = vpop.f32.mrf.mxu0
        %v4085 = vadd.f32 0.0, %v4084
        %v4086 = vpop.f32.mrf.mxu0
        %v4087 = vadd.f32 0.0, %v4086
        %v4088 = vpop.f32.mrf.mxu0
        %v4089 = vadd.f32 0.0, %v4088
        %v4090 = vpop.f32.mrf.mxu0
        %v4091 = vadd.f32 0.0, %v4090
        %4092 = vdwg.mxu0
        %4093 = vmatprep.subr.bf16.mxu0 0
        %4094 = vmatpush1.bf16.msra.mxu0 0
        %4095 = vmatprep.subr.bf16.mxu0 0
        %4096 = vmatpush1.bf16.msra.mxu0 0
        %4097 = vmatprep.subr.bf16.mxu0 0
        %4098 = vmatpush1.bf16.msra.mxu0 0
        %4099 = vmatprep.subr.bf16.mxu0 0
        %4100 = vmatpush1.bf16.msra.mxu0 0
        %4101 = vmatprep.subr.bf16.mxu0 0
        %4102 = vmatpush1.bf16.msra.mxu0 0
        %4103 = vmatprep.subr.bf16.mxu0 0
        %4104 = vmatpush1.bf16.msra.mxu0 0
        %4105 = vmatprep.subr.bf16.mxu0 0
        %4106 = vmatpush1.bf16.msra.mxu0 0
        %4107 = vmatprep.subr.bf16.mxu0 %v1278
        %4108 = vmatpush1.bf16.msra.mxu0 %v1277
        %4109 = vmatprep.subr.bf16.mxu0 0
        %4110 = vmatpush2.bf16.msra.mxu0 0
        %4111 = vmatprep.subr.bf16.mxu0 0
        %4112 = vmatpush2.bf16.msra.mxu0 0
        %4113 = vmatprep.subr.bf16.mxu0 0
        %4114 = vmatpush2.bf16.msra.mxu0 0
        %4115 = vmatprep.subr.bf16.mxu0 0
        %4116 = vmatpush2.bf16.msra.mxu0 0
        %4117 = vmatprep.subr.bf16.mxu0 0
        %4118 = vmatpush2.bf16.msra.mxu0 0
        %4119 = vmatprep.subr.bf16.mxu0 0
        %4120 = vmatpush2.bf16.msra.mxu0 0
        %4121 = vmatprep.subr.bf16.mxu0 0
        %4122 = vmatpush2.bf16.msra.mxu0 0
        %4123 = vmatprep.subr.bf16.mxu0 0
        %4124 = vmatpush2.bf16.msra.mxu0 0
        %4125 = vmatprep.mubr.bf16.mxu0 0
        %4126 = vmatmul.mubr.bf16.gmra.mxu0 %v3844
        %v4127 = vpop.f32.mrf.mxu0
        %v4128 = vadd.f32 0.0, %v4127
        %v4129 = vpop.f32.mrf.mxu0
        %v4130 = vadd.f32 0.0, %v4129
        %v4131 = vpop.f32.mrf.mxu0
        %v4132 = vadd.f32 0.0, %v4131
        %v4133 = vpop.f32.mrf.mxu0
        %v4134 = vadd.f32 0.0, %v4133
        %4135 = vmatprep.mubr.bf16.mxu0 0
        %4136 = vmatmul.mubr.bf16.gmra.mxu0 %v3847
        %v4137 = vpop.f32.mrf.mxu0
        %v4138 = vadd.f32 0.0, %v4137
        %v4139 = vpop.f32.mrf.mxu0
        %v4140 = vadd.f32 0.0, %v4139
        %v4141 = vpop.f32.mrf.mxu0
        %v4142 = vadd.f32 0.0, %v4141
        %v4143 = vpop.f32.mrf.mxu0
        %v4144 = vadd.f32 0.0, %v4143
        %4145 = vmatprep.mubr.bf16.mxu0 0
        %4146 = vmatmul.mubr.bf16.gmra.mxu0 %v3850
        %v4147 = vpop.f32.mrf.mxu0
        %v4148 = vadd.f32 0.0, %v4147
        %v4149 = vpop.f32.mrf.mxu0
        %v4150 = vadd.f32 0.0, %v4149
        %v4151 = vpop.f32.mrf.mxu0
        %v4152 = vadd.f32 0.0, %v4151
        %v4153 = vpop.f32.mrf.mxu0
        %v4154 = vadd.f32 0.0, %v4153
        %4155 = vmatprep.mubr.bf16.mxu0 0
        %4156 = vmatmul.mubr.bf16.gmra.mxu0 %v3853
        %v4157 = vpop.f32.mrf.mxu0
        %v4158 = vadd.f32 0.0, %v4157
        %v4159 = vpop.f32.mrf.mxu0
        %v4160 = vadd.f32 0.0, %v4159
        %v4161 = vpop.f32.mrf.mxu0
        %v4162 = vadd.f32 0.0, %v4161
        %v4163 = vpop.f32.mrf.mxu0
        %v4164 = vadd.f32 0.0, %v4163
        %4165 = vmatprep.mubr.bf16.mxu0 0
        %4166 = vmatmul.mubr.bf16.gmra.mxu0 %v3856
        %v4167 = vpop.f32.mrf.mxu0
        %v4168 = vadd.f32 0.0, %v4167
        %v4169 = vpop.f32.mrf.mxu0
        %v4170 = vadd.f32 0.0, %v4169
        %v4171 = vpop.f32.mrf.mxu0
        %v4172 = vadd.f32 0.0, %v4171
        %v4173 = vpop.f32.mrf.mxu0
        %v4174 = vadd.f32 0.0, %v4173
        %4175 = vmatprep.mubr.bf16.mxu0 0
        %4176 = vmatmul.mubr.bf16.gmra.mxu0 %v3859
        %v4177 = vpop.f32.mrf.mxu0
        %v4178 = vadd.f32 0.0, %v4177
        %v4179 = vpop.f32.mrf.mxu0
        %v4180 = vadd.f32 0.0, %v4179
        %v4181 = vpop.f32.mrf.mxu0
        %v4182 = vadd.f32 0.0, %v4181
        %v4183 = vpop.f32.mrf.mxu0
        %v4184 = vadd.f32 0.0, %v4183
        %4185 = vmatprep.mubr.bf16.mxu0 0
        %4186 = vmatmul.mubr.bf16.gmra.mxu0 %v3862
        %v4187 = vpop.f32.mrf.mxu0
        %v4188 = vadd.f32 0.0, %v4187
        %v4189 = vpop.f32.mrf.mxu0
        %v4190 = vadd.f32 0.0, %v4189
        %v4191 = vpop.f32.mrf.mxu0
        %v4192 = vadd.f32 0.0, %v4191
        %v4193 = vpop.f32.mrf.mxu0
        %v4194 = vadd.f32 0.0, %v4193
        %4195 = vmatprep.mubr.bf16.mxu0 0
        %4196 = vmatmul.mubr.bf16.gmra.mxu0 %v3865
        %v4197 = vpop.f32.mrf.mxu0
        %v4198 = vadd.f32 0.0, %v4197
        %v4199 = vpop.f32.mrf.mxu0
        %v4200 = vadd.f32 0.0, %v4199
        %v4201 = vpop.f32.mrf.mxu0
        %v4202 = vadd.f32 0.0, %v4201
        %v4203 = vpop.f32.mrf.mxu0
        %v4204 = vadd.f32 0.0, %v4203
        %4205 = vdwg.mxu0
        %4206 = vmatprep.subr.bf16.mxu0 0
        %4207 = vmatpush1.bf16.msra.mxu0 0
        %4208 = vmatprep.subr.bf16.mxu0 0
        %4209 = vmatpush1.bf16.msra.mxu0 0
        %4210 = vmatprep.subr.bf16.mxu0 0
        %4211 = vmatpush1.bf16.msra.mxu0 0
        %4212 = vmatprep.subr.bf16.mxu0 0
        %4213 = vmatpush1.bf16.msra.mxu0 0
        %4214 = vmatprep.subr.bf16.mxu0 0
        %4215 = vmatpush1.bf16.msra.mxu0 0
        %4216 = vmatprep.subr.bf16.mxu0 0
        %4217 = vmatpush1.bf16.msra.mxu0 0
        %4218 = vmatprep.subr.bf16.mxu0 0
        %4219 = vmatpush1.bf16.msra.mxu0 0
        %4220 = vmatprep.subr.bf16.mxu0 %v1280
        %4221 = vmatpush1.bf16.msra.mxu0 %v1279
        %4222 = vmatprep.subr.bf16.mxu0 0
        %4223 = vmatpush2.bf16.msra.mxu0 0
        %4224 = vmatprep.subr.bf16.mxu0 0
        %4225 = vmatpush2.bf16.msra.mxu0 0
        %4226 = vmatprep.subr.bf16.mxu0 0
        %4227 = vmatpush2.bf16.msra.mxu0 0
        %4228 = vmatprep.subr.bf16.mxu0 0
        %4229 = vmatpush2.bf16.msra.mxu0 0
        %4230 = vmatprep.subr.bf16.mxu0 0
        %4231 = vmatpush2.bf16.msra.mxu0 0
        %4232 = vmatprep.subr.bf16.mxu0 0
        %4233 = vmatpush2.bf16.msra.mxu0 0
        %4234 = vmatprep.subr.bf16.mxu0 0
        %4235 = vmatpush2.bf16.msra.mxu0 0
        %4236 = vmatprep.subr.bf16.mxu0 0
        %4237 = vmatpush2.bf16.msra.mxu0 0
        %4238 = vmatprep.mubr.bf16.mxu0 0
        %4239 = vmatmul.mubr.bf16.gmra.mxu0 %v3844
        %v4240 = vpop.f32.mrf.mxu0
        %v4241 = vadd.f32 0.0, %v4240
        %v4242 = vpop.f32.mrf.mxu0
        %v4243 = vadd.f32 0.0, %v4242
        %v4244 = vpop.f32.mrf.mxu0
        %v4245 = vadd.f32 0.0, %v4244
        %v4246 = vpop.f32.mrf.mxu0
        %v4247 = vadd.f32 0.0, %v4246
        %4248 = vmatprep.mubr.bf16.mxu0 0
        %4249 = vmatmul.mubr.bf16.gmra.mxu0 %v3847
        %v4250 = vpop.f32.mrf.mxu0
        %v4251 = vadd.f32 0.0, %v4250
        %v4252 = vpop.f32.mrf.mxu0
        %v4253 = vadd.f32 0.0, %v4252
        %v4254 = vpop.f32.mrf.mxu0
        %v4255 = vadd.f32 0.0, %v4254
        %v4256 = vpop.f32.mrf.mxu0
        %v4257 = vadd.f32 0.0, %v4256
        %4258 = vmatprep.mubr.bf16.mxu0 0
        %4259 = vmatmul.mubr.bf16.gmra.mxu0 %v3850
        %v4260 = vpop.f32.mrf.mxu0
        %v4261 = vadd.f32 0.0, %v4260
        %v4262 = vpop.f32.mrf.mxu0
        %v4263 = vadd.f32 0.0, %v4262
        %v4264 = vpop.f32.mrf.mxu0
        %v4265 = vadd.f32 0.0, %v4264
        %v4266 = vpop.f32.mrf.mxu0
        %v4267 = vadd.f32 0.0, %v4266
        %4268 = vmatprep.mubr.bf16.mxu0 0
        %4269 = vmatmul.mubr.bf16.gmra.mxu0 %v3853
        %v4270 = vpop.f32.mrf.mxu0
        %v4271 = vadd.f32 0.0, %v4270
        %v4272 = vpop.f32.mrf.mxu0
        %v4273 = vadd.f32 0.0, %v4272
        %v4274 = vpop.f32.mrf.mxu0
        %v4275 = vadd.f32 0.0, %v4274
        %v4276 = vpop.f32.mrf.mxu0
        %v4277 = vadd.f32 0.0, %v4276
        %4278 = vmatprep.mubr.bf16.mxu0 0
        %4279 = vmatmul.mubr.bf16.gmra.mxu0 %v3856
        %v4280 = vpop.f32.mrf.mxu0
        %v4281 = vadd.f32 0.0, %v4280
        %v4282 = vpop.f32.mrf.mxu0
        %v4283 = vadd.f32 0.0, %v4282
        %v4284 = vpop.f32.mrf.mxu0
        %v4285 = vadd.f32 0.0, %v4284
        %v4286 = vpop.f32.mrf.mxu0
        %v4287 = vadd.f32 0.0, %v4286
        %4288 = vmatprep.mubr.bf16.mxu0 0
        %4289 = vmatmul.mubr.bf16.gmra.mxu0 %v3859
        %v4290 = vpop.f32.mrf.mxu0
        %v4291 = vadd.f32 0.0, %v4290
        %v4292 = vpop.f32.mrf.mxu0
        %v4293 = vadd.f32 0.0, %v4292
        %v4294 = vpop.f32.mrf.mxu0
        %v4295 = vadd.f32 0.0, %v4294
        %v4296 = vpop.f32.mrf.mxu0
        %v4297 = vadd.f32 0.0, %v4296
        %4298 = vmatprep.mubr.bf16.mxu0 0
        %4299 = vmatmul.mubr.bf16.gmra.mxu0 %v3862
        %v4300 = vpop.f32.mrf.mxu0
        %v4301 = vadd.f32 0.0, %v4300
        %v4302 = vpop.f32.mrf.mxu0
        %v4303 = vadd.f32 0.0, %v4302
        %v4304 = vpop.f32.mrf.mxu0
        %v4305 = vadd.f32 0.0, %v4304
        %v4306 = vpop.f32.mrf.mxu0
        %v4307 = vadd.f32 0.0, %v4306
        %4308 = vmatprep.mubr.bf16.mxu0 0
        %4309 = vmatmul.mubr.bf16.gmra.mxu0 %v3865
        %v4310 = vpop.f32.mrf.mxu0
        %v4311 = vadd.f32 0.0, %v4310
        %v4312 = vpop.f32.mrf.mxu0
        %v4313 = vadd.f32 0.0, %v4312
        %v4314 = vpop.f32.mrf.mxu0
        %v4315 = vadd.f32 0.0, %v4314
        %v4316 = vpop.f32.mrf.mxu0
        %v4317 = vadd.f32 0.0, %v4316
        %4318 = vdwg.mxu0
        %v4319 = vmul.f32 %v3902, %v1257
        %v4320 = vmul.f32 %v3904, %v1258
        %v4321 = vmul.f32 %v4015, %v1259
        %v4322 = vmul.f32 %v4017, %v1260
        %v4323 = vmul.f32 %v4128, %v1261
        %v4324 = vmul.f32 %v4130, %v1262
        %v4325 = vmul.f32 %v4241, %v1263
        %v4326 = vmul.f32 %v4243, %v1264
        %v4327 = vmul.f32 %v3906, %v1265
        %v4328 = vmul.f32 %v3908, %v1266
        %v4329 = vmul.f32 %v4019, %v1267
        %v4330 = vmul.f32 %v4021, %v1268
        %v4331 = vmul.f32 %v4132, %v1269
        %v4332 = vmul.f32 %v4134, %v1270
        %v4333 = vmul.f32 %v4245, %v1271
        %v4334 = vmul.f32 %v4247, %v1272
        %v4335 = vmul.f32 %v3912, %v1257
        %v4336 = vmul.f32 %v3914, %v1258
        %v4337 = vmul.f32 %v4025, %v1259
        %v4338 = vmul.f32 %v4027, %v1260
        %v4339 = vmul.f32 %v4138, %v1261
        %v4340 = vmul.f32 %v4140, %v1262
        %v4341 = vmul.f32 %v4251, %v1263
        %v4342 = vmul.f32 %v4253, %v1264
        %v4343 = vmul.f32 %v3916, %v1265
        %v4344 = vmul.f32 %v3918, %v1266
        %v4345 = vmul.f32 %v4029, %v1267
        %v4346 = vmul.f32 %v4031, %v1268
        %v4347 = vmul.f32 %v4142, %v1269
        %v4348 = vmul.f32 %v4144, %v1270
        %v4349 = vmul.f32 %v4255, %v1271
        %v4350 = vmul.f32 %v4257, %v1272
        %v4351 = vmul.f32 %v3922, %v1257
        %v4352 = vmul.f32 %v3924, %v1258
        %v4353 = vmul.f32 %v4035, %v1259
        %v4354 = vmul.f32 %v4037, %v1260
        %v4355 = vmul.f32 %v4148, %v1261
        %v4356 = vmul.f32 %v4150, %v1262
        %v4357 = vmul.f32 %v4261, %v1263
        %v4358 = vmul.f32 %v4263, %v1264
        %v4359 = vmul.f32 %v3926, %v1265
        %v4360 = vmul.f32 %v3928, %v1266
        %v4361 = vmul.f32 %v4039, %v1267
        %v4362 = vmul.f32 %v4041, %v1268
        %v4363 = vmul.f32 %v4152, %v1269
        %v4364 = vmul.f32 %v4154, %v1270
        %v4365 = vmul.f32 %v4265, %v1271
        %v4366 = vmul.f32 %v4267, %v1272
        %v4367 = vmul.f32 %v3932, %v1257
        %v4368 = vmul.f32 %v3934, %v1258
        %v4369 = vmul.f32 %v4045, %v1259
        %v4370 = vmul.f32 %v4047, %v1260
        %v4371 = vmul.f32 %v4158, %v1261
        %v4372 = vmul.f32 %v4160, %v1262
        %v4373 = vmul.f32 %v4271, %v1263
        %v4374 = vmul.f32 %v4273, %v1264
        %v4375 = vmul.f32 %v3936, %v1265
        %v4376 = vmul.f32 %v3938, %v1266
        %v4377 = vmul.f32 %v4049, %v1267
        %v4378 = vmul.f32 %v4051, %v1268
        %v4379 = vmul.f32 %v4162, %v1269
        %v4380 = vmul.f32 %v4164, %v1270
        %v4381 = vmul.f32 %v4275, %v1271
        %v4382 = vmul.f32 %v4277, %v1272
        %v4383 = vmul.f32 %v3942, %v1257
        %v4384 = vmul.f32 %v3944, %v1258
        %v4385 = vmul.f32 %v4055, %v1259
        %v4386 = vmul.f32 %v4057, %v1260
        %v4387 = vmul.f32 %v4168, %v1261
        %v4388 = vmul.f32 %v4170, %v1262
        %v4389 = vmul.f32 %v4281, %v1263
        %v4390 = vmul.f32 %v4283, %v1264
        %v4391 = vmul.f32 %v3946, %v1265
        %v4392 = vmul.f32 %v3948, %v1266
        %v4393 = vmul.f32 %v4059, %v1267
        %v4394 = vmul.f32 %v4061, %v1268
        %v4395 = vmul.f32 %v4172, %v1269
        %v4396 = vmul.f32 %v4174, %v1270
        %v4397 = vmul.f32 %v4285, %v1271
        %v4398 = vmul.f32 %v4287, %v1272
        %v4399 = vmul.f32 %v3952, %v1257
        %v4400 = vmul.f32 %v3954, %v1258
        %v4401 = vmul.f32 %v4065, %v1259
        %v4402 = vmul.f32 %v4067, %v1260
        %v4403 = vmul.f32 %v4178, %v1261
        %v4404 = vmul.f32 %v4180, %v1262
        %v4405 = vmul.f32 %v4291, %v1263
        %v4406 = vmul.f32 %v4293, %v1264
        %v4407 = vmul.f32 %v3956, %v1265
        %v4408 = vmul.f32 %v3958, %v1266
        %v4409 = vmul.f32 %v4069, %v1267
        %v4410 = vmul.f32 %v4071, %v1268
        %v4411 = vmul.f32 %v4182, %v1269
        %v4412 = vmul.f32 %v4184, %v1270
        %v4413 = vmul.f32 %v4295, %v1271
        %v4414 = vmul.f32 %v4297, %v1272
        %v4415 = vmul.f32 %v3962, %v1257
        %v4416 = vmul.f32 %v3964, %v1258
        %v4417 = vmul.f32 %v4075, %v1259
        %v4418 = vmul.f32 %v4077, %v1260
        %v4419 = vmul.f32 %v4188, %v1261
        %v4420 = vmul.f32 %v4190, %v1262
        %v4421 = vmul.f32 %v4301, %v1263
        %v4422 = vmul.f32 %v4303, %v1264
        %v4423 = vmul.f32 %v3966, %v1265
        %v4424 = vmul.f32 %v3968, %v1266
        %v4425 = vmul.f32 %v4079, %v1267
        %v4426 = vmul.f32 %v4081, %v1268
        %v4427 = vmul.f32 %v4192, %v1269
        %v4428 = vmul.f32 %v4194, %v1270
        %v4429 = vmul.f32 %v4305, %v1271
        %v4430 = vmul.f32 %v4307, %v1272
        %v4431 = vmul.f32 %v3972, %v1257
        %v4432 = vmul.f32 %v3974, %v1258
        %v4433 = vmul.f32 %v4085, %v1259
        %v4434 = vmul.f32 %v4087, %v1260
        %v4435 = vmul.f32 %v4198, %v1261
        %v4436 = vmul.f32 %v4200, %v1262
        %v4437 = vmul.f32 %v4311, %v1263
        %v4438 = vmul.f32 %v4313, %v1264
        %v4439 = vmul.f32 %v3976, %v1265
        %v4440 = vmul.f32 %v3978, %v1266
        %v4441 = vmul.f32 %v4089, %v1267
        %v4442 = vmul.f32 %v4091, %v1268
        %v4443 = vmul.f32 %v4202, %v1269
        %v4444 = vmul.f32 %v4204, %v1270
        %v4445 = vmul.f32 %v4315, %v1271
        %v4446 = vmul.f32 %v4317, %v1272
        %v4447 = vadd.f32 %v4319, %v4327
        %v4448 = vrot.slane %v4447, 4
        %v4449 = vadd.f32 %v4447, %v4448
        %v4450 = vrot.slane %v4449, 2
        %v4451 = vadd.f32 %v4449, %v4450
        %v4452 = vrot.slane %v4451, 1
        %v4453 = vadd.f32 %v4451, %v4452
        %v4454 = vadd.f32 %v4320, %v4328
        %v4455 = vrot.slane %v4454, 4
        %v4456 = vadd.f32 %v4454, %v4455
        %v4457 = vrot.slane %v4456, 2
        %v4458 = vadd.f32 %v4456, %v4457
        %v4459 = vrot.slane %v4458, 1
        %v4460 = vadd.f32 %v4458, %v4459
        %v4461 = vadd.f32 %v4321, %v4329
        %v4462 = vrot.slane %v4461, 4
        %v4463 = vadd.f32 %v4461, %v4462
        %v4464 = vrot.slane %v4463, 2
        %v4465 = vadd.f32 %v4463, %v4464
        %v4466 = vrot.slane %v4465, 1
        %v4467 = vadd.f32 %v4465, %v4466
        %v4468 = vadd.f32 %v4322, %v4330
        %v4469 = vrot.slane %v4468, 4
        %v4470 = vadd.f32 %v4468, %v4469
        %v4471 = vrot.slane %v4470, 2
        %v4472 = vadd.f32 %v4470, %v4471
        %v4473 = vrot.slane %v4472, 1
        %v4474 = vadd.f32 %v4472, %v4473
        %v4475 = vadd.f32 %v4323, %v4331
        %v4476 = vrot.slane %v4475, 4
        %v4477 = vadd.f32 %v4475, %v4476
        %v4478 = vrot.slane %v4477, 2
        %v4479 = vadd.f32 %v4477, %v4478
        %v4480 = vrot.slane %v4479, 1
        %v4481 = vadd.f32 %v4479, %v4480
        %v4482 = vadd.f32 %v4324, %v4332
        %v4483 = vrot.slane %v4482, 4
        %v4484 = vadd.f32 %v4482, %v4483
        %v4485 = vrot.slane %v4484, 2
        %v4486 = vadd.f32 %v4484, %v4485
        %v4487 = vrot.slane %v4486, 1
        %v4488 = vadd.f32 %v4486, %v4487
        %v4489 = vadd.f32 %v4325, %v4333
        %v4490 = vrot.slane %v4489, 4
        %v4491 = vadd.f32 %v4489, %v4490
        %v4492 = vrot.slane %v4491, 2
        %v4493 = vadd.f32 %v4491, %v4492
        %v4494 = vrot.slane %v4493, 1
        %v4495 = vadd.f32 %v4493, %v4494
        %v4496 = vadd.f32 %v4326, %v4334
        %v4497 = vrot.slane %v4496, 4
        %v4498 = vadd.f32 %v4496, %v4497
        %v4499 = vrot.slane %v4498, 2
        %v4500 = vadd.f32 %v4498, %v4499
        %v4501 = vrot.slane %v4500, 1
        %v4502 = vadd.f32 %v4500, %v4501
        %v4503 = vadd.f32 %v4335, %v4343
        %v4504 = vrot.slane %v4503, 4
        %v4505 = vadd.f32 %v4503, %v4504
        %v4506 = vrot.slane %v4505, 2
        %v4507 = vadd.f32 %v4505, %v4506
        %v4508 = vrot.slane %v4507, 1
        %v4509 = vadd.f32 %v4507, %v4508
        %v4510 = vadd.f32 %v4336, %v4344
        %v4511 = vrot.slane %v4510, 4
        %v4512 = vadd.f32 %v4510, %v4511
        %v4513 = vrot.slane %v4512, 2
        %v4514 = vadd.f32 %v4512, %v4513
        %v4515 = vrot.slane %v4514, 1
        %v4516 = vadd.f32 %v4514, %v4515
        %v4517 = vadd.f32 %v4337, %v4345
        %v4518 = vrot.slane %v4517, 4
        %v4519 = vadd.f32 %v4517, %v4518
        %v4520 = vrot.slane %v4519, 2
        %v4521 = vadd.f32 %v4519, %v4520
        %v4522 = vrot.slane %v4521, 1
        %v4523 = vadd.f32 %v4521, %v4522
        %v4524 = vadd.f32 %v4338, %v4346
        %v4525 = vrot.slane %v4524, 4
        %v4526 = vadd.f32 %v4524, %v4525
        %v4527 = vrot.slane %v4526, 2
        %v4528 = vadd.f32 %v4526, %v4527
        %v4529 = vrot.slane %v4528, 1
        %v4530 = vadd.f32 %v4528, %v4529
        %v4531 = vadd.f32 %v4339, %v4347
        %v4532 = vrot.slane %v4531, 4
        %v4533 = vadd.f32 %v4531, %v4532
        %v4534 = vrot.slane %v4533, 2
        %v4535 = vadd.f32 %v4533, %v4534
        %v4536 = vrot.slane %v4535, 1
        %v4537 = vadd.f32 %v4535, %v4536
        %v4538 = vadd.f32 %v4340, %v4348
        %v4539 = vrot.slane %v4538, 4
        %v4540 = vadd.f32 %v4538, %v4539
        %v4541 = vrot.slane %v4540, 2
        %v4542 = vadd.f32 %v4540, %v4541
        %v4543 = vrot.slane %v4542, 1
        %v4544 = vadd.f32 %v4542, %v4543
        %v4545 = vadd.f32 %v4341, %v4349
        %v4546 = vrot.slane %v4545, 4
        %v4547 = vadd.f32 %v4545, %v4546
        %v4548 = vrot.slane %v4547, 2
        %v4549 = vadd.f32 %v4547, %v4548
        %v4550 = vrot.slane %v4549, 1
        %v4551 = vadd.f32 %v4549, %v4550
        %v4552 = vadd.f32 %v4342, %v4350
        %v4553 = vrot.slane %v4552, 4
        %v4554 = vadd.f32 %v4552, %v4553
        %v4555 = vrot.slane %v4554, 2
        %v4556 = vadd.f32 %v4554, %v4555
        %v4557 = vrot.slane %v4556, 1
        %v4558 = vadd.f32 %v4556, %v4557
        %v4559 = vadd.f32 %v4351, %v4359
        %v4560 = vrot.slane %v4559, 4
        %v4561 = vadd.f32 %v4559, %v4560
        %v4562 = vrot.slane %v4561, 2
        %v4563 = vadd.f32 %v4561, %v4562
        %v4564 = vrot.slane %v4563, 1
        %v4565 = vadd.f32 %v4563, %v4564
        %v4566 = vadd.f32 %v4352, %v4360
        %v4567 = vrot.slane %v4566, 4
        %v4568 = vadd.f32 %v4566, %v4567
        %v4569 = vrot.slane %v4568, 2
        %v4570 = vadd.f32 %v4568, %v4569
        %v4571 = vrot.slane %v4570, 1
        %v4572 = vadd.f32 %v4570, %v4571
        %v4573 = vadd.f32 %v4353, %v4361
        %v4574 = vrot.slane %v4573, 4
        %v4575 = vadd.f32 %v4573, %v4574
        %v4576 = vrot.slane %v4575, 2
        %v4577 = vadd.f32 %v4575, %v4576
        %v4578 = vrot.slane %v4577, 1
        %v4579 = vadd.f32 %v4577, %v4578
        %v4580 = vadd.f32 %v4354, %v4362
        %v4581 = vrot.slane %v4580, 4
        %v4582 = vadd.f32 %v4580, %v4581
        %v4583 = vrot.slane %v4582, 2
        %v4584 = vadd.f32 %v4582, %v4583
        %v4585 = vrot.slane %v4584, 1
        %v4586 = vadd.f32 %v4584, %v4585
        %v4587 = vadd.f32 %v4355, %v4363
        %v4588 = vrot.slane %v4587, 4
        %v4589 = vadd.f32 %v4587, %v4588
        %v4590 = vrot.slane %v4589, 2
        %v4591 = vadd.f32 %v4589, %v4590
        %v4592 = vrot.slane %v4591, 1
        %v4593 = vadd.f32 %v4591, %v4592
        %v4594 = vadd.f32 %v4356, %v4364
        %v4595 = vrot.slane %v4594, 4
        %v4596 = vadd.f32 %v4594, %v4595
        %v4597 = vrot.slane %v4596, 2
        %v4598 = vadd.f32 %v4596, %v4597
        %v4599 = vrot.slane %v4598, 1
        %v4600 = vadd.f32 %v4598, %v4599
        %v4601 = vadd.f32 %v4357, %v4365
        %v4602 = vrot.slane %v4601, 4
        %v4603 = vadd.f32 %v4601, %v4602
        %v4604 = vrot.slane %v4603, 2
        %v4605 = vadd.f32 %v4603, %v4604
        %v4606 = vrot.slane %v4605, 1
        %v4607 = vadd.f32 %v4605, %v4606
        %v4608 = vadd.f32 %v4358, %v4366
        %v4609 = vrot.slane %v4608, 4
        %v4610 = vadd.f32 %v4608, %v4609
        %v4611 = vrot.slane %v4610, 2
        %v4612 = vadd.f32 %v4610, %v4611
        %v4613 = vrot.slane %v4612, 1
        %v4614 = vadd.f32 %v4612, %v4613
        %v4615 = vadd.f32 %v4367, %v4375
        %v4616 = vrot.slane %v4615, 4
        %v4617 = vadd.f32 %v4615, %v4616
        %v4618 = vrot.slane %v4617, 2
        %v4619 = vadd.f32 %v4617, %v4618
        %v4620 = vrot.slane %v4619, 1
        %v4621 = vadd.f32 %v4619, %v4620
        %v4622 = vadd.f32 %v4368, %v4376
        %v4623 = vrot.slane %v4622, 4
        %v4624 = vadd.f32 %v4622, %v4623
        %v4625 = vrot.slane %v4624, 2
        %v4626 = vadd.f32 %v4624, %v4625
        %v4627 = vrot.slane %v4626, 1
        %v4628 = vadd.f32 %v4626, %v4627
        %v4629 = vadd.f32 %v4369, %v4377
        %v4630 = vrot.slane %v4629, 4
        %v4631 = vadd.f32 %v4629, %v4630
        %v4632 = vrot.slane %v4631, 2
        %v4633 = vadd.f32 %v4631, %v4632
        %v4634 = vrot.slane %v4633, 1
        %v4635 = vadd.f32 %v4633, %v4634
        %v4636 = vadd.f32 %v4370, %v4378
        %v4637 = vrot.slane %v4636, 4
        %v4638 = vadd.f32 %v4636, %v4637
        %v4639 = vrot.slane %v4638, 2
        %v4640 = vadd.f32 %v4638, %v4639
        %v4641 = vrot.slane %v4640, 1
        %v4642 = vadd.f32 %v4640, %v4641
        %v4643 = vadd.f32 %v4371, %v4379
        %v4644 = vrot.slane %v4643, 4
        %v4645 = vadd.f32 %v4643, %v4644
        %v4646 = vrot.slane %v4645, 2
        %v4647 = vadd.f32 %v4645, %v4646
        %v4648 = vrot.slane %v4647, 1
        %v4649 = vadd.f32 %v4647, %v4648
        %v4650 = vadd.f32 %v4372, %v4380
        %v4651 = vrot.slane %v4650, 4
        %v4652 = vadd.f32 %v4650, %v4651
        %v4653 = vrot.slane %v4652, 2
        %v4654 = vadd.f32 %v4652, %v4653
        %v4655 = vrot.slane %v4654, 1
        %v4656 = vadd.f32 %v4654, %v4655
        %v4657 = vadd.f32 %v4373, %v4381
        %v4658 = vrot.slane %v4657, 4
        %v4659 = vadd.f32 %v4657, %v4658
        %v4660 = vrot.slane %v4659, 2
        %v4661 = vadd.f32 %v4659, %v4660
        %v4662 = vrot.slane %v4661, 1
        %v4663 = vadd.f32 %v4661, %v4662
        %v4664 = vadd.f32 %v4374, %v4382
        %v4665 = vrot.slane %v4664, 4
        %v4666 = vadd.f32 %v4664, %v4665
        %v4667 = vrot.slane %v4666, 2
        %v4668 = vadd.f32 %v4666, %v4667
        %v4669 = vrot.slane %v4668, 1
        %v4670 = vadd.f32 %v4668, %v4669
        %v4671 = vadd.f32 %v4383, %v4391
        %v4672 = vrot.slane %v4671, 4
        %v4673 = vadd.f32 %v4671, %v4672
        %v4674 = vrot.slane %v4673, 2
        %v4675 = vadd.f32 %v4673, %v4674
        %v4676 = vrot.slane %v4675, 1
        %v4677 = vadd.f32 %v4675, %v4676
        %v4678 = vadd.f32 %v4384, %v4392
        %v4679 = vrot.slane %v4678, 4
        %v4680 = vadd.f32 %v4678, %v4679
        %v4681 = vrot.slane %v4680, 2
        %v4682 = vadd.f32 %v4680, %v4681
        %v4683 = vrot.slane %v4682, 1
        %v4684 = vadd.f32 %v4682, %v4683
        %v4685 = vadd.f32 %v4385, %v4393
        %v4686 = vrot.slane %v4685, 4
        %v4687 = vadd.f32 %v4685, %v4686
        %v4688 = vrot.slane %v4687, 2
        %v4689 = vadd.f32 %v4687, %v4688
        %v4690 = vrot.slane %v4689, 1
        %v4691 = vadd.f32 %v4689, %v4690
        %v4692 = vadd.f32 %v4386, %v4394
        %v4693 = vrot.slane %v4692, 4
        %v4694 = vadd.f32 %v4692, %v4693
        %v4695 = vrot.slane %v4694, 2
        %v4696 = vadd.f32 %v4694, %v4695
        %v4697 = vrot.slane %v4696, 1
        %v4698 = vadd.f32 %v4696, %v4697
        %v4699 = vadd.f32 %v4387, %v4395
        %v4700 = vrot.slane %v4699, 4
        %v4701 = vadd.f32 %v4699, %v4700
        %v4702 = vrot.slane %v4701, 2
        %v4703 = vadd.f32 %v4701, %v4702
        %v4704 = vrot.slane %v4703, 1
        %v4705 = vadd.f32 %v4703, %v4704
        %v4706 = vadd.f32 %v4388, %v4396
        %v4707 = vrot.slane %v4706, 4
        %v4708 = vadd.f32 %v4706, %v4707
        %v4709 = vrot.slane %v4708, 2
        %v4710 = vadd.f32 %v4708, %v4709
        %v4711 = vrot.slane %v4710, 1
        %v4712 = vadd.f32 %v4710, %v4711
        %v4713 = vadd.f32 %v4389, %v4397
        %v4714 = vrot.slane %v4713, 4
        %v4715 = vadd.f32 %v4713, %v4714
        %v4716 = vrot.slane %v4715, 2
        %v4717 = vadd.f32 %v4715, %v4716
        %v4718 = vrot.slane %v4717, 1
        %v4719 = vadd.f32 %v4717, %v4718
        %v4720 = vadd.f32 %v4390, %v4398
        %v4721 = vrot.slane %v4720, 4
        %v4722 = vadd.f32 %v4720, %v4721
        %v4723 = vrot.slane %v4722, 2
        %v4724 = vadd.f32 %v4722, %v4723
        %v4725 = vrot.slane %v4724, 1
        %v4726 = vadd.f32 %v4724, %v4725
        %v4727 = vadd.f32 %v4399, %v4407
        %v4728 = vrot.slane %v4727, 4
        %v4729 = vadd.f32 %v4727, %v4728
        %v4730 = vrot.slane %v4729, 2
        %v4731 = vadd.f32 %v4729, %v4730
        %v4732 = vrot.slane %v4731, 1
        %v4733 = vadd.f32 %v4731, %v4732
        %v4734 = vadd.f32 %v4400, %v4408
        %v4735 = vrot.slane %v4734, 4
        %v4736 = vadd.f32 %v4734, %v4735
        %v4737 = vrot.slane %v4736, 2
        %v4738 = vadd.f32 %v4736, %v4737
        %v4739 = vrot.slane %v4738, 1
        %v4740 = vadd.f32 %v4738, %v4739
        %v4741 = vadd.f32 %v4401, %v4409
        %v4742 = vrot.slane %v4741, 4
        %v4743 = vadd.f32 %v4741, %v4742
        %v4744 = vrot.slane %v4743, 2
        %v4745 = vadd.f32 %v4743, %v4744
        %v4746 = vrot.slane %v4745, 1
        %v4747 = vadd.f32 %v4745, %v4746
        %v4748 = vadd.f32 %v4402, %v4410
        %v4749 = vrot.slane %v4748, 4
        %v4750 = vadd.f32 %v4748, %v4749
        %v4751 = vrot.slane %v4750, 2
        %v4752 = vadd.f32 %v4750, %v4751
        %v4753 = vrot.slane %v4752, 1
        %v4754 = vadd.f32 %v4752, %v4753
        %v4755 = vadd.f32 %v4403, %v4411
        %v4756 = vrot.slane %v4755, 4
        %v4757 = vadd.f32 %v4755, %v4756
        %v4758 = vrot.slane %v4757, 2
        %v4759 = vadd.f32 %v4757, %v4758
        %v4760 = vrot.slane %v4759, 1
        %v4761 = vadd.f32 %v4759, %v4760
        %v4762 = vadd.f32 %v4404, %v4412
        %v4763 = vrot.slane %v4762, 4
        %v4764 = vadd.f32 %v4762, %v4763
        %v4765 = vrot.slane %v4764, 2
        %v4766 = vadd.f32 %v4764, %v4765
        %v4767 = vrot.slane %v4766, 1
        %v4768 = vadd.f32 %v4766, %v4767
        %v4769 = vadd.f32 %v4405, %v4413
        %v4770 = vrot.slane %v4769, 4
        %v4771 = vadd.f32 %v4769, %v4770
        %v4772 = vrot.slane %v4771, 2
        %v4773 = vadd.f32 %v4771, %v4772
        %v4774 = vrot.slane %v4773, 1
        %v4775 = vadd.f32 %v4773, %v4774
        %v4776 = vadd.f32 %v4406, %v4414
        %v4777 = vrot.slane %v4776, 4
        %v4778 = vadd.f32 %v4776, %v4777
        %v4779 = vrot.slane %v4778, 2
        %v4780 = vadd.f32 %v4778, %v4779
        %v4781 = vrot.slane %v4780, 1
        %v4782 = vadd.f32 %v4780, %v4781
        %v4783 = vadd.f32 %v4415, %v4423
        %v4784 = vrot.slane %v4783, 4
        %v4785 = vadd.f32 %v4783, %v4784
        %v4786 = vrot.slane %v4785, 2
        %v4787 = vadd.f32 %v4785, %v4786
        %v4788 = vrot.slane %v4787, 1
        %v4789 = vadd.f32 %v4787, %v4788
        %v4790 = vadd.f32 %v4416, %v4424
        %v4791 = vrot.slane %v4790, 4
        %v4792 = vadd.f32 %v4790, %v4791
        %v4793 = vrot.slane %v4792, 2
        %v4794 = vadd.f32 %v4792, %v4793
        %v4795 = vrot.slane %v4794, 1
        %v4796 = vadd.f32 %v4794, %v4795
        %v4797 = vadd.f32 %v4417, %v4425
        %v4798 = vrot.slane %v4797, 4
        %v4799 = vadd.f32 %v4797, %v4798
        %v4800 = vrot.slane %v4799, 2
        %v4801 = vadd.f32 %v4799, %v4800
        %v4802 = vrot.slane %v4801, 1
        %v4803 = vadd.f32 %v4801, %v4802
        %v4804 = vadd.f32 %v4418, %v4426
        %v4805 = vrot.slane %v4804, 4
        %v4806 = vadd.f32 %v4804, %v4805
        %v4807 = vrot.slane %v4806, 2
        %v4808 = vadd.f32 %v4806, %v4807
        %v4809 = vrot.slane %v4808, 1
        %v4810 = vadd.f32 %v4808, %v4809
        %v4811 = vadd.f32 %v4419, %v4427
        %v4812 = vrot.slane %v4811, 4
        %v4813 = vadd.f32 %v4811, %v4812
        %v4814 = vrot.slane %v4813, 2
        %v4815 = vadd.f32 %v4813, %v4814
        %v4816 = vrot.slane %v4815, 1
        %v4817 = vadd.f32 %v4815, %v4816
        %v4818 = vadd.f32 %v4420, %v4428
        %v4819 = vrot.slane %v4818, 4
        %v4820 = vadd.f32 %v4818, %v4819
        %v4821 = vrot.slane %v4820, 2
        %v4822 = vadd.f32 %v4820, %v4821
        %v4823 = vrot.slane %v4822, 1
        %v4824 = vadd.f32 %v4822, %v4823
        %v4825 = vadd.f32 %v4421, %v4429
        %v4826 = vrot.slane %v4825, 4
        %v4827 = vadd.f32 %v4825, %v4826
        %v4828 = vrot.slane %v4827, 2
        %v4829 = vadd.f32 %v4827, %v4828
        %v4830 = vrot.slane %v4829, 1
        %v4831 = vadd.f32 %v4829, %v4830
        %v4832 = vadd.f32 %v4422, %v4430
        %v4833 = vrot.slane %v4832, 4
        %v4834 = vadd.f32 %v4832, %v4833
        %v4835 = vrot.slane %v4834, 2
        %v4836 = vadd.f32 %v4834, %v4835
        %v4837 = vrot.slane %v4836, 1
        %v4838 = vadd.f32 %v4836, %v4837
        %v4839 = vadd.f32 %v4431, %v4439
        %v4840 = vrot.slane %v4839, 4
        %v4841 = vadd.f32 %v4839, %v4840
        %v4842 = vrot.slane %v4841, 2
        %v4843 = vadd.f32 %v4841, %v4842
        %v4844 = vrot.slane %v4843, 1
        %v4845 = vadd.f32 %v4843, %v4844
        %v4846 = vadd.f32 %v4432, %v4440
        %v4847 = vrot.slane %v4846, 4
        %v4848 = vadd.f32 %v4846, %v4847
        %v4849 = vrot.slane %v4848, 2
        %v4850 = vadd.f32 %v4848, %v4849
        %v4851 = vrot.slane %v4850, 1
        %v4852 = vadd.f32 %v4850, %v4851
        %v4853 = vadd.f32 %v4433, %v4441
        %v4854 = vrot.slane %v4853, 4
        %v4855 = vadd.f32 %v4853, %v4854
        %v4856 = vrot.slane %v4855, 2
        %v4857 = vadd.f32 %v4855, %v4856
        %v4858 = vrot.slane %v4857, 1
        %v4859 = vadd.f32 %v4857, %v4858
        %v4860 = vadd.f32 %v4434, %v4442
        %v4861 = vrot.slane %v4860, 4
        %v4862 = vadd.f32 %v4860, %v4861
        %v4863 = vrot.slane %v4862, 2
        %v4864 = vadd.f32 %v4862, %v4863
        %v4865 = vrot.slane %v4864, 1
        %v4866 = vadd.f32 %v4864, %v4865
        %v4867 = vadd.f32 %v4435, %v4443
        %v4868 = vrot.slane %v4867, 4
        %v4869 = vadd.f32 %v4867, %v4868
        %v4870 = vrot.slane %v4869, 2
        %v4871 = vadd.f32 %v4869, %v4870
        %v4872 = vrot.slane %v4871, 1
        %v4873 = vadd.f32 %v4871, %v4872
        %v4874 = vadd.f32 %v4436, %v4444
        %v4875 = vrot.slane %v4874, 4
        %v4876 = vadd.f32 %v4874, %v4875
        %v4877 = vrot.slane %v4876, 2
        %v4878 = vadd.f32 %v4876, %v4877
        %v4879 = vrot.slane %v4878, 1
        %v4880 = vadd.f32 %v4878, %v4879
        %v4881 = vadd.f32 %v4437, %v4445
        %v4882 = vrot.slane %v4881, 4
        %v4883 = vadd.f32 %v4881, %v4882
        %v4884 = vrot.slane %v4883, 2
        %v4885 = vadd.f32 %v4883, %v4884
        %v4886 = vrot.slane %v4885, 1
        %v4887 = vadd.f32 %v4885, %v4886
        %v4888 = vadd.f32 %v4438, %v4446
        %v4889 = vrot.slane %v4888, 4
        %v4890 = vadd.f32 %v4888, %v4889
        %v4891 = vrot.slane %v4890, 2
        %v4892 = vadd.f32 %v4890, %v4891
        %v4893 = vrot.slane %v4892, 1
        %v4894 = vadd.f32 %v4892, %v4893
        %v4959 = vsel %vm2462, %v4509, %v4453
        %v4960 = vsel %vm2464, %v4565, %v4959
        %v4961 = vsel %vm2466, %v4621, %v4960
        %v4962 = vsel %vm2468, %v4677, %v4961
        %v4963 = vsel %vm2470, %v4733, %v4962
        %v4964 = vsel %vm2472, %v4789, %v4963
        %v4965 = vsel %vm2474, %v4845, %v4964
        %v4966 = vsel %vm2462, %v4516, %v4460
        %v4967 = vsel %vm2464, %v4572, %v4966
        %v4968 = vsel %vm2466, %v4628, %v4967
        %v4969 = vsel %vm2468, %v4684, %v4968
        %v4970 = vsel %vm2470, %v4740, %v4969
        %v4971 = vsel %vm2472, %v4796, %v4970
        %v4972 = vsel %vm2474, %v4852, %v4971
        %v4973 = vsel %vm2462, %v4523, %v4467
        %v4974 = vsel %vm2464, %v4579, %v4973
        %v4975 = vsel %vm2466, %v4635, %v4974
        %v4976 = vsel %vm2468, %v4691, %v4975
        %v4977 = vsel %vm2470, %v4747, %v4976
        %v4978 = vsel %vm2472, %v4803, %v4977
        %v4979 = vsel %vm2474, %v4859, %v4978
        %v4980 = vsel %vm2462, %v4530, %v4474
        %v4981 = vsel %vm2464, %v4586, %v4980
        %v4982 = vsel %vm2466, %v4642, %v4981
        %v4983 = vsel %vm2468, %v4698, %v4982
        %v4984 = vsel %vm2470, %v4754, %v4983
        %v4985 = vsel %vm2472, %v4810, %v4984
        %v4986 = vsel %vm2474, %v4866, %v4985
        %v4987 = vsel %vm2462, %v4537, %v4481
        %v4988 = vsel %vm2464, %v4593, %v4987
        %v4989 = vsel %vm2466, %v4649, %v4988
        %v4990 = vsel %vm2468, %v4705, %v4989
        %v4991 = vsel %vm2470, %v4761, %v4990
        %v4992 = vsel %vm2472, %v4817, %v4991
        %v4993 = vsel %vm2474, %v4873, %v4992
        %v4994 = vsel %vm2462, %v4544, %v4488
        %v4995 = vsel %vm2464, %v4600, %v4994
        %v4996 = vsel %vm2466, %v4656, %v4995
        %v4997 = vsel %vm2468, %v4712, %v4996
        %v4998 = vsel %vm2470, %v4768, %v4997
        %v4999 = vsel %vm2472, %v4824, %v4998
        %v5000 = vsel %vm2474, %v4880, %v4999
        %v5001 = vsel %vm2462, %v4551, %v4495
        %v5002 = vsel %vm2464, %v4607, %v5001
        %v5003 = vsel %vm2466, %v4663, %v5002
        %v5004 = vsel %vm2468, %v4719, %v5003
        %v5005 = vsel %vm2470, %v4775, %v5004
        %v5006 = vsel %vm2472, %v4831, %v5005
        %v5007 = vsel %vm2474, %v4887, %v5006
        %v5008 = vsel %vm2462, %v4558, %v4502
        %v5009 = vsel %vm2464, %v4614, %v5008
        %v5010 = vsel %vm2466, %v4670, %v5009
        %v5011 = vsel %vm2468, %v4726, %v5010
        %v5012 = vsel %vm2470, %v4782, %v5011
        %v5013 = vsel %vm2472, %v4838, %v5012
        %v5014 = vsel %vm2474, %v4894, %v5013
        %5023 = vst [vmem:[%s137 + $0x80] sm:$0xff] %v4965
        %5024 = vst [vmem:[%s137 + $0x88] sm:$0xff] %v4972
        %5025 = vst [vmem:[%s137 + $0x90] sm:$0xff] %v4979
        %5026 = vst [vmem:[%s137 + $0x98] sm:$0xff] %v4986
        %5027 = vst [vmem:[%s137 + $0xa0] sm:$0xff] %v4993
        %5028 = vst [vmem:[%s137 + $0xa8] sm:$0xff] %v5000
        %5029 = vst [vmem:[%s137 + $0xb0] sm:$0xff] %v5007
        %5030 = vst [vmem:[%s137 + $0xb8] sm:$0xff] %v5014
        %s5031 = sand.u32 %s71, 1
        %s5032 = scalar_lea.sflag [#allocation3], %s5031
        %s5033 = sand.u32 %s71, 1
        %s5034 = smul.addr %s5033, 192
        %s5035 = scalar_lea.vmem [#allocation2], %s5034
        // Predicated region
        $region29: #{tpu_custom_call.1} parent=27 // pred_check
          %p5036 = pneg %p81
        $region30: #{tpu_custom_call.1} parent=27 // pred_check_branch
          %5038 = sbr.rel (%p5036) target = $region32
        $region31: #{tpu_custom_call.1} parent=27 // pred_region
          %s5039 = smul.u32 8, %s16
          %s5041 = ssub.s32 3072, 3072
          %5042 = vsyncadd %s5032, %s5041
          %s5043 = smul.addr %s5039, 128
          %s5044 = scalar_lea.hbm %s2, %s5043
          %s5045 = sshll.u32 %s5035, 4
          %s5046 = int_to_ptr.vmem [resolvable:$true] %s5045
          %5051 = dma.vmem_to_hbm [thread:$0]  %s5046, 3072, %s5044, %s5032, 1024, 4096, 64
        $region32: #{tpu_custom_call.1} parent=27 // pred_fallthru
          _
      $region28: #{tpu_custom_call.1} parent=5 // pred_fallthru
        _
      %p5052 = scmp.le.s32.totalorder 2, %s11
      // Predicated region
      $region33: #{tpu_custom_call.1} parent=5 // pred_check
        %p5053 = pneg %p5052
      $region34: #{tpu_custom_call.1} parent=5 // pred_check_branch
        %5055 = sbr.rel (%p5053) target = $region36
      $region35: #{tpu_custom_call.1} parent=5 // pred_region
        %s5056 = ssub.s32 %s11, 2
        // Predicated region
        $region37: #{tpu_custom_call.1} parent=35 // pred_check
          %p5057 = pneg %p87
        $region38: #{tpu_custom_call.1} parent=35 // pred_check_branch
          %5059 = sbr.rel (%p5057) target = $region40
        $region39: #{tpu_custom_call.1} parent=35 // pred_region
          %s5060 = sand.u32 %s72, 1
          %s5061 = scalar_lea.sflag [#allocation3], %s5060
          %s5062 = sand.u32 %s72, 1
          %s5063 = smul.addr %s5062, 192
          %s5064 = scalar_lea.vmem [#allocation2], %s5063
          %5065 = dma.done %s5061, 3072
        $region40: #{tpu_custom_call.1} parent=35 // pred_fallthru
          _
      $region36: #{tpu_custom_call.1} parent=5 // pred_fallthru
        _
    $region6: #{tpu_custom_call.1} parent=1 // loop_footer
      %s15 = sadd.s32 1, %s11
    $region7: #{tpu_custom_call.1} parent=1 // loop_footer_branch
      %10 = sbr.rel target = $region3
    $region8: #{tpu_custom_call.1} parent=1 // loop_exit
      _
    %5066 = vsyncpa [#allocation3], 1
    %s5067 = scalar_lea.sflag [#allocation3], 1
    %5068 = vsyncpa %s5067, 1

</llo_original>
